<compile_context>
chip_gen: v7x
topology: tpu7x:2x2x1
jax: 0.10.0
libtpu: 0.0.40
codegen_flags: <defaults>
</compile_context>

<pallas_src>
import jax
import jax.numpy as jnp
from jax.experimental import pallas as pl
from jax.experimental.pallas import tpu as pltpu


def _round_up(v, m):
    return (v + m - 1) // m * m


def _network_kernel(x_ref,
                    w11, b11, w12, b12,
                    w21, b21, w22, b22, w23, b23,
                    w31a, w31b, b31, w32, b32, w33, b33, w34, b34,
                    wp, bp,
                    out_ref):
    f32 = jnp.float32
    bf16 = jnp.bfloat16

    def lin(h_bf16, w_ref, b_ref):
        # bf16 x bf16 matmul on the MXU, f32 accumulation, f32 bias add.
        return jnp.dot(h_bf16, w_ref[...], preferred_element_type=f32) + b_ref[...]

    def act(y_f32):
        # tanh in f32 (portable across v5e/v6e/v7x), feed next MXU dot in bf16.
        return jnp.tanh(y_f32).astype(bf16)

    x = x_ref[...]                                   # (TILE_N, 3) f32

    # fc1_1 + bn1_1: K=3 -> VPU broadcast FMAs (MXU pass would be mostly padding).
    w11f = w11[...]                                  # (3, 64) f32
    h = (x[:, 0:1] * w11f[0:1, :]
         + x[:, 1:2] * w11f[1:2, :]
         + x[:, 2:3] * w11f[2:3, :]
         + b11[...])
    h = act(h)                                       # (TILE_N, 64) bf16

    seg = act(lin(h, w12, b12))                      # fc1_2 + bn1_2 + tanh   (N, 64)
    g = act(lin(seg, w21, b21))                      # fc2_1 + bn2_1 + tanh   (N, 64)
    g = act(lin(g, w22, b22))                        # fc2_2 + bn2_2 + tanh   (N, 128)
    g = act(lin(g, w23, b23))                        # fc2_3 + bn2_3 + tanh   (N, 1024)

    # torch.max over L==1 is an identity squeeze -> g IS the global feature.
    # cat([seg, global], channel) @ W3_1 == seg @ W3_1[:64] + global @ W3_1[64:]
    c = act(jnp.dot(seg, w31a[...], preferred_element_type=f32)
            + jnp.dot(g, w31b[...], preferred_element_type=f32)
            + b31[...])                              # fc3_1 + bn3_1 + tanh   (N, 512)
    c = act(lin(c, w32, b32))                        # fc3_2 + bn3_2 + tanh   (N, 256)
    c = act(lin(c, w33, b33))                        # fc3_3 + bn3_3 + tanh   (N, 128)
    c = act(lin(c, w34, b34))                        # fc3_4 + bn3_4 + tanh   (N, 128)

    out_ref[...] = lin(c, wp, bp)                    # prediction (no BN, no tanh), f32


def _make_params(key, Ns=1.0, category=4):
    """Deterministic synthetic parameters with folded inference-mode BatchNorm.

    Conv weights ~ N(0, 0.01), biases 0 (cf. _init_weights); BN running stats
    are synthetic. Weights stored transposed as (Cin, Cout); everything except
    fc1_1 weight is cast to bf16 (biases stay f32, added post-accumulation).
    """
    C64, C128, C256, C512, C1024 = (int(64 * Ns), int(128 * Ns), int(256 * Ns),
                                    int(512 * Ns), int(1024 * Ns))
    eps = 1e-5
    dims = [
        ("fc1_1", 3,            C64,   True),
        ("fc1_2", C64,          C64,   True),
        ("fc2_1", C64,          C64,   True),
        ("fc2_2", C64,          C128,  True),
        ("fc2_3", C128,         C1024, True),
        ("fc3_1", C64 + C1024,  C512,  True),
        ("fc3_2", C512,         C256,  True),
        ("fc3_3", C256,         C128,  True),
        ("fc3_4", C128,         C128,  True),
        ("pred",  C128,         category, False),
    ]
    params = {}
    for name, cin, cout, has_bn in dims:
        key, kw, kg, kb, km, kv = jax.random.split(key, 6)
        w_t = 0.01 * jax.random.normal(kw, (cin, cout), jnp.float32)   # (Cin, Cout)
        b = jnp.zeros((cout,), jnp.float32)
        if has_bn:
            gamma = jax.random.uniform(kg, (cout,), jnp.float32, 0.5, 1.5)
            beta = 0.1 * jax.random.normal(kb, (cout,), jnp.float32)
            mean = 0.1 * jax.random.normal(km, (cout,), jnp.float32)
            var = jax.random.uniform(kv, (cout,), jnp.float32, 0.5, 1.5)
            scale = gamma * jax.lax.rsqrt(var + eps)
            w_t = w_t * scale[None, :]
            b = (b - mean) * scale + beta
        w_store = w_t if name == "fc1_1" else w_t.astype(jnp.bfloat16)
        params[name] = (w_store, b.reshape(1, cout))
    return params, C64


def network_forward(x, params, seg_channels):
    """x: (N, 3) float32 -> (N, category) float32."""
    w11, b11 = params["fc1_1"]
    w12, b12 = params["fc1_2"]
    w21, b21 = params["fc2_1"]
    w22, b22 = params["fc2_2"]
    w23, b23 = params["fc2_3"]
    w31, b31 = params["fc3_1"]
    w31a, w31b = w31[:seg_channels, :], w31[seg_channels:, :]   # split concat matmul
    w32, b32 = params["fc3_2"]
    w33, b33 = params["fc3_3"]
    w34, b34 = params["fc3_4"]
    wp, bp = params["pred"]

    n = x.shape[0]
    category = wp.shape[1]

    # Batch tile: multiple of 128, up to 512; pad N up to a multiple of it.
    tile_n = min(512, _round_up(max(n, 1), 128))
    n_pad = _round_up(n, tile_n)
    if n_pad != n:
        x = jnp.pad(x, ((0, n_pad - n), (0, 0)))
    grid = (n_pad // tile_n,)

    weights = (w11, b11, w12, b12,
               w21, b21, w22, b22, w23, b23,
               w31a, w31b, b31, w32, b32, w33, b33, w34, b34,
               wp, bp)

    # Weights/biases: full-array blocks with a constant index_map -> resident
    # in VMEM across grid steps (DMA'd once per call). x/out: batch-tiled.
    x_spec = pl.BlockSpec((tile_n, 3), lambda i: (i, 0))
    const_specs = [pl.BlockSpec(w.shape, lambda i: (0, 0)) for w in weights]
    out_spec = pl.BlockSpec((tile_n, category), lambda i: (i, 0))

    out = pl.pallas_call(
        _network_kernel,
        out_shape=jax.ShapeDtypeStruct((n_pad, category), jnp.float32),
        grid=grid,
        in_specs=[x_spec] + const_specs,
        out_specs=out_spec,
        compiler_params=pltpu.CompilerParams(
            dimension_semantics=("parallel",),
            vmem_limit_bytes=32 << 20,
        ),
    )(x, *weights)
    return out[:n]


def _reference_forward(x, params, seg_channels):
    """Pure-JAX f32 reference (same folded-BN math) for a tolerance check."""
    def lin(h, name):
        w, b = params[name]
        return jnp.dot(h, w.astype(jnp.float32),
                       precision=jax.lax.Precision.HIGHEST) + b

    h = jnp.tanh(lin(x, "fc1_1"))
    seg = jnp.tanh(lin(h, "fc1_2"))
    g = jnp.tanh(lin(seg, "fc2_1"))
    g = jnp.tanh(lin(g, "fc2_2"))
    g = jnp.tanh(lin(g, "fc2_3"))
    c = jnp.concatenate([seg, g], axis=1)
    c = jnp.tanh(lin(c, "fc3_1"))
    c = jnp.tanh(lin(c, "fc3_2"))
    c = jnp.tanh(lin(c, "fc3_3"))
    c = jnp.tanh(lin(c, "fc3_4"))
    return lin(c, "pred")


if __name__ == "__main__":
    key = jax.random.PRNGKey(0)
    kparam, kx = jax.random.split(key)

    params, seg_channels = _make_params(kparam, Ns=1.0, category=4)

    batch = 8
    x = jax.random.normal(kx, (batch, 3), jnp.float32)   # point-cloud point: (N, 3)

    out = network_forward(x, params, seg_channels)
    out = jax.block_until_ready(out)
    assert out.shape == (batch, 4), out.shape
    assert bool(jnp.all(jnp.isfinite(out)))

    ref = _reference_forward(x, params, seg_channels)
    max_err = float(jnp.max(jnp.abs(out - ref)))
    assert max_err < 5e-2, f"max abs error {max_err}"   # bf16 matmuls, f32 accumulation

    print("KERNEL_OK")
</pallas_src>

<mosaic_0001>
module attributes {stable_mosaic.version = 11 : i64} {
  func.func @_network_kernel(%arg0: i32, %arg1: memref<128x3xf32, #tpu.memory_space<vmem>>, %arg2: memref<3x64xf32, #tpu.memory_space<vmem>>, %arg3: memref<1x64xf32, #tpu.memory_space<vmem>>, %arg4: memref<64x64xbf16, #tpu.memory_space<vmem>>, %arg5: memref<1x64xf32, #tpu.memory_space<vmem>>, %arg6: memref<64x64xbf16, #tpu.memory_space<vmem>>, %arg7: memref<1x64xf32, #tpu.memory_space<vmem>>, %arg8: memref<64x128xbf16, #tpu.memory_space<vmem>>, %arg9: memref<1x128xf32, #tpu.memory_space<vmem>>, %arg10: memref<128x1024xbf16, #tpu.memory_space<vmem>>, %arg11: memref<1x1024xf32, #tpu.memory_space<vmem>>, %arg12: memref<64x512xbf16, #tpu.memory_space<vmem>>, %arg13: memref<1024x512xbf16, #tpu.memory_space<vmem>>, %arg14: memref<1x512xf32, #tpu.memory_space<vmem>>, %arg15: memref<512x256xbf16, #tpu.memory_space<vmem>>, %arg16: memref<1x256xf32, #tpu.memory_space<vmem>>, %arg17: memref<256x128xbf16, #tpu.memory_space<vmem>>, %arg18: memref<1x128xf32, #tpu.memory_space<vmem>>, %arg19: memref<128x128xbf16, #tpu.memory_space<vmem>>, %arg20: memref<1x128xf32, #tpu.memory_space<vmem>>, %arg21: memref<128x4xbf16, #tpu.memory_space<vmem>>, %arg22: memref<1x4xf32, #tpu.memory_space<vmem>>, %arg23: memref<128x4xf32, #tpu.memory_space<vmem>>) attributes {dimension_semantics = [#tpu.dimension_semantics<parallel>], iteration_bounds = array<i64: 1>, scalar_prefetch = 0 : i64, scratch_operands = 0 : i64, tpu.core_type = #tpu.core_type<tc>, window_params = [{transform_indices = @transform_0, window_bounds = array<i64: 128, 3>}, {pipeline_mode = #tpu.pipeline_mode<synchronous>, transform_indices = @transform_1, window_bounds = array<i64: 3, 64>}, {pipeline_mode = #tpu.pipeline_mode<synchronous>, transform_indices = @transform_2, window_bounds = array<i64: 1, 64>}, {pipeline_mode = #tpu.pipeline_mode<synchronous>, transform_indices = @transform_3, window_bounds = array<i64: 64, 64>}, {pipeline_mode = #tpu.pipeline_mode<synchronous>, transform_indices = @transform_4, window_bounds = array<i64: 1, 64>}, {pipeline_mode = #tpu.pipeline_mode<synchronous>, transform_indices = @transform_5, window_bounds = array<i64: 64, 64>}, {pipeline_mode = #tpu.pipeline_mode<synchronous>, transform_indices = @transform_6, window_bounds = array<i64: 1, 64>}, {pipeline_mode = #tpu.pipeline_mode<synchronous>, transform_indices = @transform_7, window_bounds = array<i64: 64, 128>}, {pipeline_mode = #tpu.pipeline_mode<synchronous>, transform_indices = @transform_8, window_bounds = array<i64: 1, 128>}, {pipeline_mode = #tpu.pipeline_mode<synchronous>, transform_indices = @transform_9, window_bounds = array<i64: 128, 1024>}, {pipeline_mode = #tpu.pipeline_mode<synchronous>, transform_indices = @transform_10, window_bounds = array<i64: 1, 1024>}, {pipeline_mode = #tpu.pipeline_mode<synchronous>, transform_indices = @transform_11, window_bounds = array<i64: 64, 512>}, {pipeline_mode = #tpu.pipeline_mode<synchronous>, transform_indices = @transform_12, window_bounds = array<i64: 1024, 512>}, {pipeline_mode = #tpu.pipeline_mode<synchronous>, transform_indices = @transform_13, window_bounds = array<i64: 1, 512>}, {pipeline_mode = #tpu.pipeline_mode<synchronous>, transform_indices = @transform_14, window_bounds = array<i64: 512, 256>}, {pipeline_mode = #tpu.pipeline_mode<synchronous>, transform_indices = @transform_15, window_bounds = array<i64: 1, 256>}, {pipeline_mode = #tpu.pipeline_mode<synchronous>, transform_indices = @transform_16, window_bounds = array<i64: 256, 128>}, {pipeline_mode = #tpu.pipeline_mode<synchronous>, transform_indices = @transform_17, window_bounds = array<i64: 1, 128>}, {pipeline_mode = #tpu.pipeline_mode<synchronous>, transform_indices = @transform_18, window_bounds = array<i64: 128, 128>}, {pipeline_mode = #tpu.pipeline_mode<synchronous>, transform_indices = @transform_19, window_bounds = array<i64: 1, 128>}, {pipeline_mode = #tpu.pipeline_mode<synchronous>, transform_indices = @transform_20, window_bounds = array<i64: 128, 4>}, {pipeline_mode = #tpu.pipeline_mode<synchronous>, transform_indices = @transform_21, window_bounds = array<i64: 1, 4>}, {transform_indices = @transform_22, window_bounds = array<i64: 128, 4>}]} {
    %c0 = arith.constant 0 : index
    %c0_0 = arith.constant 0 : index
    %0 = vector.load %arg1[%c0, %c0_0] : memref<128x3xf32, #tpu.memory_space<vmem>>, vector<128x3xf32>
    %c0_1 = arith.constant 0 : index
    %c0_2 = arith.constant 0 : index
    %1 = vector.load %arg2[%c0_1, %c0_2] : memref<3x64xf32, #tpu.memory_space<vmem>>, vector<3x64xf32>
    %2 = vector.extract_strided_slice %0 {offsets = [0, 0], sizes = [128, 1], strides = [1, 1]} : vector<128x3xf32> to vector<128x1xf32>
    %3 = vector.extract_strided_slice %1 {offsets = [0, 0], sizes = [1, 64], strides = [1, 1]} : vector<3x64xf32> to vector<1x64xf32>
    %4 = vector.broadcast %2 : vector<128x1xf32> to vector<128x64xf32>
    %5 = vector.broadcast %3 : vector<1x64xf32> to vector<128x64xf32>
    %6 = arith.mulf %4, %5 : vector<128x64xf32>
    %7 = vector.extract_strided_slice %0 {offsets = [0, 1], sizes = [128, 1], strides = [1, 1]} : vector<128x3xf32> to vector<128x1xf32>
    %8 = vector.extract_strided_slice %1 {offsets = [1, 0], sizes = [1, 64], strides = [1, 1]} : vector<3x64xf32> to vector<1x64xf32>
    %9 = vector.broadcast %7 : vector<128x1xf32> to vector<128x64xf32>
    %10 = vector.broadcast %8 : vector<1x64xf32> to vector<128x64xf32>
    %11 = arith.mulf %9, %10 : vector<128x64xf32>
    %12 = arith.addf %6, %11 : vector<128x64xf32>
    %13 = vector.extract_strided_slice %0 {offsets = [0, 2], sizes = [128, 1], strides = [1, 1]} : vector<128x3xf32> to vector<128x1xf32>
    %14 = vector.extract_strided_slice %1 {offsets = [2, 0], sizes = [1, 64], strides = [1, 1]} : vector<3x64xf32> to vector<1x64xf32>
    %15 = vector.broadcast %13 : vector<128x1xf32> to vector<128x64xf32>
    %16 = vector.broadcast %14 : vector<1x64xf32> to vector<128x64xf32>
    %17 = arith.mulf %15, %16 : vector<128x64xf32>
    %18 = arith.addf %12, %17 : vector<128x64xf32>
    %c0_3 = arith.constant 0 : index
    %c0_4 = arith.constant 0 : index
    %19 = vector.load %arg3[%c0_3, %c0_4] : memref<1x64xf32, #tpu.memory_space<vmem>>, vector<1x64xf32>
    %20 = vector.broadcast %19 : vector<1x64xf32> to vector<128x64xf32>
    %21 = arith.addf %18, %20 : vector<128x64xf32>
    %22 = math.tanh %21 : vector<128x64xf32>
    %23 = arith.truncf %22 : vector<128x64xf32> to vector<128x64xbf16>
    %c0_5 = arith.constant 0 : index
    %c0_6 = arith.constant 0 : index
    %24 = vector.load %arg4[%c0_5, %c0_6] : memref<64x64xbf16, #tpu.memory_space<vmem>>, vector<64x64xbf16>
    %cst = arith.constant dense<0.000000e+00> : vector<128x64xf32>
    %25 = tpu.matmul %23, %24, %cst {dimension_numbers = #tpu.dot_dimension_numbers<[1], [0], [0], [1], [0, 0, 1, 1], [], []>} : vector<128x64xbf16>, vector<64x64xbf16>, vector<128x64xf32> -> vector<128x64xf32>
    %c0_7 = arith.constant 0 : index
    %c0_8 = arith.constant 0 : index
    %26 = vector.load %arg5[%c0_7, %c0_8] : memref<1x64xf32, #tpu.memory_space<vmem>>, vector<1x64xf32>
    %27 = vector.broadcast %26 : vector<1x64xf32> to vector<128x64xf32>
    %28 = arith.addf %25, %27 : vector<128x64xf32>
    %29 = math.tanh %28 : vector<128x64xf32>
    %30 = arith.truncf %29 : vector<128x64xf32> to vector<128x64xbf16>
    %c0_9 = arith.constant 0 : index
    %c0_10 = arith.constant 0 : index
    %31 = vector.load %arg6[%c0_9, %c0_10] : memref<64x64xbf16, #tpu.memory_space<vmem>>, vector<64x64xbf16>
    %cst_11 = arith.constant dense<0.000000e+00> : vector<128x64xf32>
    %32 = tpu.matmul %30, %31, %cst_11 {dimension_numbers = #tpu.dot_dimension_numbers<[1], [0], [0], [1], [0, 0, 1, 1], [], []>} : vector<128x64xbf16>, vector<64x64xbf16>, vector<128x64xf32> -> vector<128x64xf32>
    %c0_12 = arith.constant 0 : index
    %c0_13 = arith.constant 0 : index
    %33 = vector.load %arg7[%c0_12, %c0_13] : memref<1x64xf32, #tpu.memory_space<vmem>>, vector<1x64xf32>
    %34 = vector.broadcast %33 : vector<1x64xf32> to vector<128x64xf32>
    %35 = arith.addf %32, %34 : vector<128x64xf32>
    %36 = math.tanh %35 : vector<128x64xf32>
    %37 = arith.truncf %36 : vector<128x64xf32> to vector<128x64xbf16>
    %c0_14 = arith.constant 0 : index
    %c0_15 = arith.constant 0 : index
    %38 = vector.load %arg8[%c0_14, %c0_15] : memref<64x128xbf16, #tpu.memory_space<vmem>>, vector<64x128xbf16>
    %cst_16 = arith.constant dense<0.000000e+00> : vector<128x128xf32>
    %39 = tpu.matmul %37, %38, %cst_16 {dimension_numbers = #tpu.dot_dimension_numbers<[1], [0], [0], [1], [0, 0, 1, 1], [], []>} : vector<128x64xbf16>, vector<64x128xbf16>, vector<128x128xf32> -> vector<128x128xf32>
    %c0_17 = arith.constant 0 : index
    %c0_18 = arith.constant 0 : index
    %40 = vector.load %arg9[%c0_17, %c0_18] : memref<1x128xf32, #tpu.memory_space<vmem>>, vector<1x128xf32>
    %41 = vector.broadcast %40 : vector<1x128xf32> to vector<128x128xf32>
    %42 = arith.addf %39, %41 : vector<128x128xf32>
    %43 = math.tanh %42 : vector<128x128xf32>
    %44 = arith.truncf %43 : vector<128x128xf32> to vector<128x128xbf16>
    %c0_19 = arith.constant 0 : index
    %c0_20 = arith.constant 0 : index
    %45 = vector.load %arg10[%c0_19, %c0_20] : memref<128x1024xbf16, #tpu.memory_space<vmem>>, vector<128x1024xbf16>
    %cst_21 = arith.constant dense<0.000000e+00> : vector<128x1024xf32>
    %46 = tpu.matmul %44, %45, %cst_21 {dimension_numbers = #tpu.dot_dimension_numbers<[1], [0], [0], [1], [0, 0, 1, 1], [], []>} : vector<128x128xbf16>, vector<128x1024xbf16>, vector<128x1024xf32> -> vector<128x1024xf32>
    %c0_22 = arith.constant 0 : index
    %c0_23 = arith.constant 0 : index
    %47 = vector.load %arg11[%c0_22, %c0_23] : memref<1x1024xf32, #tpu.memory_space<vmem>>, vector<1x1024xf32>
    %48 = vector.broadcast %47 : vector<1x1024xf32> to vector<128x1024xf32>
    %49 = arith.addf %46, %48 : vector<128x1024xf32>
    %50 = math.tanh %49 : vector<128x1024xf32>
    %51 = arith.truncf %50 : vector<128x1024xf32> to vector<128x1024xbf16>
    %c0_24 = arith.constant 0 : index
    %c0_25 = arith.constant 0 : index
    %52 = vector.load %arg12[%c0_24, %c0_25] : memref<64x512xbf16, #tpu.memory_space<vmem>>, vector<64x512xbf16>
    %cst_26 = arith.constant dense<0.000000e+00> : vector<128x512xf32>
    %53 = tpu.matmul %30, %52, %cst_26 {dimension_numbers = #tpu.dot_dimension_numbers<[1], [0], [0], [1], [0, 0, 1, 1], [], []>} : vector<128x64xbf16>, vector<64x512xbf16>, vector<128x512xf32> -> vector<128x512xf32>
    %c0_27 = arith.constant 0 : index
    %c0_28 = arith.constant 0 : index
    %54 = vector.load %arg13[%c0_27, %c0_28] : memref<1024x512xbf16, #tpu.memory_space<vmem>>, vector<1024x512xbf16>
    %cst_29 = arith.constant dense<0.000000e+00> : vector<128x512xf32>
    %55 = tpu.matmul %51, %54, %cst_29 {dimension_numbers = #tpu.dot_dimension_numbers<[1], [0], [0], [1], [0, 0, 1, 1], [], []>} : vector<128x1024xbf16>, vector<1024x512xbf16>, vector<128x512xf32> -> vector<128x512xf32>
    %56 = arith.addf %53, %55 : vector<128x512xf32>
    %c0_30 = arith.constant 0 : index
    %c0_31 = arith.constant 0 : index
    %57 = vector.load %arg14[%c0_30, %c0_31] : memref<1x512xf32, #tpu.memory_space<vmem>>, vector<1x512xf32>
    %58 = vector.broadcast %57 : vector<1x512xf32> to vector<128x512xf32>
    %59 = arith.addf %56, %58 : vector<128x512xf32>
    %60 = math.tanh %59 : vector<128x512xf32>
    %61 = arith.truncf %60 : vector<128x512xf32> to vector<128x512xbf16>
    %c0_32 = arith.constant 0 : index
    %c0_33 = arith.constant 0 : index
    %62 = vector.load %arg15[%c0_32, %c0_33] : memref<512x256xbf16, #tpu.memory_space<vmem>>, vector<512x256xbf16>
    %cst_34 = arith.constant dense<0.000000e+00> : vector<128x256xf32>
    %63 = tpu.matmul %61, %62, %cst_34 {dimension_numbers = #tpu.dot_dimension_numbers<[1], [0], [0], [1], [0, 0, 1, 1], [], []>} : vector<128x512xbf16>, vector<512x256xbf16>, vector<128x256xf32> -> vector<128x256xf32>
    %c0_35 = arith.constant 0 : index
    %c0_36 = arith.constant 0 : index
    %64 = vector.load %arg16[%c0_35, %c0_36] : memref<1x256xf32, #tpu.memory_space<vmem>>, vector<1x256xf32>
    %65 = vector.broadcast %64 : vector<1x256xf32> to vector<128x256xf32>
    %66 = arith.addf %63, %65 : vector<128x256xf32>
    %67 = math.tanh %66 : vector<128x256xf32>
    %68 = arith.truncf %67 : vector<128x256xf32> to vector<128x256xbf16>
    %c0_37 = arith.constant 0 : index
    %c0_38 = arith.constant 0 : index
    %69 = vector.load %arg17[%c0_37, %c0_38] : memref<256x128xbf16, #tpu.memory_space<vmem>>, vector<256x128xbf16>
    %cst_39 = arith.constant dense<0.000000e+00> : vector<128x128xf32>
    %70 = tpu.matmul %68, %69, %cst_39 {dimension_numbers = #tpu.dot_dimension_numbers<[1], [0], [0], [1], [0, 0, 1, 1], [], []>} : vector<128x256xbf16>, vector<256x128xbf16>, vector<128x128xf32> -> vector<128x128xf32>
    %c0_40 = arith.constant 0 : index
    %c0_41 = arith.constant 0 : index
    %71 = vector.load %arg18[%c0_40, %c0_41] : memref<1x128xf32, #tpu.memory_space<vmem>>, vector<1x128xf32>
    %72 = vector.broadcast %71 : vector<1x128xf32> to vector<128x128xf32>
    %73 = arith.addf %70, %72 : vector<128x128xf32>
    %74 = math.tanh %73 : vector<128x128xf32>
    %75 = arith.truncf %74 : vector<128x128xf32> to vector<128x128xbf16>
    %c0_42 = arith.constant 0 : index
    %c0_43 = arith.constant 0 : index
    %76 = vector.load %arg19[%c0_42, %c0_43] : memref<128x128xbf16, #tpu.memory_space<vmem>>, vector<128x128xbf16>
    %cst_44 = arith.constant dense<0.000000e+00> : vector<128x128xf32>
    %77 = tpu.matmul %75, %76, %cst_44 {dimension_numbers = #tpu.dot_dimension_numbers<[1], [0], [0], [1], [0, 0, 1, 1], [], []>} : vector<128x128xbf16>, vector<128x128xbf16>, vector<128x128xf32> -> vector<128x128xf32>
    %c0_45 = arith.constant 0 : index
    %c0_46 = arith.constant 0 : index
    %78 = vector.load %arg20[%c0_45, %c0_46] : memref<1x128xf32, #tpu.memory_space<vmem>>, vector<1x128xf32>
    %79 = vector.broadcast %78 : vector<1x128xf32> to vector<128x128xf32>
    %80 = arith.addf %77, %79 : vector<128x128xf32>
    %81 = math.tanh %80 : vector<128x128xf32>
    %82 = arith.truncf %81 : vector<128x128xf32> to vector<128x128xbf16>
    %c0_47 = arith.constant 0 : index
    %c0_48 = arith.constant 0 : index
    %83 = vector.load %arg21[%c0_47, %c0_48] : memref<128x4xbf16, #tpu.memory_space<vmem>>, vector<128x4xbf16>
    %cst_49 = arith.constant dense<0.000000e+00> : vector<128x4xf32>
    %84 = tpu.matmul %82, %83, %cst_49 {dimension_numbers = #tpu.dot_dimension_numbers<[1], [0], [0], [1], [0, 0, 1, 1], [], []>} : vector<128x128xbf16>, vector<128x4xbf16>, vector<128x4xf32> -> vector<128x4xf32>
    %c0_50 = arith.constant 0 : index
    %c0_51 = arith.constant 0 : index
    %85 = vector.load %arg22[%c0_50, %c0_51] : memref<1x4xf32, #tpu.memory_space<vmem>>, vector<1x4xf32>
    %86 = vector.broadcast %85 : vector<1x4xf32> to vector<128x4xf32>
    %87 = arith.addf %84, %86 : vector<128x4xf32>
    %c0_52 = arith.constant 0 : index
    %c0_53 = arith.constant 0 : index
    %88 = vector.load %arg23[%c0_52, %c0_53] : memref<128x4xf32, #tpu.memory_space<vmem>>, vector<128x4xf32>
    tpu.vector_store %arg23[%c0_52, %c0_53], %87 {strides = array<i32>} : memref<128x4xf32, #tpu.memory_space<vmem>>, vector<128x4xf32>,
    return
  }
  func.func @transform_0(%arg0: i32) -> (i32, i32) {
    %c0_i32 = arith.constant 0 : i32
    %c0_i32_0 = arith.constant 0 : i32
    return %arg0, %c0_i32 : i32, i32
  }
  func.func @transform_1(%arg0: i32) -> (i32, i32) {
    %c0_i32 = arith.constant 0 : i32
    %c0_i32_0 = arith.constant 0 : i32
    %c0_i32_1 = arith.constant 0 : i32
    return %c0_i32, %c0_i32_0 : i32, i32
  }
  func.func @transform_2(%arg0: i32) -> (i32, i32) {
    %c0_i32 = arith.constant 0 : i32
    %c0_i32_0 = arith.constant 0 : i32
    %c0_i32_1 = arith.constant 0 : i32
    return %c0_i32, %c0_i32_0 : i32, i32
  }
  func.func @transform_3(%arg0: i32) -> (i32, i32) {
    %c0_i32 = arith.constant 0 : i32
    %c0_i32_0 = arith.constant 0 : i32
    %c0_i32_1 = arith.constant 0 : i32
    return %c0_i32, %c0_i32_0 : i32, i32
  }
  func.func @transform_4(%arg0: i32) -> (i32, i32) {
    %c0_i32 = arith.constant 0 : i32
    %c0_i32_0 = arith.constant 0 : i32
    %c0_i32_1 = arith.constant 0 : i32
    return %c0_i32, %c0_i32_0 : i32, i32
  }
  func.func @transform_5(%arg0: i32) -> (i32, i32) {
    %c0_i32 = arith.constant 0 : i32
    %c0_i32_0 = arith.constant 0 : i32
    %c0_i32_1 = arith.constant 0 : i32
    return %c0_i32, %c0_i32_0 : i32, i32
  }
  func.func @transform_6(%arg0: i32) -> (i32, i32) {
    %c0_i32 = arith.constant 0 : i32
    %c0_i32_0 = arith.constant 0 : i32
    %c0_i32_1 = arith.constant 0 : i32
    return %c0_i32, %c0_i32_0 : i32, i32
  }
  func.func @transform_7(%arg0: i32) -> (i32, i32) {
    %c0_i32 = arith.constant 0 : i32
    %c0_i32_0 = arith.constant 0 : i32
    %c0_i32_1 = arith.constant 0 : i32
    return %c0_i32, %c0_i32_0 : i32, i32
  }
  func.func @transform_8(%arg0: i32) -> (i32, i32) {
    %c0_i32 = arith.constant 0 : i32
    %c0_i32_0 = arith.constant 0 : i32
    %c0_i32_1 = arith.constant 0 : i32
    return %c0_i32, %c0_i32_0 : i32, i32
  }
  func.func @transform_9(%arg0: i32) -> (i32, i32) {
    %c0_i32 = arith.constant 0 : i32
    %c0_i32_0 = arith.constant 0 : i32
    %c0_i32_1 = arith.constant 0 : i32
    return %c0_i32, %c0_i32_0 : i32, i32
  }
  func.func @transform_10(%arg0: i32) -> (i32, i32) {
    %c0_i32 = arith.constant 0 : i32
    %c0_i32_0 = arith.constant 0 : i32
    %c0_i32_1 = arith.constant 0 : i32
    return %c0_i32, %c0_i32_0 : i32, i32
  }
  func.func @transform_11(%arg0: i32) -> (i32, i32) {
    %c0_i32 = arith.constant 0 : i32
    %c0_i32_0 = arith.constant 0 : i32
    %c0_i32_1 = arith.constant 0 : i32
    return %c0_i32, %c0_i32_0 : i32, i32
  }
  func.func @transform_12(%arg0: i32) -> (i32, i32) {
    %c0_i32 = arith.constant 0 : i32
    %c0_i32_0 = arith.constant 0 : i32
    %c0_i32_1 = arith.constant 0 : i32
    return %c0_i32, %c0_i32_0 : i32, i32
  }
  func.func @transform_13(%arg0: i32) -> (i32, i32) {
    %c0_i32 = arith.constant 0 : i32
    %c0_i32_0 = arith.constant 0 : i32
    %c0_i32_1 = arith.constant 0 : i32
    return %c0_i32, %c0_i32_0 : i32, i32
  }
  func.func @transform_14(%arg0: i32) -> (i32, i32) {
    %c0_i32 = arith.constant 0 : i32
    %c0_i32_0 = arith.constant 0 : i32
    %c0_i32_1 = arith.constant 0 : i32
    return %c0_i32, %c0_i32_0 : i32, i32
  }
  func.func @transform_15(%arg0: i32) -> (i32, i32) {
    %c0_i32 = arith.constant 0 : i32
    %c0_i32_0 = arith.constant 0 : i32
    %c0_i32_1 = arith.constant 0 : i32
    return %c0_i32, %c0_i32_0 : i32, i32
  }
  func.func @transform_16(%arg0: i32) -> (i32, i32) {
    %c0_i32 = arith.constant 0 : i32
    %c0_i32_0 = arith.constant 0 : i32
    %c0_i32_1 = arith.constant 0 : i32
    return %c0_i32, %c0_i32_0 : i32, i32
  }
  func.func @transform_17(%arg0: i32) -> (i32, i32) {
    %c0_i32 = arith.constant 0 : i32
    %c0_i32_0 = arith.constant 0 : i32
    %c0_i32_1 = arith.constant 0 : i32
    return %c0_i32, %c0_i32_0 : i32, i32
  }
  func.func @transform_18(%arg0: i32) -> (i32, i32) {
    %c0_i32 = arith.constant 0 : i32
    %c0_i32_0 = arith.constant 0 : i32
    %c0_i32_1 = arith.constant 0 : i32
    return %c0_i32, %c0_i32_0 : i32, i32
  }
  func.func @transform_19(%arg0: i32) -> (i32, i32) {
    %c0_i32 = arith.constant 0 : i32
    %c0_i32_0 = arith.constant 0 : i32
    %c0_i32_1 = arith.constant 0 : i32
    return %c0_i32, %c0_i32_0 : i32, i32
  }
  func.func @transform_20(%arg0: i32) -> (i32, i32) {
    %c0_i32 = arith.constant 0 : i32
    %c0_i32_0 = arith.constant 0 : i32
    %c0_i32_1 = arith.constant 0 : i32
    return %c0_i32, %c0_i32_0 : i32, i32
  }
  func.func @transform_21(%arg0: i32) -> (i32, i32) {
    %c0_i32 = arith.constant 0 : i32
    %c0_i32_0 = arith.constant 0 : i32
    %c0_i32_1 = arith.constant 0 : i32
    return %c0_i32, %c0_i32_0 : i32, i32
  }
  func.func @transform_22(%arg0: i32) -> (i32, i32) {
    %c0_i32 = arith.constant 0 : i32
    %c0_i32_0 = arith.constant 0 : i32
    return %arg0, %c0_i32 : i32, i32
  }
}

</mosaic_0001>

<llo_original>
// kernel: tpu_custom_call.1
$region0: #{tpu_custom_call.1}
  #allocation0 [shape = 'u32[]', space=smem, size = 0x4, offset = 0x4, fixed_abs, tag = 'smem constant byte address 0x4 - core index']
  #allocation1 [shape = 'u32[144,128]{1,0:T(1,128)}', space=vmem, size = 0x12000, scoped, tag = 'internal scratch']
  %s0 = inlined_call_operand.vmem [shape: f32[128,3], index: 0, kind: input, shape index: {}]
  %s1 = inlined_call_operand.hbm [shape: f32[3,64], index: 1, kind: input, shape index: {}]
  %s2 = inlined_call_operand.hbm [shape: f32[1,64], index: 2, kind: input, shape index: {}]
  %s3 = inlined_call_operand.hbm [shape: bf16[64,64], index: 3, kind: input, shape index: {}]
  %s4 = inlined_call_operand.hbm [shape: f32[1,64], index: 4, kind: input, shape index: {}]
  %s5 = inlined_call_operand.hbm [shape: bf16[64,64], index: 5, kind: input, shape index: {}]
  %s6 = inlined_call_operand.hbm [shape: f32[1,64], index: 6, kind: input, shape index: {}]
  %s7 = inlined_call_operand.hbm [shape: bf16[64,128], index: 7, kind: input, shape index: {}]
  %s8 = inlined_call_operand.hbm [shape: f32[1,128], index: 8, kind: input, shape index: {}]
  %s9 = inlined_call_operand.hbm [shape: bf16[128,1024], index: 9, kind: input, shape index: {}]
  %s10 = inlined_call_operand.hbm [shape: f32[1,1024], index: 10, kind: input, shape index: {}]
  %s11 = inlined_call_operand.vmem [shape: bf16[64,512], index: 11, kind: input, shape index: {}]
  %s12 = inlined_call_operand.hbm [shape: bf16[1024,512], index: 12, kind: input, shape index: {}]
  %s13 = inlined_call_operand.hbm [shape: f32[1,512], index: 13, kind: input, shape index: {}]
  %s14 = inlined_call_operand.hbm [shape: bf16[512,256], index: 14, kind: input, shape index: {}]
  %s15 = inlined_call_operand.vmem [shape: f32[1,256], index: 15, kind: input, shape index: {}]
  %s16 = inlined_call_operand.vmem [shape: bf16[256,128], index: 16, kind: input, shape index: {}]
  %s17 = inlined_call_operand.vmem [shape: f32[1,128], index: 17, kind: input, shape index: {}]
  %s18 = inlined_call_operand.hbm [shape: bf16[128,128], index: 18, kind: input, shape index: {}]
  %s19 = inlined_call_operand.vmem [shape: f32[1,128], index: 19, kind: input, shape index: {}]
  %s20 = inlined_call_operand.vmem [shape: bf16[128,4], index: 20, kind: input, shape index: {}]
  %s21 = inlined_call_operand.vmem [shape: f32[1,4], index: 21, kind: input, shape index: {}]
  %s22 = inlined_call_operand.vmem [shape: f32[128,4], index: 22, kind: output, shape index: {}]
  %s23 = sld [smem:[#allocation0]]
  $region154: #{tpu_custom_call.1} parent=0
    _
  %s25 = ssub.s32 1, %s23
  %s26 = scalar_select 0, %s25, %s23
  $region1: #{tpu_custom_call.1} parent=0
    #allocation2 [shape = 'u8[2048]{0}', space=vmem, size = 0x800, scoped, tag = 'input window, operand 1, single buffered']
    #allocation3 [shape = 's32[1]{0}', space=sflag, size = 0x4, scoped, tag = 'scoped memory for tpu_custom_call.1']
    #allocation4 [shape = 'u8[512]{0}', space=vmem, size = 0x400, scoped, tag = 'input window, operand 2, single buffered']
    #allocation5 [shape = 's32[1]{0}', space=sflag, size = 0x4, scoped, tag = 'scoped memory for tpu_custom_call.1']
    #allocation6 [shape = 'u8[16384]{0}', space=vmem, size = 0x4000, scoped, tag = 'input window, operand 3, single buffered']
    #allocation7 [shape = 'u8[512]{0}', space=vmem, size = 0x400, scoped, tag = 'input window, operand 4, single buffered']
    #allocation8 [shape = 's32[1]{0}', space=sflag, size = 0x4, scoped, tag = 'scoped memory for tpu_custom_call.1']
    #allocation9 [shape = 'u8[16384]{0}', space=vmem, size = 0x4000, scoped, tag = 'input window, operand 5, single buffered']
    #allocation10 [shape = 'u8[512]{0}', space=vmem, size = 0x400, scoped, tag = 'input window, operand 6, single buffered']
    #allocation11 [shape = 's32[1]{0}', space=sflag, size = 0x4, scoped, tag = 'scoped memory for tpu_custom_call.1']
    #allocation12 [shape = 'u8[16384]{0}', space=vmem, size = 0x4000, scoped, tag = 'input window, operand 7, single buffered']
    #allocation13 [shape = 'u8[512]{0}', space=vmem, size = 0x400, scoped, tag = 'input window, operand 8, single buffered']
    #allocation14 [shape = 's32[1]{0}', space=sflag, size = 0x4, scoped, tag = 'scoped memory for tpu_custom_call.1']
    #allocation15 [shape = 'u8[262144]{0}', space=vmem, size = 0x40000, scoped, tag = 'input window, operand 9, single buffered']
    #allocation16 [shape = 'u8[4096]{0}', space=vmem, size = 0x1000, scoped, tag = 'input window, operand 10, single buffered']
    #allocation17 [shape = 's32[1]{0}', space=sflag, size = 0x4, scoped, tag = 'scoped memory for tpu_custom_call.1']
    #allocation18 [shape = 'u8[1048576]{0}', space=vmem, size = 0x100000, scoped, tag = 'input window, operand 12, single buffered']
    #allocation19 [shape = 'u8[2048]{0}', space=vmem, size = 0x800, scoped, tag = 'input window, operand 13, single buffered']
    #allocation20 [shape = 's32[1]{0}', space=sflag, size = 0x4, scoped, tag = 'scoped memory for tpu_custom_call.1']
    #allocation21 [shape = 'u8[262144]{0}', space=vmem, size = 0x40000, scoped, tag = 'input window, operand 14, single buffered']
    #allocation22 [shape = 'u8[32768]{0}', space=vmem, size = 0x8000, scoped, tag = 'input window, operand 18, single buffered']
    #allocation23 [shape = 's32[1]{0}', space=sflag, size = 0x4, scoped, tag = 'scoped memory for tpu_custom_call.1']
    %27 = vsyncpa [#allocation3], 0
    %28 = vsyncpa [#allocation5], 0
    %29 = vsyncpa [#allocation8], 0
    %30 = vsyncpa [#allocation11], 0
    %31 = vsyncpa [#allocation14], 0
    %32 = vsyncpa [#allocation17], 0
    %33 = vsyncpa [#allocation20], 0
    %34 = vsyncpa [#allocation23], 0
    // Predicated region
    $region2: #{tpu_custom_call.1} parent=1 // pred_check
      _
    $region3: #{tpu_custom_call.1} parent=1 // pred_check_branch
      %36 = sbr.rel (0) target = $region5
    $region4: #{tpu_custom_call.1} parent=1 // pred_region
      _
    $region5: #{tpu_custom_call.1} parent=1 // pred_fallthru
      _
    // Predicated region
    $region6: #{tpu_custom_call.1} parent=1 // pred_check
      _
    $region7: #{tpu_custom_call.1} parent=1 // pred_check_branch
      %38 = sbr.rel (0) target = $region9
    $region8: #{tpu_custom_call.1} parent=1 // pred_region
      %s40 = ssub.s32 64, 64
      %41 = vsyncadd [#allocation3], %s40
      %s43 = sshll.u32 [#allocation2], 4
      %s44 = int_to_ptr.vmem [resolvable:$true] %s43
      %46 = dma.hbm_to_vmem [thread:$0]  %s1, 64, %s44, [#allocation3]
    $region9: #{tpu_custom_call.1} parent=1 // pred_fallthru
      _
    // Predicated region
    $region10: #{tpu_custom_call.1} parent=1 // pred_check
      _
    $region11: #{tpu_custom_call.1} parent=1 // pred_check_branch
      %48 = sbr.rel (0) target = $region13
    $region12: #{tpu_custom_call.1} parent=1 // pred_region
      %s50 = ssub.s32 16, 16
      %51 = vsyncadd [#allocation5], %s50
      %s53 = sshll.u32 [#allocation4], 4
      %s54 = int_to_ptr.vmem [resolvable:$true] %s53
      %56 = dma.hbm_to_vmem [thread:$0]  %s2, 16, %s54, [#allocation5]
    $region13: #{tpu_custom_call.1} parent=1 // pred_fallthru
      _
    // Predicated region
    $region14: #{tpu_custom_call.1} parent=1 // pred_check
      _
    $region15: #{tpu_custom_call.1} parent=1 // pred_check_branch
      %58 = sbr.rel (0) target = $region17
    $region16: #{tpu_custom_call.1} parent=1 // pred_region
      %s60 = ssub.s32 512, 512
      %61 = vsyncadd [#allocation5], %s60
      %s62 = sshll.u32 [#allocation6], 4
      %s63 = int_to_ptr.vmem [resolvable:$true] %s62
      %68 = dma.hbm_to_vmem [thread:$0]  %s3, 512, %s63, [#allocation5], 64, 64, 4
    $region17: #{tpu_custom_call.1} parent=1 // pred_fallthru
      _
    // Predicated region
    $region18: #{tpu_custom_call.1} parent=1 // pred_check
      _
    $region19: #{tpu_custom_call.1} parent=1 // pred_check_branch
      %70 = sbr.rel (0) target = $region21
    $region20: #{tpu_custom_call.1} parent=1 // pred_region
      %s72 = ssub.s32 16, 16
      %73 = vsyncadd [#allocation8], %s72
      %s75 = sshll.u32 [#allocation7], 4
      %s76 = int_to_ptr.vmem [resolvable:$true] %s75
      %78 = dma.hbm_to_vmem [thread:$0]  %s4, 16, %s76, [#allocation8]
    $region21: #{tpu_custom_call.1} parent=1 // pred_fallthru
      _
    // Predicated region
    $region22: #{tpu_custom_call.1} parent=1 // pred_check
      _
    $region23: #{tpu_custom_call.1} parent=1 // pred_check_branch
      %80 = sbr.rel (0) target = $region25
    $region24: #{tpu_custom_call.1} parent=1 // pred_region
      %s82 = ssub.s32 512, 512
      %83 = vsyncadd [#allocation8], %s82
      %s84 = sshll.u32 [#allocation9], 4
      %s85 = int_to_ptr.vmem [resolvable:$true] %s84
      %90 = dma.hbm_to_vmem [thread:$0]  %s5, 512, %s85, [#allocation8], 64, 64, 4
    $region25: #{tpu_custom_call.1} parent=1 // pred_fallthru
      _
    // Predicated region
    $region26: #{tpu_custom_call.1} parent=1 // pred_check
      _
    $region27: #{tpu_custom_call.1} parent=1 // pred_check_branch
      %92 = sbr.rel (0) target = $region29
    $region28: #{tpu_custom_call.1} parent=1 // pred_region
      %s94 = ssub.s32 16, 16
      %95 = vsyncadd [#allocation11], %s94
      %s97 = sshll.u32 [#allocation10], 4
      %s98 = int_to_ptr.vmem [resolvable:$true] %s97
      %100 = dma.hbm_to_vmem [thread:$0]  %s6, 16, %s98, [#allocation11]
    $region29: #{tpu_custom_call.1} parent=1 // pred_fallthru
      _
    // Predicated region
    $region30: #{tpu_custom_call.1} parent=1 // pred_check
      _
    $region31: #{tpu_custom_call.1} parent=1 // pred_check_branch
      %102 = sbr.rel (0) target = $region33
    $region32: #{tpu_custom_call.1} parent=1 // pred_region
      %s104 = ssub.s32 512, 512
      %105 = vsyncadd [#allocation11], %s104
      %s106 = sshll.u32 [#allocation12], 4
      %s107 = int_to_ptr.vmem [resolvable:$true] %s106
      %112 = dma.hbm_to_vmem [thread:$0]  %s7, 512, %s107, [#allocation11], 64, 64, 4
    $region33: #{tpu_custom_call.1} parent=1 // pred_fallthru
      _
    // Predicated region
    $region34: #{tpu_custom_call.1} parent=1 // pred_check
      _
    $region35: #{tpu_custom_call.1} parent=1 // pred_check_branch
      %114 = sbr.rel (0) target = $region37
    $region36: #{tpu_custom_call.1} parent=1 // pred_region
      %s116 = ssub.s32 16, 16
      %117 = vsyncadd [#allocation14], %s116
      %s119 = sshll.u32 [#allocation13], 4
      %s120 = int_to_ptr.vmem [resolvable:$true] %s119
      %122 = dma.hbm_to_vmem [thread:$0]  %s8, 16, %s120, [#allocation14]
    $region37: #{tpu_custom_call.1} parent=1 // pred_fallthru
      _
    // Predicated region
    $region38: #{tpu_custom_call.1} parent=1 // pred_check
      _
    $region39: #{tpu_custom_call.1} parent=1 // pred_check_branch
      %124 = sbr.rel (0) target = $region41
    $region40: #{tpu_custom_call.1} parent=1 // pred_region
      %s126 = ssub.s32 8192, 8192
      %127 = vsyncadd [#allocation14], %s126
      %s128 = sshll.u32 [#allocation15], 4
      %s129 = int_to_ptr.vmem [resolvable:$true] %s128
      %134 = dma.hbm_to_vmem [thread:$0]  %s9, 8192, %s129, [#allocation14], 512, 512, 32
    $region41: #{tpu_custom_call.1} parent=1 // pred_fallthru
      _
    // Predicated region
    $region42: #{tpu_custom_call.1} parent=1 // pred_check
      _
    $region43: #{tpu_custom_call.1} parent=1 // pred_check_branch
      %136 = sbr.rel (0) target = $region45
    $region44: #{tpu_custom_call.1} parent=1 // pred_region
      %s138 = ssub.s32 128, 128
      %139 = vsyncadd [#allocation17], %s138
      %s141 = sshll.u32 [#allocation16], 4
      %s142 = int_to_ptr.vmem [resolvable:$true] %s141
      %144 = dma.hbm_to_vmem [thread:$0]  %s10, 128, %s142, [#allocation17]
    $region45: #{tpu_custom_call.1} parent=1 // pred_fallthru
      _
    // Predicated region
    $region46: #{tpu_custom_call.1} parent=1 // pred_check
      _
    $region47: #{tpu_custom_call.1} parent=1 // pred_check_branch
      %146 = sbr.rel (0) target = $region49
    $region48: #{tpu_custom_call.1} parent=1 // pred_region
      _
    $region49: #{tpu_custom_call.1} parent=1 // pred_fallthru
      _
    // Predicated region
    $region50: #{tpu_custom_call.1} parent=1 // pred_check
      _
    $region51: #{tpu_custom_call.1} parent=1 // pred_check_branch
      %148 = sbr.rel (0) target = $region53
    $region52: #{tpu_custom_call.1} parent=1 // pred_region
      %s150 = ssub.s32 32768, 32768
      %151 = vsyncadd [#allocation17], %s150
      %s152 = sshll.u32 [#allocation18], 4
      %s153 = int_to_ptr.vmem [resolvable:$true] %s152
      %158 = dma.hbm_to_vmem [thread:$0]  %s12, 32768, %s153, [#allocation17], 256, 256, 16
    $region53: #{tpu_custom_call.1} parent=1 // pred_fallthru
      _
    // Predicated region
    $region54: #{tpu_custom_call.1} parent=1 // pred_check
      _
    $region55: #{tpu_custom_call.1} parent=1 // pred_check_branch
      %160 = sbr.rel (0) target = $region57
    $region56: #{tpu_custom_call.1} parent=1 // pred_region
      %s162 = ssub.s32 64, 64
      %163 = vsyncadd [#allocation20], %s162
      %s165 = sshll.u32 [#allocation19], 4
      %s166 = int_to_ptr.vmem [resolvable:$true] %s165
      %168 = dma.hbm_to_vmem [thread:$0]  %s13, 64, %s166, [#allocation20]
    $region57: #{tpu_custom_call.1} parent=1 // pred_fallthru
      _
    // Predicated region
    $region58: #{tpu_custom_call.1} parent=1 // pred_check
      _
    $region59: #{tpu_custom_call.1} parent=1 // pred_check_branch
      %170 = sbr.rel (0) target = $region61
    $region60: #{tpu_custom_call.1} parent=1 // pred_region
      %s172 = ssub.s32 8192, 8192
      %173 = vsyncadd [#allocation20], %s172
      %s174 = sshll.u32 [#allocation21], 4
      %s175 = int_to_ptr.vmem [resolvable:$true] %s174
      %180 = dma.hbm_to_vmem [thread:$0]  %s14, 8192, %s175, [#allocation20], 128, 128, 8
    $region61: #{tpu_custom_call.1} parent=1 // pred_fallthru
      _
    // Predicated region
    $region62: #{tpu_custom_call.1} parent=1 // pred_check
      _
    $region63: #{tpu_custom_call.1} parent=1 // pred_check_branch
      %182 = sbr.rel (0) target = $region65
    $region64: #{tpu_custom_call.1} parent=1 // pred_region
      _
    $region65: #{tpu_custom_call.1} parent=1 // pred_fallthru
      _
    // Predicated region
    $region66: #{tpu_custom_call.1} parent=1 // pred_check
      _
    $region67: #{tpu_custom_call.1} parent=1 // pred_check_branch
      %184 = sbr.rel (0) target = $region69
    $region68: #{tpu_custom_call.1} parent=1 // pred_region
      _
    $region69: #{tpu_custom_call.1} parent=1 // pred_fallthru
      _
    // Predicated region
    $region70: #{tpu_custom_call.1} parent=1 // pred_check
      _
    $region71: #{tpu_custom_call.1} parent=1 // pred_check_branch
      %186 = sbr.rel (0) target = $region73
    $region72: #{tpu_custom_call.1} parent=1 // pred_region
      _
    $region73: #{tpu_custom_call.1} parent=1 // pred_fallthru
      _
    // Predicated region
    $region74: #{tpu_custom_call.1} parent=1 // pred_check
      _
    $region75: #{tpu_custom_call.1} parent=1 // pred_check_branch
      %188 = sbr.rel (0) target = $region77
    $region76: #{tpu_custom_call.1} parent=1 // pred_region
      %s190 = ssub.s32 1024, 1024
      %191 = vsyncadd [#allocation23], %s190
      %s192 = sshll.u32 [#allocation22], 4
      %s193 = int_to_ptr.vmem [resolvable:$true] %s192
      %198 = dma.hbm_to_vmem [thread:$0]  %s18, 1024, %s193, [#allocation23], 64, 64, 4
    $region77: #{tpu_custom_call.1} parent=1 // pred_fallthru
      _
    // Predicated region
    $region78: #{tpu_custom_call.1} parent=1 // pred_check
      _
    $region79: #{tpu_custom_call.1} parent=1 // pred_check_branch
      %200 = sbr.rel (0) target = $region81
    $region80: #{tpu_custom_call.1} parent=1 // pred_region
      _
    $region81: #{tpu_custom_call.1} parent=1 // pred_fallthru
      _
    // Predicated region
    $region82: #{tpu_custom_call.1} parent=1 // pred_check
      _
    $region83: #{tpu_custom_call.1} parent=1 // pred_check_branch
      %202 = sbr.rel (0) target = $region85
    $region84: #{tpu_custom_call.1} parent=1 // pred_region
      _
    $region85: #{tpu_custom_call.1} parent=1 // pred_fallthru
      _
    // Predicated region
    $region86: #{tpu_custom_call.1} parent=1 // pred_check
      _
    $region87: #{tpu_custom_call.1} parent=1 // pred_check_branch
      %204 = sbr.rel (0) target = $region89
    $region88: #{tpu_custom_call.1} parent=1 // pred_region
      _
    $region89: #{tpu_custom_call.1} parent=1 // pred_fallthru
      _
    // Predicated region
    $region90: #{tpu_custom_call.1} parent=1 // pred_check
      _
    $region91: #{tpu_custom_call.1} parent=1 // pred_check_branch
      %206 = sbr.rel (0) target = $region93
    $region92: #{tpu_custom_call.1} parent=1 // pred_region
      %207 = dma.done [#allocation3], 64
    $region93: #{tpu_custom_call.1} parent=1 // pred_fallthru
      _
    // Predicated region
    $region94: #{tpu_custom_call.1} parent=1 // pred_check
      _
    $region95: #{tpu_custom_call.1} parent=1 // pred_check_branch
      %209 = sbr.rel (0) target = $region97
    $region96: #{tpu_custom_call.1} parent=1 // pred_region
      %210 = dma.done [#allocation5], 16
    $region97: #{tpu_custom_call.1} parent=1 // pred_fallthru
      _
    // Predicated region
    $region98: #{tpu_custom_call.1} parent=1 // pred_check
      _
    $region99: #{tpu_custom_call.1} parent=1 // pred_check_branch
      %212 = sbr.rel (0) target = $region101
    $region100: #{tpu_custom_call.1} parent=1 // pred_region
      %213 = dma.done [#allocation5], 512
    $region101: #{tpu_custom_call.1} parent=1 // pred_fallthru
      _
    // Predicated region
    $region102: #{tpu_custom_call.1} parent=1 // pred_check
      _
    $region103: #{tpu_custom_call.1} parent=1 // pred_check_branch
      %215 = sbr.rel (0) target = $region105
    $region104: #{tpu_custom_call.1} parent=1 // pred_region
      %216 = dma.done [#allocation8], 16
    $region105: #{tpu_custom_call.1} parent=1 // pred_fallthru
      _
    // Predicated region
    $region106: #{tpu_custom_call.1} parent=1 // pred_check
      _
    $region107: #{tpu_custom_call.1} parent=1 // pred_check_branch
      %218 = sbr.rel (0) target = $region109
    $region108: #{tpu_custom_call.1} parent=1 // pred_region
      %219 = dma.done [#allocation8], 512
    $region109: #{tpu_custom_call.1} parent=1 // pred_fallthru
      _
    // Predicated region
    $region110: #{tpu_custom_call.1} parent=1 // pred_check
      _
    $region111: #{tpu_custom_call.1} parent=1 // pred_check_branch
      %221 = sbr.rel (0) target = $region113
    $region112: #{tpu_custom_call.1} parent=1 // pred_region
      %222 = dma.done [#allocation11], 16
    $region113: #{tpu_custom_call.1} parent=1 // pred_fallthru
      _
    // Predicated region
    $region114: #{tpu_custom_call.1} parent=1 // pred_check
      _
    $region115: #{tpu_custom_call.1} parent=1 // pred_check_branch
      %224 = sbr.rel (0) target = $region117
    $region116: #{tpu_custom_call.1} parent=1 // pred_region
      %225 = dma.done [#allocation11], 512
    $region117: #{tpu_custom_call.1} parent=1 // pred_fallthru
      _
    // Predicated region
    $region118: #{tpu_custom_call.1} parent=1 // pred_check
      _
    $region119: #{tpu_custom_call.1} parent=1 // pred_check_branch
      %227 = sbr.rel (0) target = $region121
    $region120: #{tpu_custom_call.1} parent=1 // pred_region
      %228 = dma.done [#allocation14], 16
    $region121: #{tpu_custom_call.1} parent=1 // pred_fallthru
      _
    // Predicated region
    $region122: #{tpu_custom_call.1} parent=1 // pred_check
      _
    $region123: #{tpu_custom_call.1} parent=1 // pred_check_branch
      %230 = sbr.rel (0) target = $region125
    $region124: #{tpu_custom_call.1} parent=1 // pred_region
      %231 = dma.done [#allocation14], 8192
    $region125: #{tpu_custom_call.1} parent=1 // pred_fallthru
      _
    // Predicated region
    $region126: #{tpu_custom_call.1} parent=1 // pred_check
      _
    $region127: #{tpu_custom_call.1} parent=1 // pred_check_branch
      %233 = sbr.rel (0) target = $region129
    $region128: #{tpu_custom_call.1} parent=1 // pred_region
      %234 = dma.done [#allocation17], 128
    $region129: #{tpu_custom_call.1} parent=1 // pred_fallthru
      _
    // Predicated region
    $region130: #{tpu_custom_call.1} parent=1 // pred_check
      _
    $region131: #{tpu_custom_call.1} parent=1 // pred_check_branch
      %236 = sbr.rel (0) target = $region133
    $region132: #{tpu_custom_call.1} parent=1 // pred_region
      %237 = dma.done [#allocation17], 32768
    $region133: #{tpu_custom_call.1} parent=1 // pred_fallthru
      _
    // Predicated region
    $region134: #{tpu_custom_call.1} parent=1 // pred_check
      _
    $region135: #{tpu_custom_call.1} parent=1 // pred_check_branch
      %239 = sbr.rel (0) target = $region137
    $region136: #{tpu_custom_call.1} parent=1 // pred_region
      %240 = dma.done [#allocation20], 64
    $region137: #{tpu_custom_call.1} parent=1 // pred_fallthru
      _
    // Predicated region
    $region138: #{tpu_custom_call.1} parent=1 // pred_check
      _
    $region139: #{tpu_custom_call.1} parent=1 // pred_check_branch
      %242 = sbr.rel (0) target = $region141
    $region140: #{tpu_custom_call.1} parent=1 // pred_region
      %243 = dma.done [#allocation20], 8192
    $region141: #{tpu_custom_call.1} parent=1 // pred_fallthru
      _
    // Predicated region
    $region142: #{tpu_custom_call.1} parent=1 // pred_check
      _
    $region143: #{tpu_custom_call.1} parent=1 // pred_check_branch
      %245 = sbr.rel (0) target = $region145
    $region144: #{tpu_custom_call.1} parent=1 // pred_region
      %246 = dma.done [#allocation23], 1024
    $region145: #{tpu_custom_call.1} parent=1 // pred_fallthru
      _
    %v248 = vld [vmem:[%s0] sm:$0xff]
    %v249 = vld [vmem:[%s0 + $0x8] sm:$0xff]
    %v250 = vld [vmem:[%s0 + $0x10] sm:$0xff]
    %v251 = vld [vmem:[%s0 + $0x18] sm:$0xff]
    %v252 = vld [vmem:[%s0 + $0x20] sm:$0xff]
    %v253 = vld [vmem:[%s0 + $0x28] sm:$0xff]
    %v254 = vld [vmem:[%s0 + $0x30] sm:$0xff]
    %v255 = vld [vmem:[%s0 + $0x38] sm:$0xff]
    %v256 = vld [vmem:[%s0 + $0x40] sm:$0xff]
    %v257 = vld [vmem:[%s0 + $0x48] sm:$0xff]
    %v258 = vld [vmem:[%s0 + $0x50] sm:$0xff]
    %v259 = vld [vmem:[%s0 + $0x58] sm:$0xff]
    %v260 = vld [vmem:[%s0 + $0x60] sm:$0xff]
    %v261 = vld [vmem:[%s0 + $0x68] sm:$0xff]
    %v262 = vld [vmem:[%s0 + $0x70] sm:$0xff]
    %v263 = vld [vmem:[%s0 + $0x78] sm:$0xff]
    %v264 = vld [vmem:[#allocation2] sm:$0x7]
    %266 = vset.pattern.permute.xlu0 0
    %267 = vperm.xlu0 %266, %v248
    %v268 = vpop.permute.xlu0 %267
    %271 = vset.pattern.permute.xlu0 0
    %272 = vperm.xlu0 %271, %v249
    %v273 = vpop.permute.xlu0 %272
    %276 = vset.pattern.permute.xlu0 0
    %277 = vperm.xlu0 %276, %v250
    %v278 = vpop.permute.xlu0 %277
    %281 = vset.pattern.permute.xlu0 0
    %282 = vperm.xlu0 %281, %v251
    %v283 = vpop.permute.xlu0 %282
    %286 = vset.pattern.permute.xlu0 0
    %287 = vperm.xlu0 %286, %v252
    %v288 = vpop.permute.xlu0 %287
    %291 = vset.pattern.permute.xlu0 0
    %292 = vperm.xlu0 %291, %v253
    %v293 = vpop.permute.xlu0 %292
    %296 = vset.pattern.permute.xlu0 0
    %297 = vperm.xlu0 %296, %v254
    %v298 = vpop.permute.xlu0 %297
    %301 = vset.pattern.permute.xlu0 0
    %302 = vperm.xlu0 %301, %v255
    %v303 = vpop.permute.xlu0 %302
    %306 = vset.pattern.permute.xlu0 0
    %307 = vperm.xlu0 %306, %v256
    %v308 = vpop.permute.xlu0 %307
    %311 = vset.pattern.permute.xlu0 0
    %312 = vperm.xlu0 %311, %v257
    %v313 = vpop.permute.xlu0 %312
    %316 = vset.pattern.permute.xlu0 0
    %317 = vperm.xlu0 %316, %v258
    %v318 = vpop.permute.xlu0 %317
    %321 = vset.pattern.permute.xlu0 0
    %322 = vperm.xlu0 %321, %v259
    %v323 = vpop.permute.xlu0 %322
    %326 = vset.pattern.permute.xlu0 0
    %327 = vperm.xlu0 %326, %v260
    %v328 = vpop.permute.xlu0 %327
    %331 = vset.pattern.permute.xlu0 0
    %332 = vperm.xlu0 %331, %v261
    %v333 = vpop.permute.xlu0 %332
    %336 = vset.pattern.permute.xlu0 0
    %337 = vperm.xlu0 %336, %v262
    %v338 = vpop.permute.xlu0 %337
    %341 = vset.pattern.permute.xlu0 0
    %342 = vperm.xlu0 %341, %v263
    %v343 = vpop.permute.xlu0 %342
    %v345 = vlaneseq
    %v346 = vshrl.u32 %v345, 7
    %v347 = vsub.s32 0, %v346
    %v348 = vrot.slane %v264, %v347
    %v349 = vmul.f32 %v268, %v348
    %v350 = vmul.f32 %v273, %v348
    %v351 = vmul.f32 %v278, %v348
    %v352 = vmul.f32 %v283, %v348
    %v353 = vmul.f32 %v288, %v348
    %v354 = vmul.f32 %v293, %v348
    %v355 = vmul.f32 %v298, %v348
    %v356 = vmul.f32 %v303, %v348
    %v357 = vmul.f32 %v308, %v348
    %v358 = vmul.f32 %v313, %v348
    %v359 = vmul.f32 %v318, %v348
    %v360 = vmul.f32 %v323, %v348
    %v361 = vmul.f32 %v328, %v348
    %v362 = vmul.f32 %v333, %v348
    %v363 = vmul.f32 %v338, %v348
    %v364 = vmul.f32 %v343, %v348
    %365 = vset.pattern.permute.xlu0 1
    %366 = vperm.xlu0 %365, %v248
    %v367 = vpop.permute.xlu0 %366
    %369 = vset.pattern.permute.xlu0 1
    %370 = vperm.xlu0 %369, %v249
    %v371 = vpop.permute.xlu0 %370
    %373 = vset.pattern.permute.xlu0 1
    %374 = vperm.xlu0 %373, %v250
    %v375 = vpop.permute.xlu0 %374
    %377 = vset.pattern.permute.xlu0 1
    %378 = vperm.xlu0 %377, %v251
    %v379 = vpop.permute.xlu0 %378
    %381 = vset.pattern.permute.xlu0 1
    %382 = vperm.xlu0 %381, %v252
    %v383 = vpop.permute.xlu0 %382
    %385 = vset.pattern.permute.xlu0 1
    %386 = vperm.xlu0 %385, %v253
    %v387 = vpop.permute.xlu0 %386
    %389 = vset.pattern.permute.xlu0 1
    %390 = vperm.xlu0 %389, %v254
    %v391 = vpop.permute.xlu0 %390
    %393 = vset.pattern.permute.xlu0 1
    %394 = vperm.xlu0 %393, %v255
    %v395 = vpop.permute.xlu0 %394
    %397 = vset.pattern.permute.xlu0 1
    %398 = vperm.xlu0 %397, %v256
    %v399 = vpop.permute.xlu0 %398
    %401 = vset.pattern.permute.xlu0 1
    %402 = vperm.xlu0 %401, %v257
    %v403 = vpop.permute.xlu0 %402
    %405 = vset.pattern.permute.xlu0 1
    %406 = vperm.xlu0 %405, %v258
    %v407 = vpop.permute.xlu0 %406
    %409 = vset.pattern.permute.xlu0 1
    %410 = vperm.xlu0 %409, %v259
    %v411 = vpop.permute.xlu0 %410
    %413 = vset.pattern.permute.xlu0 1
    %414 = vperm.xlu0 %413, %v260
    %v415 = vpop.permute.xlu0 %414
    %417 = vset.pattern.permute.xlu0 1
    %418 = vperm.xlu0 %417, %v261
    %v419 = vpop.permute.xlu0 %418
    %421 = vset.pattern.permute.xlu0 1
    %422 = vperm.xlu0 %421, %v262
    %v423 = vpop.permute.xlu0 %422
    %425 = vset.pattern.permute.xlu0 1
    %426 = vperm.xlu0 %425, %v263
    %v427 = vpop.permute.xlu0 %426
    %v429 = vlaneseq
    %v430 = vshrl.u32 %v429, 7
    %v431 = vsub.s32 1, %v430
    %v432 = vrot.slane %v264, %v431
    %v433 = vmul.f32 %v367, %v432
    %v434 = vmul.f32 %v371, %v432
    %v435 = vmul.f32 %v375, %v432
    %v436 = vmul.f32 %v379, %v432
    %v437 = vmul.f32 %v383, %v432
    %v438 = vmul.f32 %v387, %v432
    %v439 = vmul.f32 %v391, %v432
    %v440 = vmul.f32 %v395, %v432
    %v441 = vmul.f32 %v399, %v432
    %v442 = vmul.f32 %v403, %v432
    %v443 = vmul.f32 %v407, %v432
    %v444 = vmul.f32 %v411, %v432
    %v445 = vmul.f32 %v415, %v432
    %v446 = vmul.f32 %v419, %v432
    %v447 = vmul.f32 %v423, %v432
    %v448 = vmul.f32 %v427, %v432
    %v449 = vadd.f32 %v349, %v433
    %v450 = vadd.f32 %v350, %v434
    %v451 = vadd.f32 %v351, %v435
    %v452 = vadd.f32 %v352, %v436
    %v453 = vadd.f32 %v353, %v437
    %v454 = vadd.f32 %v354, %v438
    %v455 = vadd.f32 %v355, %v439
    %v456 = vadd.f32 %v356, %v440
    %v457 = vadd.f32 %v357, %v441
    %v458 = vadd.f32 %v358, %v442
    %v459 = vadd.f32 %v359, %v443
    %v460 = vadd.f32 %v360, %v444
    %v461 = vadd.f32 %v361, %v445
    %v462 = vadd.f32 %v362, %v446
    %v463 = vadd.f32 %v363, %v447
    %v464 = vadd.f32 %v364, %v448
    %465 = vset.pattern.permute.xlu0 2
    %466 = vperm.xlu0 %465, %v248
    %v467 = vpop.permute.xlu0 %466
    %469 = vset.pattern.permute.xlu0 2
    %470 = vperm.xlu0 %469, %v249
    %v471 = vpop.permute.xlu0 %470
    %473 = vset.pattern.permute.xlu0 2
    %474 = vperm.xlu0 %473, %v250
    %v475 = vpop.permute.xlu0 %474
    %477 = vset.pattern.permute.xlu0 2
    %478 = vperm.xlu0 %477, %v251
    %v479 = vpop.permute.xlu0 %478
    %481 = vset.pattern.permute.xlu0 2
    %482 = vperm.xlu0 %481, %v252
    %v483 = vpop.permute.xlu0 %482
    %485 = vset.pattern.permute.xlu0 2
    %486 = vperm.xlu0 %485, %v253
    %v487 = vpop.permute.xlu0 %486
    %489 = vset.pattern.permute.xlu0 2
    %490 = vperm.xlu0 %489, %v254
    %v491 = vpop.permute.xlu0 %490
    %493 = vset.pattern.permute.xlu0 2
    %494 = vperm.xlu0 %493, %v255
    %v495 = vpop.permute.xlu0 %494
    %497 = vset.pattern.permute.xlu0 2
    %498 = vperm.xlu0 %497, %v256
    %v499 = vpop.permute.xlu0 %498
    %501 = vset.pattern.permute.xlu0 2
    %502 = vperm.xlu0 %501, %v257
    %v503 = vpop.permute.xlu0 %502
    %505 = vset.pattern.permute.xlu0 2
    %506 = vperm.xlu0 %505, %v258
    %v507 = vpop.permute.xlu0 %506
    %509 = vset.pattern.permute.xlu0 2
    %510 = vperm.xlu0 %509, %v259
    %v511 = vpop.permute.xlu0 %510
    %513 = vset.pattern.permute.xlu0 2
    %514 = vperm.xlu0 %513, %v260
    %v515 = vpop.permute.xlu0 %514
    %517 = vset.pattern.permute.xlu0 2
    %518 = vperm.xlu0 %517, %v261
    %v519 = vpop.permute.xlu0 %518
    %521 = vset.pattern.permute.xlu0 2
    %522 = vperm.xlu0 %521, %v262
    %v523 = vpop.permute.xlu0 %522
    %525 = vset.pattern.permute.xlu0 2
    %526 = vperm.xlu0 %525, %v263
    %v527 = vpop.permute.xlu0 %526
    %v529 = vlaneseq
    %v530 = vshrl.u32 %v529, 7
    %v531 = vsub.s32 2, %v530
    %v532 = vrot.slane %v264, %v531
    %v533 = vmul.f32 %v467, %v532
    %v534 = vmul.f32 %v471, %v532
    %v535 = vmul.f32 %v475, %v532
    %v536 = vmul.f32 %v479, %v532
    %v537 = vmul.f32 %v483, %v532
    %v538 = vmul.f32 %v487, %v532
    %v539 = vmul.f32 %v491, %v532
    %v540 = vmul.f32 %v495, %v532
    %v541 = vmul.f32 %v499, %v532
    %v542 = vmul.f32 %v503, %v532
    %v543 = vmul.f32 %v507, %v532
    %v544 = vmul.f32 %v511, %v532
    %v545 = vmul.f32 %v515, %v532
    %v546 = vmul.f32 %v519, %v532
    %v547 = vmul.f32 %v523, %v532
    %v548 = vmul.f32 %v527, %v532
    %v549 = vadd.f32 %v449, %v533
    %v550 = vadd.f32 %v450, %v534
    %v551 = vadd.f32 %v451, %v535
    %v552 = vadd.f32 %v452, %v536
    %v553 = vadd.f32 %v453, %v537
    %v554 = vadd.f32 %v454, %v538
    %v555 = vadd.f32 %v455, %v539
    %v556 = vadd.f32 %v456, %v540
    %v557 = vadd.f32 %v457, %v541
    %v558 = vadd.f32 %v458, %v542
    %v559 = vadd.f32 %v459, %v543
    %v560 = vadd.f32 %v460, %v544
    %v561 = vadd.f32 %v461, %v545
    %v562 = vadd.f32 %v462, %v546
    %v563 = vadd.f32 %v463, %v547
    %v564 = vadd.f32 %v464, %v548
    %v565 = vld [vmem:[#allocation4] sm:$0x1]
    %v567 = vlaneseq
    %v568 = vshrl.u32 %v567, 7
    %v569 = vsub.s32 0, %v568
    %v570 = vrot.slane %v565, %v569
    %v572 = vadd.f32 %v549, %v570
    %v573 = vadd.f32 %v550, %v570
    %v574 = vadd.f32 %v551, %v570
    %v575 = vadd.f32 %v552, %v570
    %v576 = vadd.f32 %v553, %v570
    %v577 = vadd.f32 %v554, %v570
    %v578 = vadd.f32 %v555, %v570
    %v579 = vadd.f32 %v556, %v570
    %v580 = vadd.f32 %v557, %v570
    %v581 = vadd.f32 %v558, %v570
    %v582 = vadd.f32 %v559, %v570
    %v583 = vadd.f32 %v560, %v570
    %v584 = vadd.f32 %v561, %v570
    %v585 = vadd.f32 %v562, %v570
    %v586 = vadd.f32 %v563, %v570
    %v587 = vadd.f32 %v564, %v570
    %v588 = vtanh.pop %v572
    %v589 = vtanh.pop %v573
    %v590 = vtanh.pop %v574
    %v591 = vtanh.pop %v575
    %v592 = vtanh.pop %v576
    %v593 = vtanh.pop %v577
    %v594 = vtanh.pop %v578
    %v595 = vtanh.pop %v579
    %v596 = vtanh.pop %v580
    %v597 = vtanh.pop %v581
    %v598 = vtanh.pop %v582
    %v599 = vtanh.pop %v583
    %v600 = vtanh.pop %v584
    %v601 = vtanh.pop %v585
    %v602 = vtanh.pop %v586
    %v603 = vtanh.pop %v587
    %v604 = vpack.c.bf16 %v589, %v588
    %v605 = vpack.c.bf16 %v591, %v590
    %v606 = vpack.c.bf16 %v593, %v592
    %v607 = vpack.c.bf16 %v595, %v594
    %v608 = vpack.c.bf16 %v597, %v596
    %v609 = vpack.c.bf16 %v599, %v598
    %v610 = vpack.c.bf16 %v601, %v600
    %v611 = vpack.c.bf16 %v603, %v602
    %v612 = vld [vmem:[#allocation6] sm:$0xf]
    %v613 = vld [vmem:[#allocation6 + $0x4] sm:$0xf]
    %v614 = vld [vmem:[#allocation6 + $0x8] sm:$0xf]
    %v615 = vld [vmem:[#allocation6 + $0xc] sm:$0xf]
    %v616 = vld [vmem:[#allocation6 + $0x10] sm:$0xf]
    %v617 = vld [vmem:[#allocation6 + $0x14] sm:$0xf]
    %v618 = vld [vmem:[#allocation6 + $0x18] sm:$0xf]
    %v619 = vld [vmem:[#allocation6 + $0x1c] sm:$0xf]
    %v620 = vld [vmem:[#allocation7] sm:$0x1]
    %v622 = vlaneseq
    %v623 = vshrl.u32 %v622, 7
    %v624 = vsub.s32 0, %v623
    %v625 = vrot.slane %v620, %v624
    %v635 = vunpack.c.l.b16 %v612
    %v636 = vunpack.c.l.b16 %v613
    %v637 = vunpack.c.l.b16 %v614
    %v638 = vunpack.c.l.b16 %v615
    %v639 = vunpack.c.l.b16 %v616
    %v640 = vunpack.c.l.b16 %v617
    %v641 = vunpack.c.l.b16 %v618
    %v642 = vunpack.c.l.b16 %v619
    %v643 = vpack.c.b16 %v636, %v635
    %v644 = vpack.c.b16 %v638, %v637
    %v645 = vpack.c.b16 %v640, %v639
    %v646 = vpack.c.b16 %v642, %v641
    %vm651 = vcmask 523264
    %v653 = vsel %vm651, %v604, 0
    %v656 = vsel %vm651, %v605, 0
    %v659 = vsel %vm651, %v606, 0
    %v662 = vsel %vm651, %v607, 0
    %v665 = vsel %vm651, %v608, 0
    %v668 = vsel %vm651, %v609, 0
    %v671 = vsel %vm651, %v610, 0
    %v674 = vsel %vm651, %v611, 0
    %676 = vmatprep.subr.bf16.mxu0 0
    %677 = vmatpush1.bf16.msra.mxu0 %v643
    %678 = vmatprep.subr.bf16.mxu0 0
    %679 = vmatpush1.bf16.msra.mxu0 %v644
    %680 = vmatprep.subr.bf16.mxu0 0
    %681 = vmatpush1.bf16.msra.mxu0 %v645
    %682 = vmatprep.subr.bf16.mxu0 0
    %683 = vmatpush1.bf16.msra.mxu0 %v646
    %684 = vmatprep.subr.bf16.mxu0 0
    %685 = vmatpush1.bf16.msra.mxu0 0
    %686 = vmatprep.subr.bf16.mxu0 0
    %687 = vmatpush1.bf16.msra.mxu0 0
    %688 = vmatprep.subr.bf16.mxu0 0
    %689 = vmatpush1.bf16.msra.mxu0 0
    %690 = vmatprep.subr.bf16.mxu0 0
    %691 = vmatpush1.bf16.msra.mxu0 0
    %692 = vmatprep.subr.bf16.mxu0 0
    %693 = vmatpush1.bf16.msra.mxu0 0
    %694 = vmatprep.subr.bf16.mxu0 0
    %695 = vmatpush1.bf16.msra.mxu0 0
    %696 = vmatprep.subr.bf16.mxu0 0
    %697 = vmatpush1.bf16.msra.mxu0 0
    %698 = vmatprep.subr.bf16.mxu0 0
    %699 = vmatpush1.bf16.msra.mxu0 0
    %700 = vmatprep.subr.bf16.mxu0 0
    %701 = vmatpush1.bf16.msra.mxu0 0
    %702 = vmatprep.subr.bf16.mxu0 0
    %703 = vmatpush1.bf16.msra.mxu0 0
    %704 = vmatprep.subr.bf16.mxu0 0
    %705 = vmatpush1.bf16.msra.mxu0 0
    %706 = vmatprep.subr.bf16.mxu0 0
    %707 = vmatpush1.bf16.msra.mxu0 0
    %708 = vmatprep.mubr.bf16.mxu0 0
    %709 = vmatmul.mubr.bf16.gmra.mrb[0].mxu0 %v653
    %v710 = vpop.f32.mrb[0].mxu0
    %v711 = vadd.f32 %v625, %v710
    %v712 = vpop.f32.mrb[0].mxu0
    %v713 = vpop.f32.mrb[0].mxu0
    %v714 = vadd.f32 %v625, %v713
    %v715 = vpop.f32.mrb[0].mxu0
    %716 = vmatprep.mubr.bf16.mxu0 0
    %717 = vmatmul.mubr.bf16.gmra.mrb[0].mxu0 %v656
    %v718 = vpop.f32.mrb[0].mxu0
    %v719 = vadd.f32 %v625, %v718
    %v720 = vpop.f32.mrb[0].mxu0
    %v721 = vpop.f32.mrb[0].mxu0
    %v722 = vadd.f32 %v625, %v721
    %v723 = vpop.f32.mrb[0].mxu0
    %724 = vmatprep.mubr.bf16.mxu0 0
    %725 = vmatmul.mubr.bf16.gmra.mrb[0].mxu0 %v659
    %v726 = vpop.f32.mrb[0].mxu0
    %v727 = vadd.f32 %v625, %v726
    %v728 = vpop.f32.mrb[0].mxu0
    %v729 = vpop.f32.mrb[0].mxu0
    %v730 = vadd.f32 %v625, %v729
    %v731 = vpop.f32.mrb[0].mxu0
    %732 = vmatprep.mubr.bf16.mxu0 0
    %733 = vmatmul.mubr.bf16.gmra.mrb[0].mxu0 %v662
    %v734 = vpop.f32.mrb[0].mxu0
    %v735 = vadd.f32 %v625, %v734
    %v736 = vpop.f32.mrb[0].mxu0
    %v737 = vpop.f32.mrb[0].mxu0
    %v738 = vadd.f32 %v625, %v737
    %v739 = vpop.f32.mrb[0].mxu0
    %740 = vmatprep.mubr.bf16.mxu0 0
    %741 = vmatmul.mubr.bf16.gmra.mrb[0].mxu0 %v665
    %v742 = vpop.f32.mrb[0].mxu0
    %v743 = vadd.f32 %v625, %v742
    %v744 = vpop.f32.mrb[0].mxu0
    %v745 = vpop.f32.mrb[0].mxu0
    %v746 = vadd.f32 %v625, %v745
    %v747 = vpop.f32.mrb[0].mxu0
    %748 = vmatprep.mubr.bf16.mxu0 0
    %749 = vmatmul.mubr.bf16.gmra.mrb[0].mxu0 %v668
    %v750 = vpop.f32.mrb[0].mxu0
    %v751 = vadd.f32 %v625, %v750
    %v752 = vpop.f32.mrb[0].mxu0
    %v753 = vpop.f32.mrb[0].mxu0
    %v754 = vadd.f32 %v625, %v753
    %v755 = vpop.f32.mrb[0].mxu0
    %756 = vmatprep.mubr.bf16.mxu0 0
    %757 = vmatmul.mubr.bf16.gmra.mrb[0].mxu0 %v671
    %v758 = vpop.f32.mrb[0].mxu0
    %v759 = vadd.f32 %v625, %v758
    %v760 = vpop.f32.mrb[0].mxu0
    %v761 = vpop.f32.mrb[0].mxu0
    %v762 = vadd.f32 %v625, %v761
    %v763 = vpop.f32.mrb[0].mxu0
    %764 = vmatprep.mubr.bf16.mxu0 0
    %765 = vmatmul.mubr.bf16.gmra.mrb[0].mxu0 %v674
    %v766 = vpop.f32.mrb[0].mxu0
    %v767 = vadd.f32 %v625, %v766
    %v768 = vpop.f32.mrb[0].mxu0
    %v769 = vpop.f32.mrb[0].mxu0
    %v770 = vadd.f32 %v625, %v769
    %v771 = vpop.f32.mrb[0].mxu0
    %772 = vdwg.mxu0
    %v773 = vtanh.pop %v711
    %v774 = vtanh.pop %v714
    %v775 = vtanh.pop %v719
    %v776 = vtanh.pop %v722
    %v777 = vtanh.pop %v727
    %v778 = vtanh.pop %v730
    %v779 = vtanh.pop %v735
    %v780 = vtanh.pop %v738
    %v781 = vtanh.pop %v743
    %v782 = vtanh.pop %v746
    %v783 = vtanh.pop %v751
    %v784 = vtanh.pop %v754
    %v785 = vtanh.pop %v759
    %v786 = vtanh.pop %v762
    %v787 = vtanh.pop %v767
    %v788 = vtanh.pop %v770
    %v789 = vpack.c.bf16 %v774, %v773
    %v790 = vpack.c.bf16 %v776, %v775
    %v791 = vpack.c.bf16 %v778, %v777
    %v792 = vpack.c.bf16 %v780, %v779
    %v793 = vpack.c.bf16 %v782, %v781
    %v794 = vpack.c.bf16 %v784, %v783
    %v795 = vpack.c.bf16 %v786, %v785
    %v796 = vpack.c.bf16 %v788, %v787
    %v797 = vld [vmem:[#allocation9] sm:$0xf]
    %v798 = vld [vmem:[#allocation9 + $0x4] sm:$0xf]
    %v799 = vld [vmem:[#allocation9 + $0x8] sm:$0xf]
    %v800 = vld [vmem:[#allocation9 + $0xc] sm:$0xf]
    %v801 = vld [vmem:[#allocation9 + $0x10] sm:$0xf]
    %v802 = vld [vmem:[#allocation9 + $0x14] sm:$0xf]
    %v803 = vld [vmem:[#allocation9 + $0x18] sm:$0xf]
    %v804 = vld [vmem:[#allocation9 + $0x1c] sm:$0xf]
    %v805 = vld [vmem:[#allocation10] sm:$0x1]
    %v807 = vlaneseq
    %v808 = vshrl.u32 %v807, 7
    %v809 = vsub.s32 0, %v808
    %v810 = vrot.slane %v805, %v809
    %v820 = vunpack.c.l.b16 %v797
    %v821 = vunpack.c.l.b16 %v798
    %v822 = vunpack.c.l.b16 %v799
    %v823 = vunpack.c.l.b16 %v800
    %v824 = vunpack.c.l.b16 %v801
    %v825 = vunpack.c.l.b16 %v802
    %v826 = vunpack.c.l.b16 %v803
    %v827 = vunpack.c.l.b16 %v804
    %v828 = vpack.c.b16 %v821, %v820
    %v829 = vpack.c.b16 %v823, %v822
    %v830 = vpack.c.b16 %v825, %v824
    %v831 = vpack.c.b16 %v827, %v826
    %v837 = vsel %vm651, %v789, 0
    %v840 = vsel %vm651, %v790, 0
    %v843 = vsel %vm651, %v791, 0
    %v846 = vsel %vm651, %v792, 0
    %v849 = vsel %vm651, %v793, 0
    %v852 = vsel %vm651, %v794, 0
    %v855 = vsel %vm651, %v795, 0
    %v858 = vsel %vm651, %v796, 0
    %860 = vmatprep.subr.bf16.mxu0 0
    %861 = vmatpush1.bf16.msra.mxu0 %v828
    %862 = vmatprep.subr.bf16.mxu0 0
    %863 = vmatpush1.bf16.msra.mxu0 %v829
    %864 = vmatprep.subr.bf16.mxu0 0
    %865 = vmatpush1.bf16.msra.mxu0 %v830
    %866 = vmatprep.subr.bf16.mxu0 0
    %867 = vmatpush1.bf16.msra.mxu0 %v831
    %868 = vmatprep.subr.bf16.mxu0 0
    %869 = vmatpush1.bf16.msra.mxu0 0
    %870 = vmatprep.subr.bf16.mxu0 0
    %871 = vmatpush1.bf16.msra.mxu0 0
    %872 = vmatprep.subr.bf16.mxu0 0
    %873 = vmatpush1.bf16.msra.mxu0 0
    %874 = vmatprep.subr.bf16.mxu0 0
    %875 = vmatpush1.bf16.msra.mxu0 0
    %876 = vmatprep.subr.bf16.mxu0 0
    %877 = vmatpush1.bf16.msra.mxu0 0
    %878 = vmatprep.subr.bf16.mxu0 0
    %879 = vmatpush1.bf16.msra.mxu0 0
    %880 = vmatprep.subr.bf16.mxu0 0
    %881 = vmatpush1.bf16.msra.mxu0 0
    %882 = vmatprep.subr.bf16.mxu0 0
    %883 = vmatpush1.bf16.msra.mxu0 0
    %884 = vmatprep.subr.bf16.mxu0 0
    %885 = vmatpush1.bf16.msra.mxu0 0
    %886 = vmatprep.subr.bf16.mxu0 0
    %887 = vmatpush1.bf16.msra.mxu0 0
    %888 = vmatprep.subr.bf16.mxu0 0
    %889 = vmatpush1.bf16.msra.mxu0 0
    %890 = vmatprep.subr.bf16.mxu0 0
    %891 = vmatpush1.bf16.msra.mxu0 0
    %892 = vmatprep.mubr.bf16.mxu0 0
    %893 = vmatmul.mubr.bf16.gmra.mrb[0].mxu0 %v837
    %v894 = vpop.f32.mrb[0].mxu0
    %v895 = vadd.f32 %v810, %v894
    %v896 = vpop.f32.mrb[0].mxu0
    %v897 = vpop.f32.mrb[0].mxu0
    %v898 = vadd.f32 %v810, %v897
    %v899 = vpop.f32.mrb[0].mxu0
    %900 = vmatprep.mubr.bf16.mxu0 0
    %901 = vmatmul.mubr.bf16.gmra.mrb[0].mxu0 %v840
    %v902 = vpop.f32.mrb[0].mxu0
    %v903 = vadd.f32 %v810, %v902
    %v904 = vpop.f32.mrb[0].mxu0
    %v905 = vpop.f32.mrb[0].mxu0
    %v906 = vadd.f32 %v810, %v905
    %v907 = vpop.f32.mrb[0].mxu0
    %908 = vmatprep.mubr.bf16.mxu0 0
    %909 = vmatmul.mubr.bf16.gmra.mrb[0].mxu0 %v843
    %v910 = vpop.f32.mrb[0].mxu0
    %v911 = vadd.f32 %v810, %v910
    %v912 = vpop.f32.mrb[0].mxu0
    %v913 = vpop.f32.mrb[0].mxu0
    %v914 = vadd.f32 %v810, %v913
    %v915 = vpop.f32.mrb[0].mxu0
    %916 = vmatprep.mubr.bf16.mxu0 0
    %917 = vmatmul.mubr.bf16.gmra.mrb[0].mxu0 %v846
    %v918 = vpop.f32.mrb[0].mxu0
    %v919 = vadd.f32 %v810, %v918
    %v920 = vpop.f32.mrb[0].mxu0
    %v921 = vpop.f32.mrb[0].mxu0
    %v922 = vadd.f32 %v810, %v921
    %v923 = vpop.f32.mrb[0].mxu0
    %924 = vmatprep.mubr.bf16.mxu0 0
    %925 = vmatmul.mubr.bf16.gmra.mrb[0].mxu0 %v849
    %v926 = vpop.f32.mrb[0].mxu0
    %v927 = vadd.f32 %v810, %v926
    %v928 = vpop.f32.mrb[0].mxu0
    %v929 = vpop.f32.mrb[0].mxu0
    %v930 = vadd.f32 %v810, %v929
    %v931 = vpop.f32.mrb[0].mxu0
    %932 = vmatprep.mubr.bf16.mxu0 0
    %933 = vmatmul.mubr.bf16.gmra.mrb[0].mxu0 %v852
    %v934 = vpop.f32.mrb[0].mxu0
    %v935 = vadd.f32 %v810, %v934
    %v936 = vpop.f32.mrb[0].mxu0
    %v937 = vpop.f32.mrb[0].mxu0
    %v938 = vadd.f32 %v810, %v937
    %v939 = vpop.f32.mrb[0].mxu0
    %940 = vmatprep.mubr.bf16.mxu0 0
    %941 = vmatmul.mubr.bf16.gmra.mrb[0].mxu0 %v855
    %v942 = vpop.f32.mrb[0].mxu0
    %v943 = vadd.f32 %v810, %v942
    %v944 = vpop.f32.mrb[0].mxu0
    %v945 = vpop.f32.mrb[0].mxu0
    %v946 = vadd.f32 %v810, %v945
    %v947 = vpop.f32.mrb[0].mxu0
    %948 = vmatprep.mubr.bf16.mxu0 0
    %949 = vmatmul.mubr.bf16.gmra.mrb[0].mxu0 %v858
    %v950 = vpop.f32.mrb[0].mxu0
    %v951 = vadd.f32 %v810, %v950
    %v952 = vpop.f32.mrb[0].mxu0
    %v953 = vpop.f32.mrb[0].mxu0
    %v954 = vadd.f32 %v810, %v953
    %v955 = vpop.f32.mrb[0].mxu0
    %956 = vdwg.mxu0
    %v957 = vtanh.pop %v895
    %v958 = vtanh.pop %v898
    %v959 = vtanh.pop %v903
    %v960 = vtanh.pop %v906
    %v961 = vtanh.pop %v911
    %v962 = vtanh.pop %v914
    %v963 = vtanh.pop %v919
    %v964 = vtanh.pop %v922
    %v965 = vtanh.pop %v927
    %v966 = vtanh.pop %v930
    %v967 = vtanh.pop %v935
    %v968 = vtanh.pop %v938
    %v969 = vtanh.pop %v943
    %v970 = vtanh.pop %v946
    %v971 = vtanh.pop %v951
    %v972 = vtanh.pop %v954
    %v973 = vpack.c.bf16 %v958, %v957
    %v974 = vpack.c.bf16 %v960, %v959
    %v975 = vpack.c.bf16 %v962, %v961
    %v976 = vpack.c.bf16 %v964, %v963
    %v977 = vpack.c.bf16 %v966, %v965
    %v978 = vpack.c.bf16 %v968, %v967
    %v979 = vpack.c.bf16 %v970, %v969
    %v980 = vpack.c.bf16 %v972, %v971
    %v981 = vld [vmem:[#allocation12] sm:$0xf]
    %v982 = vld [vmem:[#allocation12 + $0x4] sm:$0xf]
    %v983 = vld [vmem:[#allocation12 + $0x8] sm:$0xf]
    %v984 = vld [vmem:[#allocation12 + $0xc] sm:$0xf]
    %v985 = vld [vmem:[#allocation12 + $0x10] sm:$0xf]
    %v986 = vld [vmem:[#allocation12 + $0x14] sm:$0xf]
    %v987 = vld [vmem:[#allocation12 + $0x18] sm:$0xf]
    %v988 = vld [vmem:[#allocation12 + $0x1c] sm:$0xf]
    %v989 = vld [vmem:[#allocation13] sm:$0x1]
    %v991 = vlaneseq
    %v992 = vshrl.u32 %v991, 7
    %v993 = vsub.s32 0, %v992
    %v994 = vrot.slane %v989, %v993
    %v1004 = vunpack.c.l.b16 %v981
    %v1005 = vunpack.c.l.b16 %v982
    %v1006 = vunpack.c.l.b16 %v983
    %v1007 = vunpack.c.l.b16 %v984
    %v1008 = vunpack.c.l.b16 %v985
    %v1009 = vunpack.c.l.b16 %v986
    %v1010 = vunpack.c.l.b16 %v987
    %v1011 = vunpack.c.l.b16 %v988
    %v1012 = vpack.c.b16 %v1005, %v1004
    %v1013 = vpack.c.b16 %v1007, %v1006
    %v1014 = vpack.c.b16 %v1009, %v1008
    %v1015 = vpack.c.b16 %v1011, %v1010
    %v1021 = vsel %vm651, %v973, 0
    %v1024 = vsel %vm651, %v974, 0
    %v1027 = vsel %vm651, %v975, 0
    %v1030 = vsel %vm651, %v976, 0
    %v1033 = vsel %vm651, %v977, 0
    %v1036 = vsel %vm651, %v978, 0
    %v1039 = vsel %vm651, %v979, 0
    %v1042 = vsel %vm651, %v980, 0
    %1044 = vmatprep.subr.bf16.mxu0 0
    %1045 = vmatpush1.bf16.msra.mxu0 %v1012
    %1046 = vmatprep.subr.bf16.mxu0 0
    %1047 = vmatpush1.bf16.msra.mxu0 %v1013
    %1048 = vmatprep.subr.bf16.mxu0 0
    %1049 = vmatpush1.bf16.msra.mxu0 %v1014
    %1050 = vmatprep.subr.bf16.mxu0 0
    %1051 = vmatpush1.bf16.msra.mxu0 %v1015
    %1052 = vmatprep.subr.bf16.mxu0 0
    %1053 = vmatpush1.bf16.msra.mxu0 0
    %1054 = vmatprep.subr.bf16.mxu0 0
    %1055 = vmatpush1.bf16.msra.mxu0 0
    %1056 = vmatprep.subr.bf16.mxu0 0
    %1057 = vmatpush1.bf16.msra.mxu0 0
    %1058 = vmatprep.subr.bf16.mxu0 0
    %1059 = vmatpush1.bf16.msra.mxu0 0
    %1060 = vmatprep.subr.bf16.mxu0 0
    %1061 = vmatpush1.bf16.msra.mxu0 0
    %1062 = vmatprep.subr.bf16.mxu0 0
    %1063 = vmatpush1.bf16.msra.mxu0 0
    %1064 = vmatprep.subr.bf16.mxu0 0
    %1065 = vmatpush1.bf16.msra.mxu0 0
    %1066 = vmatprep.subr.bf16.mxu0 0
    %1067 = vmatpush1.bf16.msra.mxu0 0
    %1068 = vmatprep.subr.bf16.mxu0 0
    %1069 = vmatpush1.bf16.msra.mxu0 0
    %1070 = vmatprep.subr.bf16.mxu0 0
    %1071 = vmatpush1.bf16.msra.mxu0 0
    %1072 = vmatprep.subr.bf16.mxu0 0
    %1073 = vmatpush1.bf16.msra.mxu0 0
    %1074 = vmatprep.subr.bf16.mxu0 0
    %1075 = vmatpush1.bf16.msra.mxu0 0
    %1076 = vmatprep.mubr.bf16.mxu0 0
    %1077 = vmatmul.mubr.bf16.gmra.mrb[0].mxu0 %v1021
    %v1078 = vpop.f32.mrb[0].mxu0
    %v1079 = vadd.f32 %v994, %v1078
    %v1080 = vpop.f32.mrb[0].mxu0
    %v1081 = vpop.f32.mrb[0].mxu0
    %v1082 = vadd.f32 %v994, %v1081
    %v1083 = vpop.f32.mrb[0].mxu0
    %1084 = vmatprep.mubr.bf16.mxu0 0
    %1085 = vmatmul.mubr.bf16.gmra.mrb[0].mxu0 %v1024
    %v1086 = vpop.f32.mrb[0].mxu0
    %v1087 = vadd.f32 %v994, %v1086
    %v1088 = vpop.f32.mrb[0].mxu0
    %v1089 = vpop.f32.mrb[0].mxu0
    %v1090 = vadd.f32 %v994, %v1089
    %v1091 = vpop.f32.mrb[0].mxu0
    %1092 = vmatprep.mubr.bf16.mxu0 0
    %1093 = vmatmul.mubr.bf16.gmra.mrb[0].mxu0 %v1027
    %v1094 = vpop.f32.mrb[0].mxu0
    %v1095 = vadd.f32 %v994, %v1094
    %v1096 = vpop.f32.mrb[0].mxu0
    %v1097 = vpop.f32.mrb[0].mxu0
    %v1098 = vadd.f32 %v994, %v1097
    %v1099 = vpop.f32.mrb[0].mxu0
    %1100 = vmatprep.mubr.bf16.mxu0 0
    %1101 = vmatmul.mubr.bf16.gmra.mrb[0].mxu0 %v1030
    %v1102 = vpop.f32.mrb[0].mxu0
    %v1103 = vadd.f32 %v994, %v1102
    %v1104 = vpop.f32.mrb[0].mxu0
    %v1105 = vpop.f32.mrb[0].mxu0
    %v1106 = vadd.f32 %v994, %v1105
    %v1107 = vpop.f32.mrb[0].mxu0
    %1108 = vmatprep.mubr.bf16.mxu0 0
    %1109 = vmatmul.mubr.bf16.gmra.mrb[0].mxu0 %v1033
    %v1110 = vpop.f32.mrb[0].mxu0
    %v1111 = vadd.f32 %v994, %v1110
    %v1112 = vpop.f32.mrb[0].mxu0
    %v1113 = vpop.f32.mrb[0].mxu0
    %v1114 = vadd.f32 %v994, %v1113
    %v1115 = vpop.f32.mrb[0].mxu0
    %1116 = vmatprep.mubr.bf16.mxu0 0
    %1117 = vmatmul.mubr.bf16.gmra.mrb[0].mxu0 %v1036
    %v1118 = vpop.f32.mrb[0].mxu0
    %v1119 = vadd.f32 %v994, %v1118
    %v1120 = vpop.f32.mrb[0].mxu0
    %v1121 = vpop.f32.mrb[0].mxu0
    %v1122 = vadd.f32 %v994, %v1121
    %v1123 = vpop.f32.mrb[0].mxu0
    %1124 = vmatprep.mubr.bf16.mxu0 0
    %1125 = vmatmul.mubr.bf16.gmra.mrb[0].mxu0 %v1039
    %v1126 = vpop.f32.mrb[0].mxu0
    %v1127 = vadd.f32 %v994, %v1126
    %v1128 = vpop.f32.mrb[0].mxu0
    %v1129 = vpop.f32.mrb[0].mxu0
    %v1130 = vadd.f32 %v994, %v1129
    %v1131 = vpop.f32.mrb[0].mxu0
    %1132 = vmatprep.mubr.bf16.mxu0 0
    %1133 = vmatmul.mubr.bf16.gmra.mrb[0].mxu0 %v1042
    %v1134 = vpop.f32.mrb[0].mxu0
    %v1135 = vadd.f32 %v994, %v1134
    %v1136 = vpop.f32.mrb[0].mxu0
    %v1137 = vpop.f32.mrb[0].mxu0
    %v1138 = vadd.f32 %v994, %v1137
    %v1139 = vpop.f32.mrb[0].mxu0
    %1140 = vdwg.mxu0
    %v1141 = vtanh.pop %v1079
    %v1142 = vtanh.pop %v1082
    %v1143 = vtanh.pop %v1087
    %v1144 = vtanh.pop %v1090
    %v1145 = vtanh.pop %v1095
    %v1146 = vtanh.pop %v1098
    %v1147 = vtanh.pop %v1103
    %v1148 = vtanh.pop %v1106
    %v1149 = vtanh.pop %v1111
    %v1150 = vtanh.pop %v1114
    %v1151 = vtanh.pop %v1119
    %v1152 = vtanh.pop %v1122
    %v1153 = vtanh.pop %v1127
    %v1154 = vtanh.pop %v1130
    %v1155 = vtanh.pop %v1135
    %v1156 = vtanh.pop %v1138
    %v1157 = vpack.c.bf16 %v1142, %v1141
    %v1158 = vpack.c.bf16 %v1144, %v1143
    %v1159 = vpack.c.bf16 %v1146, %v1145
    %v1160 = vpack.c.bf16 %v1148, %v1147
    %v1161 = vpack.c.bf16 %v1150, %v1149
    %v1162 = vpack.c.bf16 %v1152, %v1151
    %v1163 = vpack.c.bf16 %v1154, %v1153
    %v1164 = vpack.c.bf16 %v1156, %v1155
    %v1165 = vld [vmem:[#allocation15] sm:$0xff]
    %v1166 = vld [vmem:[#allocation15 + $0x8] sm:$0xff]
    %v1167 = vld [vmem:[#allocation15 + $0x10] sm:$0xff]
    %v1168 = vld [vmem:[#allocation15 + $0x18] sm:$0xff]
    %v1169 = vld [vmem:[#allocation15 + $0x20] sm:$0xff]
    %v1170 = vld [vmem:[#allocation15 + $0x28] sm:$0xff]
    %v1171 = vld [vmem:[#allocation15 + $0x30] sm:$0xff]
    %v1172 = vld [vmem:[#allocation15 + $0x38] sm:$0xff]
    %v1173 = vld [vmem:[#allocation15 + $0x40] sm:$0xff]
    %v1174 = vld [vmem:[#allocation15 + $0x48] sm:$0xff]
    %v1175 = vld [vmem:[#allocation15 + $0x50] sm:$0xff]
    %v1176 = vld [vmem:[#allocation15 + $0x58] sm:$0xff]
    %v1177 = vld [vmem:[#allocation15 + $0x60] sm:$0xff]
    %v1178 = vld [vmem:[#allocation15 + $0x68] sm:$0xff]
    %v1179 = vld [vmem:[#allocation15 + $0x70] sm:$0xff]
    %v1180 = vld [vmem:[#allocation15 + $0x78] sm:$0xff]
    %v1181 = vld [vmem:[#allocation15 + $0x80] sm:$0xff]
    %v1182 = vld [vmem:[#allocation15 + $0x88] sm:$0xff]
    %v1183 = vld [vmem:[#allocation15 + $0x90] sm:$0xff]
    %v1184 = vld [vmem:[#allocation15 + $0x98] sm:$0xff]
    %v1185 = vld [vmem:[#allocation15 + $0xa0] sm:$0xff]
    %v1186 = vld [vmem:[#allocation15 + $0xa8] sm:$0xff]
    %v1187 = vld [vmem:[#allocation15 + $0xb0] sm:$0xff]
    %v1188 = vld [vmem:[#allocation15 + $0xb8] sm:$0xff]
    %v1189 = vld [vmem:[#allocation15 + $0xc0] sm:$0xff]
    %v1190 = vld [vmem:[#allocation15 + $0xc8] sm:$0xff]
    %v1191 = vld [vmem:[#allocation15 + $0xd0] sm:$0xff]
    %v1192 = vld [vmem:[#allocation15 + $0xd8] sm:$0xff]
    %v1193 = vld [vmem:[#allocation15 + $0xe0] sm:$0xff]
    %v1194 = vld [vmem:[#allocation15 + $0xe8] sm:$0xff]
    %v1195 = vld [vmem:[#allocation15 + $0xf0] sm:$0xff]
    %v1196 = vld [vmem:[#allocation15 + $0xf8] sm:$0xff]
    %v1197 = vld [vmem:[#allocation15 + $0x100] sm:$0xff]
    %v1198 = vld [vmem:[#allocation15 + $0x108] sm:$0xff]
    %v1199 = vld [vmem:[#allocation15 + $0x110] sm:$0xff]
    %v1200 = vld [vmem:[#allocation15 + $0x118] sm:$0xff]
    %v1201 = vld [vmem:[#allocation15 + $0x120] sm:$0xff]
    %v1202 = vld [vmem:[#allocation15 + $0x128] sm:$0xff]
    %v1203 = vld [vmem:[#allocation15 + $0x130] sm:$0xff]
    %v1204 = vld [vmem:[#allocation15 + $0x138] sm:$0xff]
    %v1205 = vld [vmem:[#allocation15 + $0x140] sm:$0xff]
    %v1206 = vld [vmem:[#allocation15 + $0x148] sm:$0xff]
    %v1207 = vld [vmem:[#allocation15 + $0x150] sm:$0xff]
    %v1208 = vld [vmem:[#allocation15 + $0x158] sm:$0xff]
    %v1209 = vld [vmem:[#allocation15 + $0x160] sm:$0xff]
    %v1210 = vld [vmem:[#allocation15 + $0x168] sm:$0xff]
    %v1211 = vld [vmem:[#allocation15 + $0x170] sm:$0xff]
    %v1212 = vld [vmem:[#allocation15 + $0x178] sm:$0xff]
    %v1213 = vld [vmem:[#allocation15 + $0x180] sm:$0xff]
    %v1214 = vld [vmem:[#allocation15 + $0x188] sm:$0xff]
    %v1215 = vld [vmem:[#allocation15 + $0x190] sm:$0xff]
    %v1216 = vld [vmem:[#allocation15 + $0x198] sm:$0xff]
    %v1217 = vld [vmem:[#allocation15 + $0x1a0] sm:$0xff]
    %v1218 = vld [vmem:[#allocation15 + $0x1a8] sm:$0xff]
    %v1219 = vld [vmem:[#allocation15 + $0x1b0] sm:$0xff]
    %v1220 = vld [vmem:[#allocation15 + $0x1b8] sm:$0xff]
    %v1221 = vld [vmem:[#allocation15 + $0x1c0] sm:$0xff]
    %v1222 = vld [vmem:[#allocation15 + $0x1c8] sm:$0xff]
    %v1223 = vld [vmem:[#allocation15 + $0x1d0] sm:$0xff]
    %v1224 = vld [vmem:[#allocation15 + $0x1d8] sm:$0xff]
    %v1225 = vld [vmem:[#allocation15 + $0x1e0] sm:$0xff]
    %v1226 = vld [vmem:[#allocation15 + $0x1e8] sm:$0xff]
    %v1227 = vld [vmem:[#allocation15 + $0x1f0] sm:$0xff]
    %v1228 = vld [vmem:[#allocation15 + $0x1f8] sm:$0xff]
    %v1229 = vld [vmem:[#allocation16] sm:$0xff]
    %v1231 = vlaneseq
    %v1232 = vshrl.u32 %v1231, 7
    %v1233 = vsub.s32 0, %v1232
    %v1234 = vrot.slane %v1229, %v1233
    %v1235 = vlaneseq
    %v1236 = vshrl.u32 %v1235, 7
    %v1237 = vsub.s32 1, %v1236
    %v1238 = vrot.slane %v1229, %v1237
    %v1239 = vlaneseq
    %v1240 = vshrl.u32 %v1239, 7
    %v1241 = vsub.s32 2, %v1240
    %v1242 = vrot.slane %v1229, %v1241
    %v1243 = vlaneseq
    %v1244 = vshrl.u32 %v1243, 7
    %v1245 = vsub.s32 3, %v1244
    %v1246 = vrot.slane %v1229, %v1245
    %v1247 = vlaneseq
    %v1248 = vshrl.u32 %v1247, 7
    %v1249 = vsub.s32 4, %v1248
    %v1250 = vrot.slane %v1229, %v1249
    %v1251 = vlaneseq
    %v1252 = vshrl.u32 %v1251, 7
    %v1253 = vsub.s32 5, %v1252
    %v1254 = vrot.slane %v1229, %v1253
    %v1255 = vlaneseq
    %v1256 = vshrl.u32 %v1255, 7
    %v1257 = vsub.s32 6, %v1256
    %v1258 = vrot.slane %v1229, %v1257
    %v1259 = vlaneseq
    %v1260 = vshrl.u32 %v1259, 7
    %v1261 = vsub.s32 7, %v1260
    %v1262 = vrot.slane %v1229, %v1261
    %v1335 = vunpack.c.l.b16 %v1165
    %v1336 = vunpack.c.h.b16 %v1165
    %v1337 = vunpack.c.l.b16 %v1166
    %v1338 = vunpack.c.h.b16 %v1166
    %v1339 = vunpack.c.l.b16 %v1167
    %v1340 = vunpack.c.h.b16 %v1167
    %v1341 = vunpack.c.l.b16 %v1168
    %v1342 = vunpack.c.h.b16 %v1168
    %v1343 = vunpack.c.l.b16 %v1169
    %v1344 = vunpack.c.h.b16 %v1169
    %v1345 = vunpack.c.l.b16 %v1170
    %v1346 = vunpack.c.h.b16 %v1170
    %v1347 = vunpack.c.l.b16 %v1171
    %v1348 = vunpack.c.h.b16 %v1171
    %v1349 = vunpack.c.l.b16 %v1172
    %v1350 = vunpack.c.h.b16 %v1172
    %v1351 = vunpack.c.l.b16 %v1173
    %v1352 = vunpack.c.h.b16 %v1173
    %v1353 = vunpack.c.l.b16 %v1174
    %v1354 = vunpack.c.h.b16 %v1174
    %v1355 = vunpack.c.l.b16 %v1175
    %v1356 = vunpack.c.h.b16 %v1175
    %v1357 = vunpack.c.l.b16 %v1176
    %v1358 = vunpack.c.h.b16 %v1176
    %v1359 = vunpack.c.l.b16 %v1177
    %v1360 = vunpack.c.h.b16 %v1177
    %v1361 = vunpack.c.l.b16 %v1178
    %v1362 = vunpack.c.h.b16 %v1178
    %v1363 = vunpack.c.l.b16 %v1179
    %v1364 = vunpack.c.h.b16 %v1179
    %v1365 = vunpack.c.l.b16 %v1180
    %v1366 = vunpack.c.h.b16 %v1180
    %v1367 = vunpack.c.l.b16 %v1181
    %v1368 = vunpack.c.h.b16 %v1181
    %v1369 = vunpack.c.l.b16 %v1182
    %v1370 = vunpack.c.h.b16 %v1182
    %v1371 = vunpack.c.l.b16 %v1183
    %v1372 = vunpack.c.h.b16 %v1183
    %v1373 = vunpack.c.l.b16 %v1184
    %v1374 = vunpack.c.h.b16 %v1184
    %v1375 = vunpack.c.l.b16 %v1185
    %v1376 = vunpack.c.h.b16 %v1185
    %v1377 = vunpack.c.l.b16 %v1186
    %v1378 = vunpack.c.h.b16 %v1186
    %v1379 = vunpack.c.l.b16 %v1187
    %v1380 = vunpack.c.h.b16 %v1187
    %v1381 = vunpack.c.l.b16 %v1188
    %v1382 = vunpack.c.h.b16 %v1188
    %v1383 = vunpack.c.l.b16 %v1189
    %v1384 = vunpack.c.h.b16 %v1189
    %v1385 = vunpack.c.l.b16 %v1190
    %v1386 = vunpack.c.h.b16 %v1190
    %v1387 = vunpack.c.l.b16 %v1191
    %v1388 = vunpack.c.h.b16 %v1191
    %v1389 = vunpack.c.l.b16 %v1192
    %v1390 = vunpack.c.h.b16 %v1192
    %v1391 = vunpack.c.l.b16 %v1193
    %v1392 = vunpack.c.h.b16 %v1193
    %v1393 = vunpack.c.l.b16 %v1194
    %v1394 = vunpack.c.h.b16 %v1194
    %v1395 = vunpack.c.l.b16 %v1195
    %v1396 = vunpack.c.h.b16 %v1195
    %v1397 = vunpack.c.l.b16 %v1196
    %v1398 = vunpack.c.h.b16 %v1196
    %v1399 = vunpack.c.l.b16 %v1197
    %v1400 = vunpack.c.h.b16 %v1197
    %v1401 = vunpack.c.l.b16 %v1198
    %v1402 = vunpack.c.h.b16 %v1198
    %v1403 = vunpack.c.l.b16 %v1199
    %v1404 = vunpack.c.h.b16 %v1199
    %v1405 = vunpack.c.l.b16 %v1200
    %v1406 = vunpack.c.h.b16 %v1200
    %v1407 = vunpack.c.l.b16 %v1201
    %v1408 = vunpack.c.h.b16 %v1201
    %v1409 = vunpack.c.l.b16 %v1202
    %v1410 = vunpack.c.h.b16 %v1202
    %v1411 = vunpack.c.l.b16 %v1203
    %v1412 = vunpack.c.h.b16 %v1203
    %v1413 = vunpack.c.l.b16 %v1204
    %v1414 = vunpack.c.h.b16 %v1204
    %v1415 = vunpack.c.l.b16 %v1205
    %v1416 = vunpack.c.h.b16 %v1205
    %v1417 = vunpack.c.l.b16 %v1206
    %v1418 = vunpack.c.h.b16 %v1206
    %v1419 = vunpack.c.l.b16 %v1207
    %v1420 = vunpack.c.h.b16 %v1207
    %v1421 = vunpack.c.l.b16 %v1208
    %v1422 = vunpack.c.h.b16 %v1208
    %v1423 = vunpack.c.l.b16 %v1209
    %v1424 = vunpack.c.h.b16 %v1209
    %v1425 = vunpack.c.l.b16 %v1210
    %v1426 = vunpack.c.h.b16 %v1210
    %v1427 = vunpack.c.l.b16 %v1211
    %v1428 = vunpack.c.h.b16 %v1211
    %v1429 = vunpack.c.l.b16 %v1212
    %v1430 = vunpack.c.h.b16 %v1212
    %v1431 = vunpack.c.l.b16 %v1213
    %v1432 = vunpack.c.h.b16 %v1213
    %v1433 = vunpack.c.l.b16 %v1214
    %v1434 = vunpack.c.h.b16 %v1214
    %v1435 = vunpack.c.l.b16 %v1215
    %v1436 = vunpack.c.h.b16 %v1215
    %v1437 = vunpack.c.l.b16 %v1216
    %v1438 = vunpack.c.h.b16 %v1216
    %v1439 = vunpack.c.l.b16 %v1217
    %v1440 = vunpack.c.h.b16 %v1217
    %v1441 = vunpack.c.l.b16 %v1218
    %v1442 = vunpack.c.h.b16 %v1218
    %v1443 = vunpack.c.l.b16 %v1219
    %v1444 = vunpack.c.h.b16 %v1219
    %v1445 = vunpack.c.l.b16 %v1220
    %v1446 = vunpack.c.h.b16 %v1220
    %v1447 = vunpack.c.l.b16 %v1221
    %v1448 = vunpack.c.h.b16 %v1221
    %v1449 = vunpack.c.l.b16 %v1222
    %v1450 = vunpack.c.h.b16 %v1222
    %v1451 = vunpack.c.l.b16 %v1223
    %v1452 = vunpack.c.h.b16 %v1223
    %v1453 = vunpack.c.l.b16 %v1224
    %v1454 = vunpack.c.h.b16 %v1224
    %v1455 = vunpack.c.l.b16 %v1225
    %v1456 = vunpack.c.h.b16 %v1225
    %v1457 = vunpack.c.l.b16 %v1226
    %v1458 = vunpack.c.h.b16 %v1226
    %v1459 = vunpack.c.l.b16 %v1227
    %v1460 = vunpack.c.h.b16 %v1227
    %v1461 = vunpack.c.l.b16 %v1228
    %v1462 = vunpack.c.h.b16 %v1228
    %v1463 = vpack.c.b16 %v1343, %v1335
    %v1464 = vpack.c.b16 %v1344, %v1336
    %v1465 = vpack.c.b16 %v1345, %v1337
    %v1466 = vpack.c.b16 %v1346, %v1338
    %v1467 = vpack.c.b16 %v1347, %v1339
    %v1468 = vpack.c.b16 %v1348, %v1340
    %v1469 = vpack.c.b16 %v1349, %v1341
    %v1470 = vpack.c.b16 %v1350, %v1342
    %v1471 = vpack.c.b16 %v1359, %v1351
    %v1472 = vpack.c.b16 %v1360, %v1352
    %v1473 = vpack.c.b16 %v1361, %v1353
    %v1474 = vpack.c.b16 %v1362, %v1354
    %v1475 = vpack.c.b16 %v1363, %v1355
    %v1476 = vpack.c.b16 %v1364, %v1356
    %v1477 = vpack.c.b16 %v1365, %v1357
    %v1478 = vpack.c.b16 %v1366, %v1358
    %v1479 = vpack.c.b16 %v1375, %v1367
    %v1480 = vpack.c.b16 %v1376, %v1368
    %v1481 = vpack.c.b16 %v1377, %v1369
    %v1482 = vpack.c.b16 %v1378, %v1370
    %v1483 = vpack.c.b16 %v1379, %v1371
    %v1484 = vpack.c.b16 %v1380, %v1372
    %v1485 = vpack.c.b16 %v1381, %v1373
    %v1486 = vpack.c.b16 %v1382, %v1374
    %v1487 = vpack.c.b16 %v1391, %v1383
    %v1488 = vpack.c.b16 %v1392, %v1384
    %v1489 = vpack.c.b16 %v1393, %v1385
    %v1490 = vpack.c.b16 %v1394, %v1386
    %v1491 = vpack.c.b16 %v1395, %v1387
    %v1492 = vpack.c.b16 %v1396, %v1388
    %v1493 = vpack.c.b16 %v1397, %v1389
    %v1494 = vpack.c.b16 %v1398, %v1390
    %v1495 = vpack.c.b16 %v1407, %v1399
    %v1496 = vpack.c.b16 %v1408, %v1400
    %v1497 = vpack.c.b16 %v1409, %v1401
    %v1498 = vpack.c.b16 %v1410, %v1402
    %v1499 = vpack.c.b16 %v1411, %v1403
    %v1500 = vpack.c.b16 %v1412, %v1404
    %v1501 = vpack.c.b16 %v1413, %v1405
    %v1502 = vpack.c.b16 %v1414, %v1406
    %v1503 = vpack.c.b16 %v1423, %v1415
    %v1504 = vpack.c.b16 %v1424, %v1416
    %v1505 = vpack.c.b16 %v1425, %v1417
    %v1506 = vpack.c.b16 %v1426, %v1418
    %v1507 = vpack.c.b16 %v1427, %v1419
    %v1508 = vpack.c.b16 %v1428, %v1420
    %v1509 = vpack.c.b16 %v1429, %v1421
    %v1510 = vpack.c.b16 %v1430, %v1422
    %v1511 = vpack.c.b16 %v1439, %v1431
    %v1512 = vpack.c.b16 %v1440, %v1432
    %v1513 = vpack.c.b16 %v1441, %v1433
    %v1514 = vpack.c.b16 %v1442, %v1434
    %v1515 = vpack.c.b16 %v1443, %v1435
    %v1516 = vpack.c.b16 %v1444, %v1436
    %v1517 = vpack.c.b16 %v1445, %v1437
    %v1518 = vpack.c.b16 %v1446, %v1438
    %v1519 = vpack.c.b16 %v1455, %v1447
    %v1520 = vpack.c.b16 %v1456, %v1448
    %v1521 = vpack.c.b16 %v1457, %v1449
    %v1522 = vpack.c.b16 %v1458, %v1450
    %v1523 = vpack.c.b16 %v1459, %v1451
    %v1524 = vpack.c.b16 %v1460, %v1452
    %v1525 = vpack.c.b16 %v1461, %v1453
    %v1526 = vpack.c.b16 %v1462, %v1454
    %1591 = vmatprep.subr.bf16.mxu0 %v1464
    %1592 = vmatpush1.bf16.msra.mxu0 %v1463
    %1593 = vmatprep.subr.bf16.mxu0 %v1472
    %1594 = vmatpush1.bf16.msra.mxu0 %v1471
    %1595 = vmatprep.subr.bf16.mxu0 %v1480
    %1596 = vmatpush1.bf16.msra.mxu0 %v1479
    %1597 = vmatprep.subr.bf16.mxu0 %v1488
    %1598 = vmatpush1.bf16.msra.mxu0 %v1487
    %1599 = vmatprep.subr.bf16.mxu0 %v1496
    %1600 = vmatpush1.bf16.msra.mxu0 %v1495
    %1601 = vmatprep.subr.bf16.mxu0 %v1504
    %1602 = vmatpush1.bf16.msra.mxu0 %v1503
    %1603 = vmatprep.subr.bf16.mxu0 %v1512
    %1604 = vmatpush1.bf16.msra.mxu0 %v1511
    %1605 = vmatprep.subr.bf16.mxu0 %v1520
    %1606 = vmatpush1.bf16.msra.mxu0 %v1519
    %1607 = vmatprep.subr.bf16.mxu0 0
    %1608 = vmatpush1.bf16.msra.mxu0 0
    %1609 = vmatprep.subr.bf16.mxu0 0
    %1610 = vmatpush1.bf16.msra.mxu0 0
    %1611 = vmatprep.subr.bf16.mxu0 0
    %1612 = vmatpush1.bf16.msra.mxu0 0
    %1613 = vmatprep.subr.bf16.mxu0 0
    %1614 = vmatpush1.bf16.msra.mxu0 0
    %1615 = vmatprep.subr.bf16.mxu0 0
    %1616 = vmatpush1.bf16.msra.mxu0 0
    %1617 = vmatprep.subr.bf16.mxu0 0
    %1618 = vmatpush1.bf16.msra.mxu0 0
    %1619 = vmatprep.subr.bf16.mxu0 0
    %1620 = vmatpush1.bf16.msra.mxu0 0
    %1621 = vmatprep.subr.bf16.mxu0 0
    %1622 = vmatpush1.bf16.msra.mxu0 0
    %1623 = vmatprep.mubr.bf16.mxu0 0
    %1624 = vmatmul.mubr.bf16.gmra.mrb[0].mxu0 %v1157
    %v1625 = vpop.f32.mrb[0].mxu0
    %v1626 = vadd.f32 %v1234, %v1625
    %v1627 = vpop.f32.mrb[0].mxu0
    %v1628 = vadd.f32 %v1238, %v1627
    %v1629 = vpop.f32.mrb[0].mxu0
    %v1630 = vadd.f32 %v1234, %v1629
    %v1631 = vpop.f32.mrb[0].mxu0
    %v1632 = vadd.f32 %v1238, %v1631
    %1633 = vmatprep.mubr.bf16.mxu0 0
    %1634 = vmatmul.mubr.bf16.gmra.mrb[0].mxu0 %v1158
    %v1635 = vpop.f32.mrb[0].mxu0
    %v1636 = vadd.f32 %v1234, %v1635
    %v1637 = vpop.f32.mrb[0].mxu0
    %v1638 = vadd.f32 %v1238, %v1637
    %v1639 = vpop.f32.mrb[0].mxu0
    %v1640 = vadd.f32 %v1234, %v1639
    %v1641 = vpop.f32.mrb[0].mxu0
    %v1642 = vadd.f32 %v1238, %v1641
    %1643 = vmatprep.mubr.bf16.mxu0 0
    %1644 = vmatmul.mubr.bf16.gmra.mrb[0].mxu0 %v1159
    %v1645 = vpop.f32.mrb[0].mxu0
    %v1646 = vadd.f32 %v1234, %v1645
    %v1647 = vpop.f32.mrb[0].mxu0
    %v1648 = vadd.f32 %v1238, %v1647
    %v1649 = vpop.f32.mrb[0].mxu0
    %v1650 = vadd.f32 %v1234, %v1649
    %v1651 = vpop.f32.mrb[0].mxu0
    %v1652 = vadd.f32 %v1238, %v1651
    %1653 = vmatprep.mubr.bf16.mxu0 0
    %1654 = vmatmul.mubr.bf16.gmra.mrb[0].mxu0 %v1160
    %v1655 = vpop.f32.mrb[0].mxu0
    %v1656 = vadd.f32 %v1234, %v1655
    %v1657 = vpop.f32.mrb[0].mxu0
    %v1658 = vadd.f32 %v1238, %v1657
    %v1659 = vpop.f32.mrb[0].mxu0
    %v1660 = vadd.f32 %v1234, %v1659
    %v1661 = vpop.f32.mrb[0].mxu0
    %v1662 = vadd.f32 %v1238, %v1661
    %1663 = vmatprep.mubr.bf16.mxu0 0
    %1664 = vmatmul.mubr.bf16.gmra.mrb[0].mxu0 %v1161
    %v1665 = vpop.f32.mrb[0].mxu0
    %v1666 = vadd.f32 %v1234, %v1665
    %v1667 = vpop.f32.mrb[0].mxu0
    %v1668 = vadd.f32 %v1238, %v1667
    %v1669 = vpop.f32.mrb[0].mxu0
    %v1670 = vadd.f32 %v1234, %v1669
    %v1671 = vpop.f32.mrb[0].mxu0
    %v1672 = vadd.f32 %v1238, %v1671
    %1673 = vmatprep.mubr.bf16.mxu0 0
    %1674 = vmatmul.mubr.bf16.gmra.mrb[0].mxu0 %v1162
    %v1675 = vpop.f32.mrb[0].mxu0
    %v1676 = vadd.f32 %v1234, %v1675
    %v1677 = vpop.f32.mrb[0].mxu0
    %v1678 = vadd.f32 %v1238, %v1677
    %v1679 = vpop.f32.mrb[0].mxu0
    %v1680 = vadd.f32 %v1234, %v1679
    %v1681 = vpop.f32.mrb[0].mxu0
    %v1682 = vadd.f32 %v1238, %v1681
    %1683 = vmatprep.mubr.bf16.mxu0 0
    %1684 = vmatmul.mubr.bf16.gmra.mrb[0].mxu0 %v1163
    %v1685 = vpop.f32.mrb[0].mxu0
    %v1686 = vadd.f32 %v1234, %v1685
    %v1687 = vpop.f32.mrb[0].mxu0
    %v1688 = vadd.f32 %v1238, %v1687
    %v1689 = vpop.f32.mrb[0].mxu0
    %v1690 = vadd.f32 %v1234, %v1689
    %v1691 = vpop.f32.mrb[0].mxu0
    %v1692 = vadd.f32 %v1238, %v1691
    %1693 = vmatprep.mubr.bf16.mxu0 0
    %1694 = vmatmul.mubr.bf16.gmra.mrb[0].mxu0 %v1164
    %v1695 = vpop.f32.mrb[0].mxu0
    %v1696 = vadd.f32 %v1234, %v1695
    %v1697 = vpop.f32.mrb[0].mxu0
    %v1698 = vadd.f32 %v1238, %v1697
    %v1699 = vpop.f32.mrb[0].mxu0
    %v1700 = vadd.f32 %v1234, %v1699
    %v1701 = vpop.f32.mrb[0].mxu0
    %v1702 = vadd.f32 %v1238, %v1701
    %1703 = vdwg.mxu0
    %1704 = vmatprep.subr.bf16.mxu0 %v1466
    %1705 = vmatpush1.bf16.msra.mxu0 %v1465
    %1706 = vmatprep.subr.bf16.mxu0 %v1474
    %1707 = vmatpush1.bf16.msra.mxu0 %v1473
    %1708 = vmatprep.subr.bf16.mxu0 %v1482
    %1709 = vmatpush1.bf16.msra.mxu0 %v1481
    %1710 = vmatprep.subr.bf16.mxu0 %v1490
    %1711 = vmatpush1.bf16.msra.mxu0 %v1489
    %1712 = vmatprep.subr.bf16.mxu0 %v1498
    %1713 = vmatpush1.bf16.msra.mxu0 %v1497
    %1714 = vmatprep.subr.bf16.mxu0 %v1506
    %1715 = vmatpush1.bf16.msra.mxu0 %v1505
    %1716 = vmatprep.subr.bf16.mxu0 %v1514
    %1717 = vmatpush1.bf16.msra.mxu0 %v1513
    %1718 = vmatprep.subr.bf16.mxu0 %v1522
    %1719 = vmatpush1.bf16.msra.mxu0 %v1521
    %1720 = vmatprep.subr.bf16.mxu0 0
    %1721 = vmatpush1.bf16.msra.mxu0 0
    %1722 = vmatprep.subr.bf16.mxu0 0
    %1723 = vmatpush1.bf16.msra.mxu0 0
    %1724 = vmatprep.subr.bf16.mxu0 0
    %1725 = vmatpush1.bf16.msra.mxu0 0
    %1726 = vmatprep.subr.bf16.mxu0 0
    %1727 = vmatpush1.bf16.msra.mxu0 0
    %1728 = vmatprep.subr.bf16.mxu0 0
    %1729 = vmatpush1.bf16.msra.mxu0 0
    %1730 = vmatprep.subr.bf16.mxu0 0
    %1731 = vmatpush1.bf16.msra.mxu0 0
    %1732 = vmatprep.subr.bf16.mxu0 0
    %1733 = vmatpush1.bf16.msra.mxu0 0
    %1734 = vmatprep.subr.bf16.mxu0 0
    %1735 = vmatpush1.bf16.msra.mxu0 0
    %1736 = vmatprep.mubr.bf16.mxu0 0
    %1737 = vmatmul.mubr.bf16.gmra.mrb[0].mxu0 %v1157
    %v1738 = vpop.f32.mrb[0].mxu0
    %v1739 = vadd.f32 %v1242, %v1738
    %v1740 = vpop.f32.mrb[0].mxu0
    %v1741 = vadd.f32 %v1246, %v1740
    %v1742 = vpop.f32.mrb[0].mxu0
    %v1743 = vadd.f32 %v1242, %v1742
    %v1744 = vpop.f32.mrb[0].mxu0
    %v1745 = vadd.f32 %v1246, %v1744
    %1746 = vmatprep.mubr.bf16.mxu0 0
    %1747 = vmatmul.mubr.bf16.gmra.mrb[0].mxu0 %v1158
    %v1748 = vpop.f32.mrb[0].mxu0
    %v1749 = vadd.f32 %v1242, %v1748
    %v1750 = vpop.f32.mrb[0].mxu0
    %v1751 = vadd.f32 %v1246, %v1750
    %v1752 = vpop.f32.mrb[0].mxu0
    %v1753 = vadd.f32 %v1242, %v1752
    %v1754 = vpop.f32.mrb[0].mxu0
    %v1755 = vadd.f32 %v1246, %v1754
    %1756 = vmatprep.mubr.bf16.mxu0 0
    %1757 = vmatmul.mubr.bf16.gmra.mrb[0].mxu0 %v1159
    %v1758 = vpop.f32.mrb[0].mxu0
    %v1759 = vadd.f32 %v1242, %v1758
    %v1760 = vpop.f32.mrb[0].mxu0
    %v1761 = vadd.f32 %v1246, %v1760
    %v1762 = vpop.f32.mrb[0].mxu0
    %v1763 = vadd.f32 %v1242, %v1762
    %v1764 = vpop.f32.mrb[0].mxu0
    %v1765 = vadd.f32 %v1246, %v1764
    %1766 = vmatprep.mubr.bf16.mxu0 0
    %1767 = vmatmul.mubr.bf16.gmra.mrb[0].mxu0 %v1160
    %v1768 = vpop.f32.mrb[0].mxu0
    %v1769 = vadd.f32 %v1242, %v1768
    %v1770 = vpop.f32.mrb[0].mxu0
    %v1771 = vadd.f32 %v1246, %v1770
    %v1772 = vpop.f32.mrb[0].mxu0
    %v1773 = vadd.f32 %v1242, %v1772
    %v1774 = vpop.f32.mrb[0].mxu0
    %v1775 = vadd.f32 %v1246, %v1774
    %1776 = vmatprep.mubr.bf16.mxu0 0
    %1777 = vmatmul.mubr.bf16.gmra.mrb[0].mxu0 %v1161
    %v1778 = vpop.f32.mrb[0].mxu0
    %v1779 = vadd.f32 %v1242, %v1778
    %v1780 = vpop.f32.mrb[0].mxu0
    %v1781 = vadd.f32 %v1246, %v1780
    %v1782 = vpop.f32.mrb[0].mxu0
    %v1783 = vadd.f32 %v1242, %v1782
    %v1784 = vpop.f32.mrb[0].mxu0
    %v1785 = vadd.f32 %v1246, %v1784
    %1786 = vmatprep.mubr.bf16.mxu0 0
    %1787 = vmatmul.mubr.bf16.gmra.mrb[0].mxu0 %v1162
    %v1788 = vpop.f32.mrb[0].mxu0
    %v1789 = vadd.f32 %v1242, %v1788
    %v1790 = vpop.f32.mrb[0].mxu0
    %v1791 = vadd.f32 %v1246, %v1790
    %v1792 = vpop.f32.mrb[0].mxu0
    %v1793 = vadd.f32 %v1242, %v1792
    %v1794 = vpop.f32.mrb[0].mxu0
    %v1795 = vadd.f32 %v1246, %v1794
    %1796 = vmatprep.mubr.bf16.mxu0 0
    %1797 = vmatmul.mubr.bf16.gmra.mrb[0].mxu0 %v1163
    %v1798 = vpop.f32.mrb[0].mxu0
    %v1799 = vadd.f32 %v1242, %v1798
    %v1800 = vpop.f32.mrb[0].mxu0
    %v1801 = vadd.f32 %v1246, %v1800
    %v1802 = vpop.f32.mrb[0].mxu0
    %v1803 = vadd.f32 %v1242, %v1802
    %v1804 = vpop.f32.mrb[0].mxu0
    %v1805 = vadd.f32 %v1246, %v1804
    %1806 = vmatprep.mubr.bf16.mxu0 0
    %1807 = vmatmul.mubr.bf16.gmra.mrb[0].mxu0 %v1164
    %v1808 = vpop.f32.mrb[0].mxu0
    %v1809 = vadd.f32 %v1242, %v1808
    %v1810 = vpop.f32.mrb[0].mxu0
    %v1811 = vadd.f32 %v1246, %v1810
    %v1812 = vpop.f32.mrb[0].mxu0
    %v1813 = vadd.f32 %v1242, %v1812
    %v1814 = vpop.f32.mrb[0].mxu0
    %v1815 = vadd.f32 %v1246, %v1814
    %1816 = vdwg.mxu0
    %1817 = vmatprep.subr.bf16.mxu0 %v1468
    %1818 = vmatpush1.bf16.msra.mxu0 %v1467
    %1819 = vmatprep.subr.bf16.mxu0 %v1476
    %1820 = vmatpush1.bf16.msra.mxu0 %v1475
    %1821 = vmatprep.subr.bf16.mxu0 %v1484
    %1822 = vmatpush1.bf16.msra.mxu0 %v1483
    %1823 = vmatprep.subr.bf16.mxu0 %v1492
    %1824 = vmatpush1.bf16.msra.mxu0 %v1491
    %1825 = vmatprep.subr.bf16.mxu0 %v1500
    %1826 = vmatpush1.bf16.msra.mxu0 %v1499
    %1827 = vmatprep.subr.bf16.mxu0 %v1508
    %1828 = vmatpush1.bf16.msra.mxu0 %v1507
    %1829 = vmatprep.subr.bf16.mxu0 %v1516
    %1830 = vmatpush1.bf16.msra.mxu0 %v1515
    %1831 = vmatprep.subr.bf16.mxu0 %v1524
    %1832 = vmatpush1.bf16.msra.mxu0 %v1523
    %1833 = vmatprep.subr.bf16.mxu0 0
    %1834 = vmatpush1.bf16.msra.mxu0 0
    %1835 = vmatprep.subr.bf16.mxu0 0
    %1836 = vmatpush1.bf16.msra.mxu0 0
    %1837 = vmatprep.subr.bf16.mxu0 0
    %1838 = vmatpush1.bf16.msra.mxu0 0
    %1839 = vmatprep.subr.bf16.mxu0 0
    %1840 = vmatpush1.bf16.msra.mxu0 0
    %1841 = vmatprep.subr.bf16.mxu0 0
    %1842 = vmatpush1.bf16.msra.mxu0 0
    %1843 = vmatprep.subr.bf16.mxu0 0
    %1844 = vmatpush1.bf16.msra.mxu0 0
    %1845 = vmatprep.subr.bf16.mxu0 0
    %1846 = vmatpush1.bf16.msra.mxu0 0
    %1847 = vmatprep.subr.bf16.mxu0 0
    %1848 = vmatpush1.bf16.msra.mxu0 0
    %1849 = vmatprep.mubr.bf16.mxu0 0
    %1850 = vmatmul.mubr.bf16.gmra.mrb[0].mxu0 %v1157
    %v1851 = vpop.f32.mrb[0].mxu0
    %v1852 = vadd.f32 %v1250, %v1851
    %v1853 = vpop.f32.mrb[0].mxu0
    %v1854 = vadd.f32 %v1254, %v1853
    %v1855 = vpop.f32.mrb[0].mxu0
    %v1856 = vadd.f32 %v1250, %v1855
    %v1857 = vpop.f32.mrb[0].mxu0
    %v1858 = vadd.f32 %v1254, %v1857
    %1859 = vmatprep.mubr.bf16.mxu0 0
    %1860 = vmatmul.mubr.bf16.gmra.mrb[0].mxu0 %v1158
    %v1861 = vpop.f32.mrb[0].mxu0
    %v1862 = vadd.f32 %v1250, %v1861
    %v1863 = vpop.f32.mrb[0].mxu0
    %v1864 = vadd.f32 %v1254, %v1863
    %v1865 = vpop.f32.mrb[0].mxu0
    %v1866 = vadd.f32 %v1250, %v1865
    %v1867 = vpop.f32.mrb[0].mxu0
    %v1868 = vadd.f32 %v1254, %v1867
    %1869 = vmatprep.mubr.bf16.mxu0 0
    %1870 = vmatmul.mubr.bf16.gmra.mrb[0].mxu0 %v1159
    %v1871 = vpop.f32.mrb[0].mxu0
    %v1872 = vadd.f32 %v1250, %v1871
    %v1873 = vpop.f32.mrb[0].mxu0
    %v1874 = vadd.f32 %v1254, %v1873
    %v1875 = vpop.f32.mrb[0].mxu0
    %v1876 = vadd.f32 %v1250, %v1875
    %v1877 = vpop.f32.mrb[0].mxu0
    %v1878 = vadd.f32 %v1254, %v1877
    %1879 = vmatprep.mubr.bf16.mxu0 0
    %1880 = vmatmul.mubr.bf16.gmra.mrb[0].mxu0 %v1160
    %v1881 = vpop.f32.mrb[0].mxu0
    %v1882 = vadd.f32 %v1250, %v1881
    %v1883 = vpop.f32.mrb[0].mxu0
    %v1884 = vadd.f32 %v1254, %v1883
    %v1885 = vpop.f32.mrb[0].mxu0
    %v1886 = vadd.f32 %v1250, %v1885
    %v1887 = vpop.f32.mrb[0].mxu0
    %v1888 = vadd.f32 %v1254, %v1887
    %1889 = vmatprep.mubr.bf16.mxu0 0
    %1890 = vmatmul.mubr.bf16.gmra.mrb[0].mxu0 %v1161
    %v1891 = vpop.f32.mrb[0].mxu0
    %v1892 = vadd.f32 %v1250, %v1891
    %v1893 = vpop.f32.mrb[0].mxu0
    %v1894 = vadd.f32 %v1254, %v1893
    %v1895 = vpop.f32.mrb[0].mxu0
    %v1896 = vadd.f32 %v1250, %v1895
    %v1897 = vpop.f32.mrb[0].mxu0
    %v1898 = vadd.f32 %v1254, %v1897
    %1899 = vmatprep.mubr.bf16.mxu0 0
    %1900 = vmatmul.mubr.bf16.gmra.mrb[0].mxu0 %v1162
    %v1901 = vpop.f32.mrb[0].mxu0
    %v1902 = vadd.f32 %v1250, %v1901
    %v1903 = vpop.f32.mrb[0].mxu0
    %v1904 = vadd.f32 %v1254, %v1903
    %v1905 = vpop.f32.mrb[0].mxu0
    %v1906 = vadd.f32 %v1250, %v1905
    %v1907 = vpop.f32.mrb[0].mxu0
    %v1908 = vadd.f32 %v1254, %v1907
    %1909 = vmatprep.mubr.bf16.mxu0 0
    %1910 = vmatmul.mubr.bf16.gmra.mrb[0].mxu0 %v1163
    %v1911 = vpop.f32.mrb[0].mxu0
    %v1912 = vadd.f32 %v1250, %v1911
    %v1913 = vpop.f32.mrb[0].mxu0
    %v1914 = vadd.f32 %v1254, %v1913
    %v1915 = vpop.f32.mrb[0].mxu0
    %v1916 = vadd.f32 %v1250, %v1915
    %v1917 = vpop.f32.mrb[0].mxu0
    %v1918 = vadd.f32 %v1254, %v1917
    %1919 = vmatprep.mubr.bf16.mxu0 0
    %1920 = vmatmul.mubr.bf16.gmra.mrb[0].mxu0 %v1164
    %v1921 = vpop.f32.mrb[0].mxu0
    %v1922 = vadd.f32 %v1250, %v1921
    %v1923 = vpop.f32.mrb[0].mxu0
    %v1924 = vadd.f32 %v1254, %v1923
    %v1925 = vpop.f32.mrb[0].mxu0
    %v1926 = vadd.f32 %v1250, %v1925
    %v1927 = vpop.f32.mrb[0].mxu0
    %v1928 = vadd.f32 %v1254, %v1927
    %1929 = vdwg.mxu0
    %1930 = vmatprep.subr.bf16.mxu0 %v1470
    %1931 = vmatpush1.bf16.msra.mxu0 %v1469
    %1932 = vmatprep.subr.bf16.mxu0 %v1478
    %1933 = vmatpush1.bf16.msra.mxu0 %v1477
    %1934 = vmatprep.subr.bf16.mxu0 %v1486
    %1935 = vmatpush1.bf16.msra.mxu0 %v1485
    %1936 = vmatprep.subr.bf16.mxu0 %v1494
    %1937 = vmatpush1.bf16.msra.mxu0 %v1493
    %1938 = vmatprep.subr.bf16.mxu0 %v1502
    %1939 = vmatpush1.bf16.msra.mxu0 %v1501
    %1940 = vmatprep.subr.bf16.mxu0 %v1510
    %1941 = vmatpush1.bf16.msra.mxu0 %v1509
    %1942 = vmatprep.subr.bf16.mxu0 %v1518
    %1943 = vmatpush1.bf16.msra.mxu0 %v1517
    %1944 = vmatprep.subr.bf16.mxu0 %v1526
    %1945 = vmatpush1.bf16.msra.mxu0 %v1525
    %1946 = vmatprep.subr.bf16.mxu0 0
    %1947 = vmatpush1.bf16.msra.mxu0 0
    %1948 = vmatprep.subr.bf16.mxu0 0
    %1949 = vmatpush1.bf16.msra.mxu0 0
    %1950 = vmatprep.subr.bf16.mxu0 0
    %1951 = vmatpush1.bf16.msra.mxu0 0
    %1952 = vmatprep.subr.bf16.mxu0 0
    %1953 = vmatpush1.bf16.msra.mxu0 0
    %1954 = vmatprep.subr.bf16.mxu0 0
    %1955 = vmatpush1.bf16.msra.mxu0 0
    %1956 = vmatprep.subr.bf16.mxu0 0
    %1957 = vmatpush1.bf16.msra.mxu0 0
    %1958 = vmatprep.subr.bf16.mxu0 0
    %1959 = vmatpush1.bf16.msra.mxu0 0
    %1960 = vmatprep.subr.bf16.mxu0 0
    %1961 = vmatpush1.bf16.msra.mxu0 0
    %1962 = vmatprep.mubr.bf16.mxu0 0
    %1963 = vmatmul.mubr.bf16.gmra.mrb[0].mxu0 %v1157
    %v1964 = vpop.f32.mrb[0].mxu0
    %v1965 = vadd.f32 %v1258, %v1964
    %v1966 = vpop.f32.mrb[0].mxu0
    %v1967 = vadd.f32 %v1262, %v1966
    %v1968 = vpop.f32.mrb[0].mxu0
    %v1969 = vadd.f32 %v1258, %v1968
    %v1970 = vpop.f32.mrb[0].mxu0
    %v1971 = vadd.f32 %v1262, %v1970
    %1972 = vmatprep.mubr.bf16.mxu0 0
    %1973 = vmatmul.mubr.bf16.gmra.mrb[0].mxu0 %v1158
    %v1974 = vpop.f32.mrb[0].mxu0
    %v1975 = vadd.f32 %v1258, %v1974
    %v1976 = vpop.f32.mrb[0].mxu0
    %v1977 = vadd.f32 %v1262, %v1976
    %v1978 = vpop.f32.mrb[0].mxu0
    %v1979 = vadd.f32 %v1258, %v1978
    %v1980 = vpop.f32.mrb[0].mxu0
    %v1981 = vadd.f32 %v1262, %v1980
    %1982 = vmatprep.mubr.bf16.mxu0 0
    %1983 = vmatmul.mubr.bf16.gmra.mrb[0].mxu0 %v1159
    %v1984 = vpop.f32.mrb[0].mxu0
    %v1985 = vadd.f32 %v1258, %v1984
    %v1986 = vpop.f32.mrb[0].mxu0
    %v1987 = vadd.f32 %v1262, %v1986
    %v1988 = vpop.f32.mrb[0].mxu0
    %v1989 = vadd.f32 %v1258, %v1988
    %v1990 = vpop.f32.mrb[0].mxu0
    %v1991 = vadd.f32 %v1262, %v1990
    %1992 = vmatprep.mubr.bf16.mxu0 0
    %1993 = vmatmul.mubr.bf16.gmra.mrb[0].mxu0 %v1160
    %v1994 = vpop.f32.mrb[0].mxu0
    %v1995 = vadd.f32 %v1258, %v1994
    %v1996 = vpop.f32.mrb[0].mxu0
    %v1997 = vadd.f32 %v1262, %v1996
    %v1998 = vpop.f32.mrb[0].mxu0
    %v1999 = vadd.f32 %v1258, %v1998
    %v2000 = vpop.f32.mrb[0].mxu0
    %v2001 = vadd.f32 %v1262, %v2000
    %2002 = vmatprep.mubr.bf16.mxu0 0
    %2003 = vmatmul.mubr.bf16.gmra.mrb[0].mxu0 %v1161
    %v2004 = vpop.f32.mrb[0].mxu0
    %v2005 = vadd.f32 %v1258, %v2004
    %v2006 = vpop.f32.mrb[0].mxu0
    %v2007 = vadd.f32 %v1262, %v2006
    %v2008 = vpop.f32.mrb[0].mxu0
    %v2009 = vadd.f32 %v1258, %v2008
    %v2010 = vpop.f32.mrb[0].mxu0
    %v2011 = vadd.f32 %v1262, %v2010
    %2012 = vmatprep.mubr.bf16.mxu0 0
    %2013 = vmatmul.mubr.bf16.gmra.mrb[0].mxu0 %v1162
    %v2014 = vpop.f32.mrb[0].mxu0
    %v2015 = vadd.f32 %v1258, %v2014
    %v2016 = vpop.f32.mrb[0].mxu0
    %v2017 = vadd.f32 %v1262, %v2016
    %v2018 = vpop.f32.mrb[0].mxu0
    %v2019 = vadd.f32 %v1258, %v2018
    %v2020 = vpop.f32.mrb[0].mxu0
    %v2021 = vadd.f32 %v1262, %v2020
    %2022 = vmatprep.mubr.bf16.mxu0 0
    %2023 = vmatmul.mubr.bf16.gmra.mrb[0].mxu0 %v1163
    %v2024 = vpop.f32.mrb[0].mxu0
    %v2025 = vadd.f32 %v1258, %v2024
    %v2026 = vpop.f32.mrb[0].mxu0
    %v2027 = vadd.f32 %v1262, %v2026
    %v2028 = vpop.f32.mrb[0].mxu0
    %v2029 = vadd.f32 %v1258, %v2028
    %v2030 = vpop.f32.mrb[0].mxu0
    %v2031 = vadd.f32 %v1262, %v2030
    %2032 = vmatprep.mubr.bf16.mxu0 0
    %2033 = vmatmul.mubr.bf16.gmra.mrb[0].mxu0 %v1164
    %v2034 = vpop.f32.mrb[0].mxu0
    %v2035 = vadd.f32 %v1258, %v2034
    %v2036 = vpop.f32.mrb[0].mxu0
    %v2037 = vadd.f32 %v1262, %v2036
    %v2038 = vpop.f32.mrb[0].mxu0
    %v2039 = vadd.f32 %v1258, %v2038
    %v2040 = vpop.f32.mrb[0].mxu0
    %v2041 = vadd.f32 %v1262, %v2040
    %2042 = vdwg.mxu0
    %v2043 = vtanh.pop %v1626
    %v2044 = vtanh.pop %v1628
    %v2045 = vtanh.pop %v1739
    %v2046 = vtanh.pop %v1741
    %v2047 = vtanh.pop %v1852
    %v2048 = vtanh.pop %v1854
    %v2049 = vtanh.pop %v1965
    %v2050 = vtanh.pop %v1967
    %v2051 = vtanh.pop %v1630
    %v2052 = vtanh.pop %v1632
    %v2053 = vtanh.pop %v1743
    %v2054 = vtanh.pop %v1745
    %v2055 = vtanh.pop %v1856
    %v2056 = vtanh.pop %v1858
    %v2057 = vtanh.pop %v1969
    %v2058 = vtanh.pop %v1971
    %v2059 = vtanh.pop %v1636
    %v2060 = vtanh.pop %v1638
    %v2061 = vtanh.pop %v1749
    %v2062 = vtanh.pop %v1751
    %v2063 = vtanh.pop %v1862
    %v2064 = vtanh.pop %v1864
    %v2065 = vtanh.pop %v1975
    %v2066 = vtanh.pop %v1977
    %v2067 = vtanh.pop %v1640
    %v2068 = vtanh.pop %v1642
    %v2069 = vtanh.pop %v1753
    %v2070 = vtanh.pop %v1755
    %v2071 = vtanh.pop %v1866
    %v2072 = vtanh.pop %v1868
    %v2073 = vtanh.pop %v1979
    %v2074 = vtanh.pop %v1981
    %v2075 = vtanh.pop %v1646
    %v2076 = vtanh.pop %v1648
    %v2077 = vtanh.pop %v1759
    %v2078 = vtanh.pop %v1761
    %v2079 = vtanh.pop %v1872
    %v2080 = vtanh.pop %v1874
    %v2081 = vtanh.pop %v1985
    %v2082 = vtanh.pop %v1987
    %v2083 = vtanh.pop %v1650
    %v2084 = vtanh.pop %v1652
    %v2085 = vtanh.pop %v1763
    %v2086 = vtanh.pop %v1765
    %v2087 = vtanh.pop %v1876
    %v2088 = vtanh.pop %v1878
    %v2089 = vtanh.pop %v1989
    %v2090 = vtanh.pop %v1991
    %v2091 = vtanh.pop %v1656
    %v2092 = vtanh.pop %v1658
    %v2093 = vtanh.pop %v1769
    %v2094 = vtanh.pop %v1771
    %v2095 = vtanh.pop %v1882
    %v2096 = vtanh.pop %v1884
    %v2097 = vtanh.pop %v1995
    %v2098 = vtanh.pop %v1997
    %v2099 = vtanh.pop %v1660
    %v2100 = vtanh.pop %v1662
    %v2101 = vtanh.pop %v1773
    %v2102 = vtanh.pop %v1775
    %v2103 = vtanh.pop %v1886
    %v2104 = vtanh.pop %v1888
    %v2105 = vtanh.pop %v1999
    %v2106 = vtanh.pop %v2001
    %v2107 = vtanh.pop %v1666
    %v2108 = vtanh.pop %v1668
    %v2109 = vtanh.pop %v1779
    %v2110 = vtanh.pop %v1781
    %v2111 = vtanh.pop %v1892
    %v2112 = vtanh.pop %v1894
    %v2113 = vtanh.pop %v2005
    %v2114 = vtanh.pop %v2007
    %v2115 = vtanh.pop %v1670
    %v2116 = vtanh.pop %v1672
    %v2117 = vtanh.pop %v1783
    %v2118 = vtanh.pop %v1785
    %v2119 = vtanh.pop %v1896
    %v2120 = vtanh.pop %v1898
    %v2121 = vtanh.pop %v2009
    %v2122 = vtanh.pop %v2011
    %v2123 = vtanh.pop %v1676
    %v2124 = vtanh.pop %v1678
    %v2125 = vtanh.pop %v1789
    %v2126 = vtanh.pop %v1791
    %v2127 = vtanh.pop %v1902
    %v2128 = vtanh.pop %v1904
    %v2129 = vtanh.pop %v2015
    %v2130 = vtanh.pop %v2017
    %v2131 = vtanh.pop %v1680
    %v2132 = vtanh.pop %v1682
    %v2133 = vtanh.pop %v1793
    %v2134 = vtanh.pop %v1795
    %v2135 = vtanh.pop %v1906
    %v2136 = vtanh.pop %v1908
    %v2137 = vtanh.pop %v2019
    %v2138 = vtanh.pop %v2021
    %v2139 = vtanh.pop %v1686
    %v2140 = vtanh.pop %v1688
    %v2141 = vtanh.pop %v1799
    %v2142 = vtanh.pop %v1801
    %v2143 = vtanh.pop %v1912
    %v2144 = vtanh.pop %v1914
    %v2145 = vtanh.pop %v2025
    %v2146 = vtanh.pop %v2027
    %v2147 = vtanh.pop %v1690
    %v2148 = vtanh.pop %v1692
    %v2149 = vtanh.pop %v1803
    %v2150 = vtanh.pop %v1805
    %v2151 = vtanh.pop %v1916
    %v2152 = vtanh.pop %v1918
    %v2153 = vtanh.pop %v2029
    %v2154 = vtanh.pop %v2031
    %v2155 = vtanh.pop %v1696
    %v2156 = vtanh.pop %v1698
    %v2157 = vtanh.pop %v1809
    %v2158 = vtanh.pop %v1811
    %v2159 = vtanh.pop %v1922
    %v2160 = vtanh.pop %v1924
    %v2161 = vtanh.pop %v2035
    %v2162 = vtanh.pop %v2037
    %v2163 = vtanh.pop %v1700
    %v2164 = vtanh.pop %v1702
    %v2165 = vtanh.pop %v1813
    %v2166 = vtanh.pop %v1815
    %v2167 = vtanh.pop %v1926
    %v2168 = vtanh.pop %v1928
    %v2169 = vtanh.pop %v2039
    %v2170 = vtanh.pop %v2041
    %v2171 = vpack.c.bf16 %v2051, %v2043
    %v2172 = vpack.c.bf16 %v2052, %v2044
    %v2173 = vpack.c.bf16 %v2053, %v2045
    %v2174 = vpack.c.bf16 %v2054, %v2046
    %v2175 = vpack.c.bf16 %v2055, %v2047
    %v2176 = vpack.c.bf16 %v2056, %v2048
    %v2177 = vpack.c.bf16 %v2057, %v2049
    %v2178 = vpack.c.bf16 %v2058, %v2050
    %v2179 = vpack.c.bf16 %v2067, %v2059
    %v2180 = vpack.c.bf16 %v2068, %v2060
    %v2181 = vpack.c.bf16 %v2069, %v2061
    %v2182 = vpack.c.bf16 %v2070, %v2062
    %v2183 = vpack.c.bf16 %v2071, %v2063
    %v2184 = vpack.c.bf16 %v2072, %v2064
    %v2185 = vpack.c.bf16 %v2073, %v2065
    %v2186 = vpack.c.bf16 %v2074, %v2066
    %v2187 = vpack.c.bf16 %v2083, %v2075
    %v2188 = vpack.c.bf16 %v2084, %v2076
    %v2189 = vpack.c.bf16 %v2085, %v2077
    %v2190 = vpack.c.bf16 %v2086, %v2078
    %v2191 = vpack.c.bf16 %v2087, %v2079
    %v2192 = vpack.c.bf16 %v2088, %v2080
    %v2193 = vpack.c.bf16 %v2089, %v2081
    %v2194 = vpack.c.bf16 %v2090, %v2082
    %v2195 = vpack.c.bf16 %v2099, %v2091
    %v2196 = vpack.c.bf16 %v2100, %v2092
    %v2197 = vpack.c.bf16 %v2101, %v2093
    %v2198 = vpack.c.bf16 %v2102, %v2094
    %v2199 = vpack.c.bf16 %v2103, %v2095
    %v2200 = vpack.c.bf16 %v2104, %v2096
    %v2201 = vpack.c.bf16 %v2105, %v2097
    %v2202 = vpack.c.bf16 %v2106, %v2098
    %v2203 = vpack.c.bf16 %v2115, %v2107
    %v2204 = vpack.c.bf16 %v2116, %v2108
    %v2205 = vpack.c.bf16 %v2117, %v2109
    %v2206 = vpack.c.bf16 %v2118, %v2110
    %v2207 = vpack.c.bf16 %v2119, %v2111
    %v2208 = vpack.c.bf16 %v2120, %v2112
    %v2209 = vpack.c.bf16 %v2121, %v2113
    %v2210 = vpack.c.bf16 %v2122, %v2114
    %v2211 = vpack.c.bf16 %v2131, %v2123
    %v2212 = vpack.c.bf16 %v2132, %v2124
    %v2213 = vpack.c.bf16 %v2133, %v2125
    %v2214 = vpack.c.bf16 %v2134, %v2126
    %v2215 = vpack.c.bf16 %v2135, %v2127
    %v2216 = vpack.c.bf16 %v2136, %v2128
    %v2217 = vpack.c.bf16 %v2137, %v2129
    %v2218 = vpack.c.bf16 %v2138, %v2130
    %v2219 = vpack.c.bf16 %v2147, %v2139
    %v2220 = vpack.c.bf16 %v2148, %v2140
    %v2221 = vpack.c.bf16 %v2149, %v2141
    %v2222 = vpack.c.bf16 %v2150, %v2142
    %v2223 = vpack.c.bf16 %v2151, %v2143
    %v2224 = vpack.c.bf16 %v2152, %v2144
    %v2225 = vpack.c.bf16 %v2153, %v2145
    %v2226 = vpack.c.bf16 %v2154, %v2146
    %v2227 = vpack.c.bf16 %v2163, %v2155
    %v2228 = vpack.c.bf16 %v2164, %v2156
    %v2229 = vpack.c.bf16 %v2165, %v2157
    %v2230 = vpack.c.bf16 %v2166, %v2158
    %v2231 = vpack.c.bf16 %v2167, %v2159
    %v2232 = vpack.c.bf16 %v2168, %v2160
    %v2233 = vpack.c.bf16 %v2169, %v2161
    %v2234 = vpack.c.bf16 %v2170, %v2162
    %v2235 = vld [vmem:[%s11] sm:$0xff]
    %v2236 = vld [vmem:[%s11 + $0x8] sm:$0xff]
    %v2237 = vld [vmem:[%s11 + $0x10] sm:$0xff]
    %v2238 = vld [vmem:[%s11 + $0x18] sm:$0xff]
    %v2239 = vld [vmem:[%s11 + $0x20] sm:$0xff]
    %v2240 = vld [vmem:[%s11 + $0x28] sm:$0xff]
    %v2241 = vld [vmem:[%s11 + $0x30] sm:$0xff]
    %v2242 = vld [vmem:[%s11 + $0x38] sm:$0xff]
    %v2243 = vld [vmem:[%s11 + $0x40] sm:$0xff]
    %v2244 = vld [vmem:[%s11 + $0x48] sm:$0xff]
    %v2245 = vld [vmem:[%s11 + $0x50] sm:$0xff]
    %v2246 = vld [vmem:[%s11 + $0x58] sm:$0xff]
    %v2247 = vld [vmem:[%s11 + $0x60] sm:$0xff]
    %v2248 = vld [vmem:[%s11 + $0x68] sm:$0xff]
    %v2249 = vld [vmem:[%s11 + $0x70] sm:$0xff]
    %v2250 = vld [vmem:[%s11 + $0x78] sm:$0xff]
    %v2251 = vld [vmem:[#allocation18] sm:$0xff]
    %v2252 = vld [vmem:[#allocation18 + $0x8] sm:$0xff]
    %v2253 = vld [vmem:[#allocation18 + $0x10] sm:$0xff]
    %v2254 = vld [vmem:[#allocation18 + $0x18] sm:$0xff]
    %v2255 = vld [vmem:[#allocation18 + $0x20] sm:$0xff]
    %v2256 = vld [vmem:[#allocation18 + $0x28] sm:$0xff]
    %v2257 = vld [vmem:[#allocation18 + $0x30] sm:$0xff]
    %v2258 = vld [vmem:[#allocation18 + $0x38] sm:$0xff]
    %v2259 = vld [vmem:[#allocation18 + $0x40] sm:$0xff]
    %v2260 = vld [vmem:[#allocation18 + $0x48] sm:$0xff]
    %v2261 = vld [vmem:[#allocation18 + $0x50] sm:$0xff]
    %v2262 = vld [vmem:[#allocation18 + $0x58] sm:$0xff]
    %v2263 = vld [vmem:[#allocation18 + $0x60] sm:$0xff]
    %v2264 = vld [vmem:[#allocation18 + $0x68] sm:$0xff]
    %v2265 = vld [vmem:[#allocation18 + $0x70] sm:$0xff]
    %v2266 = vld [vmem:[#allocation18 + $0x78] sm:$0xff]
    %v2267 = vld [vmem:[#allocation18 + $0x80] sm:$0xff]
    %v2268 = vld [vmem:[#allocation18 + $0x88] sm:$0xff]
    %v2269 = vld [vmem:[#allocation18 + $0x90] sm:$0xff]
    %v2270 = vld [vmem:[#allocation18 + $0x98] sm:$0xff]
    %v2271 = vld [vmem:[#allocation18 + $0xa0] sm:$0xff]
    %v2272 = vld [vmem:[#allocation18 + $0xa8] sm:$0xff]
    %v2273 = vld [vmem:[#allocation18 + $0xb0] sm:$0xff]
    %v2274 = vld [vmem:[#allocation18 + $0xb8] sm:$0xff]
    %v2275 = vld [vmem:[#allocation18 + $0xc0] sm:$0xff]
    %v2276 = vld [vmem:[#allocation18 + $0xc8] sm:$0xff]
    %v2277 = vld [vmem:[#allocation18 + $0xd0] sm:$0xff]
    %v2278 = vld [vmem:[#allocation18 + $0xd8] sm:$0xff]
    %v2279 = vld [vmem:[#allocation18 + $0xe0] sm:$0xff]
    %v2280 = vld [vmem:[#allocation18 + $0xe8] sm:$0xff]
    %v2281 = vld [vmem:[#allocation18 + $0xf0] sm:$0xff]
    %v2282 = vld [vmem:[#allocation18 + $0xf8] sm:$0xff]
    %v2283 = vld [vmem:[#allocation18 + $0x100] sm:$0xff]
    %v2284 = vld [vmem:[#allocation18 + $0x108] sm:$0xff]
    %v2285 = vld [vmem:[#allocation18 + $0x110] sm:$0xff]
    %v2286 = vld [vmem:[#allocation18 + $0x118] sm:$0xff]
    %v2287 = vld [vmem:[#allocation18 + $0x120] sm:$0xff]
    %v2288 = vld [vmem:[#allocation18 + $0x128] sm:$0xff]
    %v2289 = vld [vmem:[#allocation18 + $0x130] sm:$0xff]
    %v2290 = vld [vmem:[#allocation18 + $0x138] sm:$0xff]
    %v2291 = vld [vmem:[#allocation18 + $0x140] sm:$0xff]
    %v2292 = vld [vmem:[#allocation18 + $0x148] sm:$0xff]
    %v2293 = vld [vmem:[#allocation18 + $0x150] sm:$0xff]
    %v2294 = vld [vmem:[#allocation18 + $0x158] sm:$0xff]
    %v2295 = vld [vmem:[#allocation18 + $0x160] sm:$0xff]
    %v2296 = vld [vmem:[#allocation18 + $0x168] sm:$0xff]
    %v2297 = vld [vmem:[#allocation18 + $0x170] sm:$0xff]
    %v2298 = vld [vmem:[#allocation18 + $0x178] sm:$0xff]
    %v2299 = vld [vmem:[#allocation18 + $0x180] sm:$0xff]
    %v2300 = vld [vmem:[#allocation18 + $0x188] sm:$0xff]
    %v2301 = vld [vmem:[#allocation18 + $0x190] sm:$0xff]
    %v2302 = vld [vmem:[#allocation18 + $0x198] sm:$0xff]
    %v2303 = vld [vmem:[#allocation18 + $0x1a0] sm:$0xff]
    %v2304 = vld [vmem:[#allocation18 + $0x1a8] sm:$0xff]
    %v2305 = vld [vmem:[#allocation18 + $0x1b0] sm:$0xff]
    %v2306 = vld [vmem:[#allocation18 + $0x1b8] sm:$0xff]
    %v2307 = vld [vmem:[#allocation18 + $0x1c0] sm:$0xff]
    %v2308 = vld [vmem:[#allocation18 + $0x1c8] sm:$0xff]
    %v2309 = vld [vmem:[#allocation18 + $0x1d0] sm:$0xff]
    %v2310 = vld [vmem:[#allocation18 + $0x1d8] sm:$0xff]
    %v2311 = vld [vmem:[#allocation18 + $0x1e0] sm:$0xff]
    %v2312 = vld [vmem:[#allocation18 + $0x1e8] sm:$0xff]
    %v2313 = vld [vmem:[#allocation18 + $0x1f0] sm:$0xff]
    %v2314 = vld [vmem:[#allocation18 + $0x1f8] sm:$0xff]
    %v2315 = vld [vmem:[#allocation18 + $0x200] sm:$0xff]
    %v2316 = vld [vmem:[#allocation18 + $0x208] sm:$0xff]
    %v2317 = vld [vmem:[#allocation18 + $0x210] sm:$0xff]
    %v2318 = vld [vmem:[#allocation18 + $0x218] sm:$0xff]
    %v2319 = vld [vmem:[#allocation18 + $0x220] sm:$0xff]
    %v2320 = vld [vmem:[#allocation18 + $0x228] sm:$0xff]
    %v2321 = vld [vmem:[#allocation18 + $0x230] sm:$0xff]
    %v2322 = vld [vmem:[#allocation18 + $0x238] sm:$0xff]
    %v2323 = vld [vmem:[#allocation18 + $0x240] sm:$0xff]
    %v2324 = vld [vmem:[#allocation18 + $0x248] sm:$0xff]
    %v2325 = vld [vmem:[#allocation18 + $0x250] sm:$0xff]
    %v2326 = vld [vmem:[#allocation18 + $0x258] sm:$0xff]
    %v2327 = vld [vmem:[#allocation18 + $0x260] sm:$0xff]
    %v2328 = vld [vmem:[#allocation18 + $0x268] sm:$0xff]
    %v2329 = vld [vmem:[#allocation18 + $0x270] sm:$0xff]
    %v2330 = vld [vmem:[#allocation18 + $0x278] sm:$0xff]
    %v2331 = vld [vmem:[#allocation18 + $0x280] sm:$0xff]
    %v2332 = vld [vmem:[#allocation18 + $0x288] sm:$0xff]
    %v2333 = vld [vmem:[#allocation18 + $0x290] sm:$0xff]
    %v2334 = vld [vmem:[#allocation18 + $0x298] sm:$0xff]
    %v2335 = vld [vmem:[#allocation18 + $0x2a0] sm:$0xff]
    %v2336 = vld [vmem:[#allocation18 + $0x2a8] sm:$0xff]
    %v2337 = vld [vmem:[#allocation18 + $0x2b0] sm:$0xff]
    %v2338 = vld [vmem:[#allocation18 + $0x2b8] sm:$0xff]
    %v2339 = vld [vmem:[#allocation18 + $0x2c0] sm:$0xff]
    %v2340 = vld [vmem:[#allocation18 + $0x2c8] sm:$0xff]
    %v2341 = vld [vmem:[#allocation18 + $0x2d0] sm:$0xff]
    %v2342 = vld [vmem:[#allocation18 + $0x2d8] sm:$0xff]
    %v2343 = vld [vmem:[#allocation18 + $0x2e0] sm:$0xff]
    %v2344 = vld [vmem:[#allocation18 + $0x2e8] sm:$0xff]
    %v2345 = vld [vmem:[#allocation18 + $0x2f0] sm:$0xff]
    %v2346 = vld [vmem:[#allocation18 + $0x2f8] sm:$0xff]
    %v2347 = vld [vmem:[#allocation18 + $0x300] sm:$0xff]
    %v2348 = vld [vmem:[#allocation18 + $0x308] sm:$0xff]
    %v2349 = vld [vmem:[#allocation18 + $0x310] sm:$0xff]
    %v2350 = vld [vmem:[#allocation18 + $0x318] sm:$0xff]
    %v2351 = vld [vmem:[#allocation18 + $0x320] sm:$0xff]
    %v2352 = vld [vmem:[#allocation18 + $0x328] sm:$0xff]
    %v2353 = vld [vmem:[#allocation18 + $0x330] sm:$0xff]
    %v2354 = vld [vmem:[#allocation18 + $0x338] sm:$0xff]
    %v2355 = vld [vmem:[#allocation18 + $0x340] sm:$0xff]
    %v2356 = vld [vmem:[#allocation18 + $0x348] sm:$0xff]
    %v2357 = vld [vmem:[#allocation18 + $0x350] sm:$0xff]
    %v2358 = vld [vmem:[#allocation18 + $0x358] sm:$0xff]
    %v2359 = vld [vmem:[#allocation18 + $0x360] sm:$0xff]
    %v2360 = vld [vmem:[#allocation18 + $0x368] sm:$0xff]
    %v2361 = vld [vmem:[#allocation18 + $0x370] sm:$0xff]
    %v2362 = vld [vmem:[#allocation18 + $0x378] sm:$0xff]
    %v2363 = vld [vmem:[#allocation18 + $0x380] sm:$0xff]
    %v2364 = vld [vmem:[#allocation18 + $0x388] sm:$0xff]
    %v2365 = vld [vmem:[#allocation18 + $0x390] sm:$0xff]
    %v2366 = vld [vmem:[#allocation18 + $0x398] sm:$0xff]
    %v2367 = vld [vmem:[#allocation18 + $0x3a0] sm:$0xff]
    %v2368 = vld [vmem:[#allocation18 + $0x3a8] sm:$0xff]
    %v2369 = vld [vmem:[#allocation18 + $0x3b0] sm:$0xff]
    %v2370 = vld [vmem:[#allocation18 + $0x3b8] sm:$0xff]
    %v2371 = vld [vmem:[#allocation18 + $0x3c0] sm:$0xff]
    %v2372 = vld [vmem:[#allocation18 + $0x3c8] sm:$0xff]
    %v2373 = vld [vmem:[#allocation18 + $0x3d0] sm:$0xff]
    %v2374 = vld [vmem:[#allocation18 + $0x3d8] sm:$0xff]
    %v2375 = vld [vmem:[#allocation18 + $0x3e0] sm:$0xff]
    %v2376 = vld [vmem:[#allocation18 + $0x3e8] sm:$0xff]
    %v2377 = vld [vmem:[#allocation18 + $0x3f0] sm:$0xff]
    %v2378 = vld [vmem:[#allocation18 + $0x3f8] sm:$0xff]
    %v2379 = vld [vmem:[#allocation18 + $0x400] sm:$0xff]
    %v2380 = vld [vmem:[#allocation18 + $0x408] sm:$0xff]
    %v2381 = vld [vmem:[#allocation18 + $0x410] sm:$0xff]
    %v2382 = vld [vmem:[#allocation18 + $0x418] sm:$0xff]
    %v2383 = vld [vmem:[#allocation18 + $0x420] sm:$0xff]
    %v2384 = vld [vmem:[#allocation18 + $0x428] sm:$0xff]
    %v2385 = vld [vmem:[#allocation18 + $0x430] sm:$0xff]
    %v2386 = vld [vmem:[#allocation18 + $0x438] sm:$0xff]
    %v2387 = vld [vmem:[#allocation18 + $0x440] sm:$0xff]
    %v2388 = vld [vmem:[#allocation18 + $0x448] sm:$0xff]
    %v2389 = vld [vmem:[#allocation18 + $0x450] sm:$0xff]
    %v2390 = vld [vmem:[#allocation18 + $0x458] sm:$0xff]
    %v2391 = vld [vmem:[#allocation18 + $0x460] sm:$0xff]
    %v2392 = vld [vmem:[#allocation18 + $0x468] sm:$0xff]
    %v2393 = vld [vmem:[#allocation18 + $0x470] sm:$0xff]
    %v2394 = vld [vmem:[#allocation18 + $0x478] sm:$0xff]
    %v2395 = vld [vmem:[#allocation18 + $0x480] sm:$0xff]
    %v2396 = vld [vmem:[#allocation18 + $0x488] sm:$0xff]
    %v2397 = vld [vmem:[#allocation18 + $0x490] sm:$0xff]
    %v2398 = vld [vmem:[#allocation18 + $0x498] sm:$0xff]
    %v2399 = vld [vmem:[#allocation18 + $0x4a0] sm:$0xff]
    %v2400 = vld [vmem:[#allocation18 + $0x4a8] sm:$0xff]
    %v2401 = vld [vmem:[#allocation18 + $0x4b0] sm:$0xff]
    %v2402 = vld [vmem:[#allocation18 + $0x4b8] sm:$0xff]
    %v2403 = vld [vmem:[#allocation18 + $0x4c0] sm:$0xff]
    %v2404 = vld [vmem:[#allocation18 + $0x4c8] sm:$0xff]
    %v2405 = vld [vmem:[#allocation18 + $0x4d0] sm:$0xff]
    %v2406 = vld [vmem:[#allocation18 + $0x4d8] sm:$0xff]
    %v2407 = vld [vmem:[#allocation18 + $0x4e0] sm:$0xff]
    %v2408 = vld [vmem:[#allocation18 + $0x4e8] sm:$0xff]
    %v2409 = vld [vmem:[#allocation18 + $0x4f0] sm:$0xff]
    %v2410 = vld [vmem:[#allocation18 + $0x4f8] sm:$0xff]
    %v2411 = vld [vmem:[#allocation18 + $0x500] sm:$0xff]
    %v2412 = vld [vmem:[#allocation18 + $0x508] sm:$0xff]
    %v2413 = vld [vmem:[#allocation18 + $0x510] sm:$0xff]
    %v2414 = vld [vmem:[#allocation18 + $0x518] sm:$0xff]
    %v2415 = vld [vmem:[#allocation18 + $0x520] sm:$0xff]
    %v2416 = vld [vmem:[#allocation18 + $0x528] sm:$0xff]
    %v2417 = vld [vmem:[#allocation18 + $0x530] sm:$0xff]
    %v2418 = vld [vmem:[#allocation18 + $0x538] sm:$0xff]
    %v2419 = vld [vmem:[#allocation18 + $0x540] sm:$0xff]
    %v2420 = vld [vmem:[#allocation18 + $0x548] sm:$0xff]
    %v2421 = vld [vmem:[#allocation18 + $0x550] sm:$0xff]
    %v2422 = vld [vmem:[#allocation18 + $0x558] sm:$0xff]
    %v2423 = vld [vmem:[#allocation18 + $0x560] sm:$0xff]
    %v2424 = vld [vmem:[#allocation18 + $0x568] sm:$0xff]
    %v2425 = vld [vmem:[#allocation18 + $0x570] sm:$0xff]
    %v2426 = vld [vmem:[#allocation18 + $0x578] sm:$0xff]
    %v2427 = vld [vmem:[#allocation18 + $0x580] sm:$0xff]
    %v2428 = vld [vmem:[#allocation18 + $0x588] sm:$0xff]
    %v2429 = vld [vmem:[#allocation18 + $0x590] sm:$0xff]
    %v2430 = vld [vmem:[#allocation18 + $0x598] sm:$0xff]
    %v2431 = vld [vmem:[#allocation18 + $0x5a0] sm:$0xff]
    %v2432 = vld [vmem:[#allocation18 + $0x5a8] sm:$0xff]
    %v2433 = vld [vmem:[#allocation18 + $0x5b0] sm:$0xff]
    %v2434 = vld [vmem:[#allocation18 + $0x5b8] sm:$0xff]
    %v2435 = vld [vmem:[#allocation18 + $0x5c0] sm:$0xff]
    %v2436 = vld [vmem:[#allocation18 + $0x5c8] sm:$0xff]
    %v2437 = vld [vmem:[#allocation18 + $0x5d0] sm:$0xff]
    %v2438 = vld [vmem:[#allocation18 + $0x5d8] sm:$0xff]
    %v2439 = vld [vmem:[#allocation18 + $0x5e0] sm:$0xff]
    %v2440 = vld [vmem:[#allocation18 + $0x5e8] sm:$0xff]
    %v2441 = vld [vmem:[#allocation18 + $0x5f0] sm:$0xff]
    %v2442 = vld [vmem:[#allocation18 + $0x5f8] sm:$0xff]
    %v2443 = vld [vmem:[#allocation18 + $0x600] sm:$0xff]
    %v2444 = vld [vmem:[#allocation18 + $0x608] sm:$0xff]
    %v2445 = vld [vmem:[#allocation18 + $0x610] sm:$0xff]
    %v2446 = vld [vmem:[#allocation18 + $0x618] sm:$0xff]
    %v2447 = vld [vmem:[#allocation18 + $0x620] sm:$0xff]
    %v2448 = vld [vmem:[#allocation18 + $0x628] sm:$0xff]
    %v2449 = vld [vmem:[#allocation18 + $0x630] sm:$0xff]
    %v2450 = vld [vmem:[#allocation18 + $0x638] sm:$0xff]
    %v2451 = vld [vmem:[#allocation18 + $0x640] sm:$0xff]
    %v2452 = vld [vmem:[#allocation18 + $0x648] sm:$0xff]
    %v2453 = vld [vmem:[#allocation18 + $0x650] sm:$0xff]
    %v2454 = vld [vmem:[#allocation18 + $0x658] sm:$0xff]
    %v2455 = vld [vmem:[#allocation18 + $0x660] sm:$0xff]
    %v2456 = vld [vmem:[#allocation18 + $0x668] sm:$0xff]
    %v2457 = vld [vmem:[#allocation18 + $0x670] sm:$0xff]
    %v2458 = vld [vmem:[#allocation18 + $0x678] sm:$0xff]
    %v2459 = vld [vmem:[#allocation18 + $0x680] sm:$0xff]
    %v2460 = vld [vmem:[#allocation18 + $0x688] sm:$0xff]
    %v2461 = vld [vmem:[#allocation18 + $0x690] sm:$0xff]
    %v2462 = vld [vmem:[#allocation18 + $0x698] sm:$0xff]
    %v2463 = vld [vmem:[#allocation18 + $0x6a0] sm:$0xff]
    %v2464 = vld [vmem:[#allocation18 + $0x6a8] sm:$0xff]
    %v2465 = vld [vmem:[#allocation18 + $0x6b0] sm:$0xff]
    %v2466 = vld [vmem:[#allocation18 + $0x6b8] sm:$0xff]
    %v2467 = vld [vmem:[#allocation18 + $0x6c0] sm:$0xff]
    %v2468 = vld [vmem:[#allocation18 + $0x6c8] sm:$0xff]
    %v2469 = vld [vmem:[#allocation18 + $0x6d0] sm:$0xff]
    %v2470 = vld [vmem:[#allocation18 + $0x6d8] sm:$0xff]
    %v2471 = vld [vmem:[#allocation18 + $0x6e0] sm:$0xff]
    %v2472 = vld [vmem:[#allocation18 + $0x6e8] sm:$0xff]
    %v2473 = vld [vmem:[#allocation18 + $0x6f0] sm:$0xff]
    %v2474 = vld [vmem:[#allocation18 + $0x6f8] sm:$0xff]
    %v2475 = vld [vmem:[#allocation18 + $0x700] sm:$0xff]
    %v2476 = vld [vmem:[#allocation18 + $0x708] sm:$0xff]
    %v2477 = vld [vmem:[#allocation18 + $0x710] sm:$0xff]
    %v2478 = vld [vmem:[#allocation18 + $0x718] sm:$0xff]
    %v2479 = vld [vmem:[#allocation18 + $0x720] sm:$0xff]
    %v2480 = vld [vmem:[#allocation18 + $0x728] sm:$0xff]
    %v2481 = vld [vmem:[#allocation18 + $0x730] sm:$0xff]
    %v2482 = vld [vmem:[#allocation18 + $0x738] sm:$0xff]
    %v2483 = vld [vmem:[#allocation18 + $0x740] sm:$0xff]
    %v2484 = vld [vmem:[#allocation18 + $0x748] sm:$0xff]
    %v2485 = vld [vmem:[#allocation18 + $0x750] sm:$0xff]
    %v2486 = vld [vmem:[#allocation18 + $0x758] sm:$0xff]
    %v2487 = vld [vmem:[#allocation18 + $0x760] sm:$0xff]
    %v2488 = vld [vmem:[#allocation18 + $0x768] sm:$0xff]
    %v2489 = vld [vmem:[#allocation18 + $0x770] sm:$0xff]
    %v2490 = vld [vmem:[#allocation18 + $0x778] sm:$0xff]
    %v2491 = vld [vmem:[#allocation18 + $0x780] sm:$0xff]
    %v2492 = vld [vmem:[#allocation18 + $0x788] sm:$0xff]
    %v2493 = vld [vmem:[#allocation18 + $0x790] sm:$0xff]
    %v2494 = vld [vmem:[#allocation18 + $0x798] sm:$0xff]
    %v2495 = vld [vmem:[#allocation18 + $0x7a0] sm:$0xff]
    %v2496 = vld [vmem:[#allocation18 + $0x7a8] sm:$0xff]
    %v2497 = vld [vmem:[#allocation18 + $0x7b0] sm:$0xff]
    %v2498 = vld [vmem:[#allocation18 + $0x7b8] sm:$0xff]
    %v2499 = vld [vmem:[#allocation18 + $0x7c0] sm:$0xff]
    %v2500 = vld [vmem:[#allocation18 + $0x7c8] sm:$0xff]
    %v2501 = vld [vmem:[#allocation18 + $0x7d0] sm:$0xff]
    %v2502 = vld [vmem:[#allocation18 + $0x7d8] sm:$0xff]
    %v2503 = vld [vmem:[#allocation18 + $0x7e0] sm:$0xff]
    %v2504 = vld [vmem:[#allocation18 + $0x7e8] sm:$0xff]
    %v2505 = vld [vmem:[#allocation18 + $0x7f0] sm:$0xff]
    %v2506 = vld [vmem:[#allocation18 + $0x7f8] sm:$0xff]
    %v2763 = vunpack.c.l.b16 %v2251
    %v2764 = vunpack.c.h.b16 %v2251
    %v2765 = vunpack.c.l.b16 %v2252
    %v2766 = vunpack.c.h.b16 %v2252
    %v2767 = vunpack.c.l.b16 %v2253
    %v2768 = vunpack.c.h.b16 %v2253
    %v2769 = vunpack.c.l.b16 %v2254
    %v2770 = vunpack.c.h.b16 %v2254
    %v2771 = vunpack.c.l.b16 %v2255
    %v2772 = vunpack.c.h.b16 %v2255
    %v2773 = vunpack.c.l.b16 %v2256
    %v2774 = vunpack.c.h.b16 %v2256
    %v2775 = vunpack.c.l.b16 %v2257
    %v2776 = vunpack.c.h.b16 %v2257
    %v2777 = vunpack.c.l.b16 %v2258
    %v2778 = vunpack.c.h.b16 %v2258
    %v2779 = vunpack.c.l.b16 %v2259
    %v2780 = vunpack.c.h.b16 %v2259
    %v2781 = vunpack.c.l.b16 %v2260
    %v2782 = vunpack.c.h.b16 %v2260
    %v2783 = vunpack.c.l.b16 %v2261
    %v2784 = vunpack.c.h.b16 %v2261
    %v2785 = vunpack.c.l.b16 %v2262
    %v2786 = vunpack.c.h.b16 %v2262
    %v2787 = vunpack.c.l.b16 %v2263
    %v2788 = vunpack.c.h.b16 %v2263
    %v2789 = vunpack.c.l.b16 %v2264
    %v2790 = vunpack.c.h.b16 %v2264
    %v2791 = vunpack.c.l.b16 %v2265
    %v2792 = vunpack.c.h.b16 %v2265
    %v2793 = vunpack.c.l.b16 %v2266
    %v2794 = vunpack.c.h.b16 %v2266
    %v2795 = vunpack.c.l.b16 %v2267
    %v2796 = vunpack.c.h.b16 %v2267
    %v2797 = vunpack.c.l.b16 %v2268
    %v2798 = vunpack.c.h.b16 %v2268
    %v2799 = vunpack.c.l.b16 %v2269
    %v2800 = vunpack.c.h.b16 %v2269
    %v2801 = vunpack.c.l.b16 %v2270
    %v2802 = vunpack.c.h.b16 %v2270
    %v2803 = vunpack.c.l.b16 %v2271
    %v2804 = vunpack.c.h.b16 %v2271
    %v2805 = vunpack.c.l.b16 %v2272
    %v2806 = vunpack.c.h.b16 %v2272
    %v2807 = vunpack.c.l.b16 %v2273
    %v2808 = vunpack.c.h.b16 %v2273
    %v2809 = vunpack.c.l.b16 %v2274
    %v2810 = vunpack.c.h.b16 %v2274
    %v2811 = vunpack.c.l.b16 %v2275
    %v2812 = vunpack.c.h.b16 %v2275
    %v2813 = vunpack.c.l.b16 %v2276
    %v2814 = vunpack.c.h.b16 %v2276
    %v2815 = vunpack.c.l.b16 %v2277
    %v2816 = vunpack.c.h.b16 %v2277
    %v2817 = vunpack.c.l.b16 %v2278
    %v2818 = vunpack.c.h.b16 %v2278
    %v2819 = vunpack.c.l.b16 %v2279
    %v2820 = vunpack.c.h.b16 %v2279
    %v2821 = vunpack.c.l.b16 %v2280
    %v2822 = vunpack.c.h.b16 %v2280
    %v2823 = vunpack.c.l.b16 %v2281
    %v2824 = vunpack.c.h.b16 %v2281
    %v2825 = vunpack.c.l.b16 %v2282
    %v2826 = vunpack.c.h.b16 %v2282
    %v2827 = vunpack.c.l.b16 %v2283
    %v2828 = vunpack.c.h.b16 %v2283
    %v2829 = vunpack.c.l.b16 %v2284
    %v2830 = vunpack.c.h.b16 %v2284
    %v2831 = vunpack.c.l.b16 %v2285
    %v2832 = vunpack.c.h.b16 %v2285
    %v2833 = vunpack.c.l.b16 %v2286
    %v2834 = vunpack.c.h.b16 %v2286
    %v2835 = vunpack.c.l.b16 %v2287
    %v2836 = vunpack.c.h.b16 %v2287
    %v2837 = vunpack.c.l.b16 %v2288
    %v2838 = vunpack.c.h.b16 %v2288
    %v2839 = vunpack.c.l.b16 %v2289
    %v2840 = vunpack.c.h.b16 %v2289
    %v2841 = vunpack.c.l.b16 %v2290
    %v2842 = vunpack.c.h.b16 %v2290
    %v2843 = vunpack.c.l.b16 %v2291
    %v2844 = vunpack.c.h.b16 %v2291
    %v2845 = vunpack.c.l.b16 %v2292
    %v2846 = vunpack.c.h.b16 %v2292
    %v2847 = vunpack.c.l.b16 %v2293
    %v2848 = vunpack.c.h.b16 %v2293
    %v2849 = vunpack.c.l.b16 %v2294
    %v2850 = vunpack.c.h.b16 %v2294
    %v2851 = vunpack.c.l.b16 %v2295
    %v2852 = vunpack.c.h.b16 %v2295
    %v2853 = vunpack.c.l.b16 %v2296
    %v2854 = vunpack.c.h.b16 %v2296
    %v2855 = vunpack.c.l.b16 %v2297
    %v2856 = vunpack.c.h.b16 %v2297
    %v2857 = vunpack.c.l.b16 %v2298
    %v2858 = vunpack.c.h.b16 %v2298
    %v2859 = vunpack.c.l.b16 %v2299
    %v2860 = vunpack.c.h.b16 %v2299
    %v2861 = vunpack.c.l.b16 %v2300
    %v2862 = vunpack.c.h.b16 %v2300
    %v2863 = vunpack.c.l.b16 %v2301
    %v2864 = vunpack.c.h.b16 %v2301
    %v2865 = vunpack.c.l.b16 %v2302
    %v2866 = vunpack.c.h.b16 %v2302
    %v2867 = vunpack.c.l.b16 %v2303
    %v2868 = vunpack.c.h.b16 %v2303
    %v2869 = vunpack.c.l.b16 %v2304
    %v2870 = vunpack.c.h.b16 %v2304
    %v2871 = vunpack.c.l.b16 %v2305
    %v2872 = vunpack.c.h.b16 %v2305
    %v2873 = vunpack.c.l.b16 %v2306
    %v2874 = vunpack.c.h.b16 %v2306
    %v2875 = vunpack.c.l.b16 %v2307
    %v2876 = vunpack.c.h.b16 %v2307
    %v2877 = vunpack.c.l.b16 %v2308
    %v2878 = vunpack.c.h.b16 %v2308
    %v2879 = vunpack.c.l.b16 %v2309
    %v2880 = vunpack.c.h.b16 %v2309
    %v2881 = vunpack.c.l.b16 %v2310
    %v2882 = vunpack.c.h.b16 %v2310
    %v2883 = vunpack.c.l.b16 %v2311
    %v2884 = vunpack.c.h.b16 %v2311
    %v2885 = vunpack.c.l.b16 %v2312
    %v2886 = vunpack.c.h.b16 %v2312
    %v2887 = vunpack.c.l.b16 %v2313
    %v2888 = vunpack.c.h.b16 %v2313
    %v2889 = vunpack.c.l.b16 %v2314
    %v2890 = vunpack.c.h.b16 %v2314
    %v2891 = vunpack.c.l.b16 %v2315
    %v2892 = vunpack.c.h.b16 %v2315
    %v2893 = vunpack.c.l.b16 %v2316
    %v2894 = vunpack.c.h.b16 %v2316
    %v2895 = vunpack.c.l.b16 %v2317
    %v2896 = vunpack.c.h.b16 %v2317
    %v2897 = vunpack.c.l.b16 %v2318
    %v2898 = vunpack.c.h.b16 %v2318
    %v2899 = vunpack.c.l.b16 %v2319
    %v2900 = vunpack.c.h.b16 %v2319
    %v2901 = vunpack.c.l.b16 %v2320
    %v2902 = vunpack.c.h.b16 %v2320
    %v2903 = vunpack.c.l.b16 %v2321
    %v2904 = vunpack.c.h.b16 %v2321
    %v2905 = vunpack.c.l.b16 %v2322
    %v2906 = vunpack.c.h.b16 %v2322
    %v2907 = vunpack.c.l.b16 %v2323
    %v2908 = vunpack.c.h.b16 %v2323
    %v2909 = vunpack.c.l.b16 %v2324
    %v2910 = vunpack.c.h.b16 %v2324
    %v2911 = vunpack.c.l.b16 %v2325
    %v2912 = vunpack.c.h.b16 %v2325
    %v2913 = vunpack.c.l.b16 %v2326
    %v2914 = vunpack.c.h.b16 %v2326
    %v2915 = vunpack.c.l.b16 %v2327
    %v2916 = vunpack.c.h.b16 %v2327
    %v2917 = vunpack.c.l.b16 %v2328
    %v2918 = vunpack.c.h.b16 %v2328
    %v2919 = vunpack.c.l.b16 %v2329
    %v2920 = vunpack.c.h.b16 %v2329
    %v2921 = vunpack.c.l.b16 %v2330
    %v2922 = vunpack.c.h.b16 %v2330
    %v2923 = vunpack.c.l.b16 %v2331
    %v2924 = vunpack.c.h.b16 %v2331
    %v2925 = vunpack.c.l.b16 %v2332
    %v2926 = vunpack.c.h.b16 %v2332
    %v2927 = vunpack.c.l.b16 %v2333
    %v2928 = vunpack.c.h.b16 %v2333
    %v2929 = vunpack.c.l.b16 %v2334
    %v2930 = vunpack.c.h.b16 %v2334
    %v2931 = vunpack.c.l.b16 %v2335
    %v2932 = vunpack.c.h.b16 %v2335
    %v2933 = vunpack.c.l.b16 %v2336
    %v2934 = vunpack.c.h.b16 %v2336
    %v2935 = vunpack.c.l.b16 %v2337
    %v2936 = vunpack.c.h.b16 %v2337
    %v2937 = vunpack.c.l.b16 %v2338
    %v2938 = vunpack.c.h.b16 %v2338
    %v2939 = vunpack.c.l.b16 %v2339
    %v2940 = vunpack.c.h.b16 %v2339
    %v2941 = vunpack.c.l.b16 %v2340
    %v2942 = vunpack.c.h.b16 %v2340
    %v2943 = vunpack.c.l.b16 %v2341
    %v2944 = vunpack.c.h.b16 %v2341
    %v2945 = vunpack.c.l.b16 %v2342
    %v2946 = vunpack.c.h.b16 %v2342
    %v2947 = vunpack.c.l.b16 %v2343
    %v2948 = vunpack.c.h.b16 %v2343
    %v2949 = vunpack.c.l.b16 %v2344
    %v2950 = vunpack.c.h.b16 %v2344
    %v2951 = vunpack.c.l.b16 %v2345
    %v2952 = vunpack.c.h.b16 %v2345
    %v2953 = vunpack.c.l.b16 %v2346
    %v2954 = vunpack.c.h.b16 %v2346
    %v2955 = vunpack.c.l.b16 %v2347
    %v2956 = vunpack.c.h.b16 %v2347
    %v2957 = vunpack.c.l.b16 %v2348
    %v2958 = vunpack.c.h.b16 %v2348
    %v2959 = vunpack.c.l.b16 %v2349
    %v2960 = vunpack.c.h.b16 %v2349
    %v2961 = vunpack.c.l.b16 %v2350
    %v2962 = vunpack.c.h.b16 %v2350
    %v2963 = vunpack.c.l.b16 %v2351
    %v2964 = vunpack.c.h.b16 %v2351
    %v2965 = vunpack.c.l.b16 %v2352
    %v2966 = vunpack.c.h.b16 %v2352
    %v2967 = vunpack.c.l.b16 %v2353
    %v2968 = vunpack.c.h.b16 %v2353
    %v2969 = vunpack.c.l.b16 %v2354
    %v2970 = vunpack.c.h.b16 %v2354
    %v2971 = vunpack.c.l.b16 %v2355
    %v2972 = vunpack.c.h.b16 %v2355
    %v2973 = vunpack.c.l.b16 %v2356
    %v2974 = vunpack.c.h.b16 %v2356
    %v2975 = vunpack.c.l.b16 %v2357
    %v2976 = vunpack.c.h.b16 %v2357
    %v2977 = vunpack.c.l.b16 %v2358
    %v2978 = vunpack.c.h.b16 %v2358
    %v2979 = vunpack.c.l.b16 %v2359
    %v2980 = vunpack.c.h.b16 %v2359
    %v2981 = vunpack.c.l.b16 %v2360
    %v2982 = vunpack.c.h.b16 %v2360
    %v2983 = vunpack.c.l.b16 %v2361
    %v2984 = vunpack.c.h.b16 %v2361
    %v2985 = vunpack.c.l.b16 %v2362
    %v2986 = vunpack.c.h.b16 %v2362
    %v2987 = vunpack.c.l.b16 %v2363
    %v2988 = vunpack.c.h.b16 %v2363
    %v2989 = vunpack.c.l.b16 %v2364
    %v2990 = vunpack.c.h.b16 %v2364
    %v2991 = vunpack.c.l.b16 %v2365
    %v2992 = vunpack.c.h.b16 %v2365
    %v2993 = vunpack.c.l.b16 %v2366
    %v2994 = vunpack.c.h.b16 %v2366
    %v2995 = vunpack.c.l.b16 %v2367
    %v2996 = vunpack.c.h.b16 %v2367
    %v2997 = vunpack.c.l.b16 %v2368
    %v2998 = vunpack.c.h.b16 %v2368
    %v2999 = vunpack.c.l.b16 %v2369
    %v3000 = vunpack.c.h.b16 %v2369
    %v3001 = vunpack.c.l.b16 %v2370
    %v3002 = vunpack.c.h.b16 %v2370
    %v3003 = vunpack.c.l.b16 %v2371
    %v3004 = vunpack.c.h.b16 %v2371
    %v3005 = vunpack.c.l.b16 %v2372
    %v3006 = vunpack.c.h.b16 %v2372
    %v3007 = vunpack.c.l.b16 %v2373
    %v3008 = vunpack.c.h.b16 %v2373
    %v3009 = vunpack.c.l.b16 %v2374
    %v3010 = vunpack.c.h.b16 %v2374
    %v3011 = vunpack.c.l.b16 %v2375
    %v3012 = vunpack.c.h.b16 %v2375
    %v3013 = vunpack.c.l.b16 %v2376
    %v3014 = vunpack.c.h.b16 %v2376
    %v3015 = vunpack.c.l.b16 %v2377
    %v3016 = vunpack.c.h.b16 %v2377
    %v3017 = vunpack.c.l.b16 %v2378
    %v3018 = vunpack.c.h.b16 %v2378
    %v3019 = vunpack.c.l.b16 %v2379
    %v3020 = vunpack.c.h.b16 %v2379
    %v3021 = vunpack.c.l.b16 %v2380
    %v3022 = vunpack.c.h.b16 %v2380
    %v3023 = vunpack.c.l.b16 %v2381
    %v3024 = vunpack.c.h.b16 %v2381
    %v3025 = vunpack.c.l.b16 %v2382
    %v3026 = vunpack.c.h.b16 %v2382
    %v3027 = vunpack.c.l.b16 %v2383
    %v3028 = vunpack.c.h.b16 %v2383
    %v3029 = vunpack.c.l.b16 %v2384
    %v3030 = vunpack.c.h.b16 %v2384
    %v3031 = vunpack.c.l.b16 %v2385
    %v3032 = vunpack.c.h.b16 %v2385
    %v3033 = vunpack.c.l.b16 %v2386
    %v3034 = vunpack.c.h.b16 %v2386
    %v3035 = vunpack.c.l.b16 %v2387
    %v3036 = vunpack.c.h.b16 %v2387
    %v3037 = vunpack.c.l.b16 %v2388
    %v3038 = vunpack.c.h.b16 %v2388
    %v3039 = vunpack.c.l.b16 %v2389
    %v3040 = vunpack.c.h.b16 %v2389
    %v3041 = vunpack.c.l.b16 %v2390
    %v3042 = vunpack.c.h.b16 %v2390
    %v3043 = vunpack.c.l.b16 %v2391
    %v3044 = vunpack.c.h.b16 %v2391
    %v3045 = vunpack.c.l.b16 %v2392
    %v3046 = vunpack.c.h.b16 %v2392
    %v3047 = vunpack.c.l.b16 %v2393
    %v3048 = vunpack.c.h.b16 %v2393
    %v3049 = vunpack.c.l.b16 %v2394
    %v3050 = vunpack.c.h.b16 %v2394
    %v3051 = vunpack.c.l.b16 %v2395
    %v3052 = vunpack.c.h.b16 %v2395
    %v3053 = vunpack.c.l.b16 %v2396
    %v3054 = vunpack.c.h.b16 %v2396
    %v3055 = vunpack.c.l.b16 %v2397
    %v3056 = vunpack.c.h.b16 %v2397
    %v3057 = vunpack.c.l.b16 %v2398
    %v3058 = vunpack.c.h.b16 %v2398
    %v3059 = vunpack.c.l.b16 %v2399
    %v3060 = vunpack.c.h.b16 %v2399
    %v3061 = vunpack.c.l.b16 %v2400
    %v3062 = vunpack.c.h.b16 %v2400
    %v3063 = vunpack.c.l.b16 %v2401
    %v3064 = vunpack.c.h.b16 %v2401
    %v3065 = vunpack.c.l.b16 %v2402
    %v3066 = vunpack.c.h.b16 %v2402
    %v3067 = vunpack.c.l.b16 %v2403
    %v3068 = vunpack.c.h.b16 %v2403
    %v3069 = vunpack.c.l.b16 %v2404
    %v3070 = vunpack.c.h.b16 %v2404
    %v3071 = vunpack.c.l.b16 %v2405
    %v3072 = vunpack.c.h.b16 %v2405
    %v3073 = vunpack.c.l.b16 %v2406
    %v3074 = vunpack.c.h.b16 %v2406
    %v3075 = vunpack.c.l.b16 %v2407
    %v3076 = vunpack.c.h.b16 %v2407
    %v3077 = vunpack.c.l.b16 %v2408
    %v3078 = vunpack.c.h.b16 %v2408
    %v3079 = vunpack.c.l.b16 %v2409
    %v3080 = vunpack.c.h.b16 %v2409
    %v3081 = vunpack.c.l.b16 %v2410
    %v3082 = vunpack.c.h.b16 %v2410
    %v3083 = vunpack.c.l.b16 %v2411
    %v3084 = vunpack.c.h.b16 %v2411
    %v3085 = vunpack.c.l.b16 %v2412
    %v3086 = vunpack.c.h.b16 %v2412
    %v3087 = vunpack.c.l.b16 %v2413
    %v3088 = vunpack.c.h.b16 %v2413
    %v3089 = vunpack.c.l.b16 %v2414
    %v3090 = vunpack.c.h.b16 %v2414
    %v3091 = vunpack.c.l.b16 %v2415
    %v3092 = vunpack.c.h.b16 %v2415
    %v3093 = vunpack.c.l.b16 %v2416
    %v3094 = vunpack.c.h.b16 %v2416
    %v3095 = vunpack.c.l.b16 %v2417
    %v3096 = vunpack.c.h.b16 %v2417
    %v3097 = vunpack.c.l.b16 %v2418
    %v3098 = vunpack.c.h.b16 %v2418
    %v3099 = vunpack.c.l.b16 %v2419
    %v3100 = vunpack.c.h.b16 %v2419
    %v3101 = vunpack.c.l.b16 %v2420
    %v3102 = vunpack.c.h.b16 %v2420
    %v3103 = vunpack.c.l.b16 %v2421
    %v3104 = vunpack.c.h.b16 %v2421
    %v3105 = vunpack.c.l.b16 %v2422
    %v3106 = vunpack.c.h.b16 %v2422
    %v3107 = vunpack.c.l.b16 %v2423
    %v3108 = vunpack.c.h.b16 %v2423
    %v3109 = vunpack.c.l.b16 %v2424
    %v3110 = vunpack.c.h.b16 %v2424
    %v3111 = vunpack.c.l.b16 %v2425
    %v3112 = vunpack.c.h.b16 %v2425
    %v3113 = vunpack.c.l.b16 %v2426
    %v3114 = vunpack.c.h.b16 %v2426
    %v3115 = vunpack.c.l.b16 %v2427
    %v3116 = vunpack.c.h.b16 %v2427
    %v3117 = vunpack.c.l.b16 %v2428
    %v3118 = vunpack.c.h.b16 %v2428
    %v3119 = vunpack.c.l.b16 %v2429
    %v3120 = vunpack.c.h.b16 %v2429
    %v3121 = vunpack.c.l.b16 %v2430
    %v3122 = vunpack.c.h.b16 %v2430
    %v3123 = vunpack.c.l.b16 %v2431
    %v3124 = vunpack.c.h.b16 %v2431
    %v3125 = vunpack.c.l.b16 %v2432
    %v3126 = vunpack.c.h.b16 %v2432
    %v3127 = vunpack.c.l.b16 %v2433
    %v3128 = vunpack.c.h.b16 %v2433
    %v3129 = vunpack.c.l.b16 %v2434
    %v3130 = vunpack.c.h.b16 %v2434
    %v3131 = vunpack.c.l.b16 %v2435
    %v3132 = vunpack.c.h.b16 %v2435
    %v3133 = vunpack.c.l.b16 %v2436
    %v3134 = vunpack.c.h.b16 %v2436
    %v3135 = vunpack.c.l.b16 %v2437
    %v3136 = vunpack.c.h.b16 %v2437
    %v3137 = vunpack.c.l.b16 %v2438
    %v3138 = vunpack.c.h.b16 %v2438
    %v3139 = vunpack.c.l.b16 %v2439
    %v3140 = vunpack.c.h.b16 %v2439
    %v3141 = vunpack.c.l.b16 %v2440
    %v3142 = vunpack.c.h.b16 %v2440
    %v3143 = vunpack.c.l.b16 %v2441
    %v3144 = vunpack.c.h.b16 %v2441
    %v3145 = vunpack.c.l.b16 %v2442
    %v3146 = vunpack.c.h.b16 %v2442
    %v3147 = vunpack.c.l.b16 %v2443
    %v3148 = vunpack.c.h.b16 %v2443
    %v3149 = vunpack.c.l.b16 %v2444
    %v3150 = vunpack.c.h.b16 %v2444
    %v3151 = vunpack.c.l.b16 %v2445
    %v3152 = vunpack.c.h.b16 %v2445
    %v3153 = vunpack.c.l.b16 %v2446
    %v3154 = vunpack.c.h.b16 %v2446
    %v3155 = vunpack.c.l.b16 %v2447
    %v3156 = vunpack.c.h.b16 %v2447
    %v3157 = vunpack.c.l.b16 %v2448
    %v3158 = vunpack.c.h.b16 %v2448
    %v3159 = vunpack.c.l.b16 %v2449
    %v3160 = vunpack.c.h.b16 %v2449
    %v3161 = vunpack.c.l.b16 %v2450
    %v3162 = vunpack.c.h.b16 %v2450
    %v3163 = vunpack.c.l.b16 %v2451
    %v3164 = vunpack.c.h.b16 %v2451
    %v3165 = vunpack.c.l.b16 %v2452
    %v3166 = vunpack.c.h.b16 %v2452
    %v3167 = vunpack.c.l.b16 %v2453
    %v3168 = vunpack.c.h.b16 %v2453
    %v3169 = vunpack.c.l.b16 %v2454
    %v3170 = vunpack.c.h.b16 %v2454
    %v3171 = vunpack.c.l.b16 %v2455
    %v3172 = vunpack.c.h.b16 %v2455
    %v3173 = vunpack.c.l.b16 %v2456
    %v3174 = vunpack.c.h.b16 %v2456
    %v3175 = vunpack.c.l.b16 %v2457
    %v3176 = vunpack.c.h.b16 %v2457
    %v3177 = vunpack.c.l.b16 %v2458
    %v3178 = vunpack.c.h.b16 %v2458
    %v3179 = vunpack.c.l.b16 %v2459
    %v3180 = vunpack.c.h.b16 %v2459
    %v3181 = vunpack.c.l.b16 %v2460
    %v3182 = vunpack.c.h.b16 %v2460
    %v3183 = vunpack.c.l.b16 %v2461
    %v3184 = vunpack.c.h.b16 %v2461
    %v3185 = vunpack.c.l.b16 %v2462
    %v3186 = vunpack.c.h.b16 %v2462
    %v3187 = vunpack.c.l.b16 %v2463
    %v3188 = vunpack.c.h.b16 %v2463
    %v3189 = vunpack.c.l.b16 %v2464
    %v3190 = vunpack.c.h.b16 %v2464
    %v3191 = vunpack.c.l.b16 %v2465
    %v3192 = vunpack.c.h.b16 %v2465
    %v3193 = vunpack.c.l.b16 %v2466
    %v3194 = vunpack.c.h.b16 %v2466
    %v3195 = vunpack.c.l.b16 %v2467
    %v3196 = vunpack.c.h.b16 %v2467
    %v3197 = vunpack.c.l.b16 %v2468
    %v3198 = vunpack.c.h.b16 %v2468
    %v3199 = vunpack.c.l.b16 %v2469
    %v3200 = vunpack.c.h.b16 %v2469
    %v3201 = vunpack.c.l.b16 %v2470
    %v3202 = vunpack.c.h.b16 %v2470
    %v3203 = vunpack.c.l.b16 %v2471
    %v3204 = vunpack.c.h.b16 %v2471
    %v3205 = vunpack.c.l.b16 %v2472
    %v3206 = vunpack.c.h.b16 %v2472
    %v3207 = vunpack.c.l.b16 %v2473
    %v3208 = vunpack.c.h.b16 %v2473
    %v3209 = vunpack.c.l.b16 %v2474
    %v3210 = vunpack.c.h.b16 %v2474
    %v3211 = vunpack.c.l.b16 %v2475
    %v3212 = vunpack.c.h.b16 %v2475
    %v3213 = vunpack.c.l.b16 %v2476
    %v3214 = vunpack.c.h.b16 %v2476
    %v3215 = vunpack.c.l.b16 %v2477
    %v3216 = vunpack.c.h.b16 %v2477
    %v3217 = vunpack.c.l.b16 %v2478
    %v3218 = vunpack.c.h.b16 %v2478
    %v3219 = vunpack.c.l.b16 %v2479
    %v3220 = vunpack.c.h.b16 %v2479
    %v3221 = vunpack.c.l.b16 %v2480
    %v3222 = vunpack.c.h.b16 %v2480
    %v3223 = vunpack.c.l.b16 %v2481
    %v3224 = vunpack.c.h.b16 %v2481
    %v3225 = vunpack.c.l.b16 %v2482
    %v3226 = vunpack.c.h.b16 %v2482
    %v3227 = vunpack.c.l.b16 %v2483
    %v3228 = vunpack.c.h.b16 %v2483
    %v3229 = vunpack.c.l.b16 %v2484
    %v3230 = vunpack.c.h.b16 %v2484
    %v3231 = vunpack.c.l.b16 %v2485
    %v3232 = vunpack.c.h.b16 %v2485
    %v3233 = vunpack.c.l.b16 %v2486
    %v3234 = vunpack.c.h.b16 %v2486
    %v3235 = vunpack.c.l.b16 %v2487
    %v3236 = vunpack.c.h.b16 %v2487
    %v3237 = vunpack.c.l.b16 %v2488
    %v3238 = vunpack.c.h.b16 %v2488
    %v3239 = vunpack.c.l.b16 %v2489
    %v3240 = vunpack.c.h.b16 %v2489
    %v3241 = vunpack.c.l.b16 %v2490
    %v3242 = vunpack.c.h.b16 %v2490
    %v3243 = vunpack.c.l.b16 %v2491
    %v3244 = vunpack.c.h.b16 %v2491
    %v3245 = vunpack.c.l.b16 %v2492
    %v3246 = vunpack.c.h.b16 %v2492
    %v3247 = vunpack.c.l.b16 %v2493
    %v3248 = vunpack.c.h.b16 %v2493
    %v3249 = vunpack.c.l.b16 %v2494
    %v3250 = vunpack.c.h.b16 %v2494
    %v3251 = vunpack.c.l.b16 %v2495
    %v3252 = vunpack.c.h.b16 %v2495
    %v3253 = vunpack.c.l.b16 %v2496
    %v3254 = vunpack.c.h.b16 %v2496
    %v3255 = vunpack.c.l.b16 %v2497
    %v3256 = vunpack.c.h.b16 %v2497
    %v3257 = vunpack.c.l.b16 %v2498
    %v3258 = vunpack.c.h.b16 %v2498
    %v3259 = vunpack.c.l.b16 %v2499
    %v3260 = vunpack.c.h.b16 %v2499
    %v3261 = vunpack.c.l.b16 %v2500
    %v3262 = vunpack.c.h.b16 %v2500
    %v3263 = vunpack.c.l.b16 %v2501
    %v3264 = vunpack.c.h.b16 %v2501
    %v3265 = vunpack.c.l.b16 %v2502
    %v3266 = vunpack.c.h.b16 %v2502
    %v3267 = vunpack.c.l.b16 %v2503
    %v3268 = vunpack.c.h.b16 %v2503
    %v3269 = vunpack.c.l.b16 %v2504
    %v3270 = vunpack.c.h.b16 %v2504
    %v3271 = vunpack.c.l.b16 %v2505
    %v3272 = vunpack.c.h.b16 %v2505
    %v3273 = vunpack.c.l.b16 %v2506
    %v3274 = vunpack.c.h.b16 %v2506
    %v3275 = vpack.c.b16 %v2767, %v2763
    %v3276 = vpack.c.b16 %v2768, %v2764
    %v3277 = vpack.c.b16 %v2769, %v2765
    %v3278 = vpack.c.b16 %v2770, %v2766
    %v3279 = vpack.c.b16 %v2775, %v2771
    %v3280 = vpack.c.b16 %v2776, %v2772
    %v3281 = vpack.c.b16 %v2777, %v2773
    %v3282 = vpack.c.b16 %v2778, %v2774
    %v3283 = vpack.c.b16 %v2783, %v2779
    %v3284 = vpack.c.b16 %v2784, %v2780
    %v3285 = vpack.c.b16 %v2785, %v2781
    %v3286 = vpack.c.b16 %v2786, %v2782
    %v3287 = vpack.c.b16 %v2791, %v2787
    %v3288 = vpack.c.b16 %v2792, %v2788
    %v3289 = vpack.c.b16 %v2793, %v2789
    %v3290 = vpack.c.b16 %v2794, %v2790
    %v3291 = vpack.c.b16 %v2799, %v2795
    %v3292 = vpack.c.b16 %v2800, %v2796
    %v3293 = vpack.c.b16 %v2801, %v2797
    %v3294 = vpack.c.b16 %v2802, %v2798
    %v3295 = vpack.c.b16 %v2807, %v2803
    %v3296 = vpack.c.b16 %v2808, %v2804
    %v3297 = vpack.c.b16 %v2809, %v2805
    %v3298 = vpack.c.b16 %v2810, %v2806
    %v3299 = vpack.c.b16 %v2815, %v2811
    %v3300 = vpack.c.b16 %v2816, %v2812
    %v3301 = vpack.c.b16 %v2817, %v2813
    %v3302 = vpack.c.b16 %v2818, %v2814
    %v3303 = vpack.c.b16 %v2823, %v2819
    %v3304 = vpack.c.b16 %v2824, %v2820
    %v3305 = vpack.c.b16 %v2825, %v2821
    %v3306 = vpack.c.b16 %v2826, %v2822
    %v3307 = vpack.c.b16 %v2831, %v2827
    %v3308 = vpack.c.b16 %v2832, %v2828
    %v3309 = vpack.c.b16 %v2833, %v2829
    %v3310 = vpack.c.b16 %v2834, %v2830
    %v3311 = vpack.c.b16 %v2839, %v2835
    %v3312 = vpack.c.b16 %v2840, %v2836
    %v3313 = vpack.c.b16 %v2841, %v2837
    %v3314 = vpack.c.b16 %v2842, %v2838
    %v3315 = vpack.c.b16 %v2847, %v2843
    %v3316 = vpack.c.b16 %v2848, %v2844
    %v3317 = vpack.c.b16 %v2849, %v2845
    %v3318 = vpack.c.b16 %v2850, %v2846
    %v3319 = vpack.c.b16 %v2855, %v2851
    %v3320 = vpack.c.b16 %v2856, %v2852
    %v3321 = vpack.c.b16 %v2857, %v2853
    %v3322 = vpack.c.b16 %v2858, %v2854
    %v3323 = vpack.c.b16 %v2863, %v2859
    %v3324 = vpack.c.b16 %v2864, %v2860
    %v3325 = vpack.c.b16 %v2865, %v2861
    %v3326 = vpack.c.b16 %v2866, %v2862
    %v3327 = vpack.c.b16 %v2871, %v2867
    %v3328 = vpack.c.b16 %v2872, %v2868
    %v3329 = vpack.c.b16 %v2873, %v2869
    %v3330 = vpack.c.b16 %v2874, %v2870
    %v3331 = vpack.c.b16 %v2879, %v2875
    %v3332 = vpack.c.b16 %v2880, %v2876
    %v3333 = vpack.c.b16 %v2881, %v2877
    %v3334 = vpack.c.b16 %v2882, %v2878
    %v3335 = vpack.c.b16 %v2887, %v2883
    %v3336 = vpack.c.b16 %v2888, %v2884
    %v3337 = vpack.c.b16 %v2889, %v2885
    %v3338 = vpack.c.b16 %v2890, %v2886
    %v3339 = vpack.c.b16 %v2895, %v2891
    %v3340 = vpack.c.b16 %v2896, %v2892
    %v3341 = vpack.c.b16 %v2897, %v2893
    %v3342 = vpack.c.b16 %v2898, %v2894
    %v3343 = vpack.c.b16 %v2903, %v2899
    %v3344 = vpack.c.b16 %v2904, %v2900
    %v3345 = vpack.c.b16 %v2905, %v2901
    %v3346 = vpack.c.b16 %v2906, %v2902
    %v3347 = vpack.c.b16 %v2911, %v2907
    %v3348 = vpack.c.b16 %v2912, %v2908
    %v3349 = vpack.c.b16 %v2913, %v2909
    %v3350 = vpack.c.b16 %v2914, %v2910
    %v3351 = vpack.c.b16 %v2919, %v2915
    %v3352 = vpack.c.b16 %v2920, %v2916
    %v3353 = vpack.c.b16 %v2921, %v2917
    %v3354 = vpack.c.b16 %v2922, %v2918
    %v3355 = vpack.c.b16 %v2927, %v2923
    %v3356 = vpack.c.b16 %v2928, %v2924
    %v3357 = vpack.c.b16 %v2929, %v2925
    %v3358 = vpack.c.b16 %v2930, %v2926
    %v3359 = vpack.c.b16 %v2935, %v2931
    %v3360 = vpack.c.b16 %v2936, %v2932
    %v3361 = vpack.c.b16 %v2937, %v2933
    %v3362 = vpack.c.b16 %v2938, %v2934
    %v3363 = vpack.c.b16 %v2943, %v2939
    %v3364 = vpack.c.b16 %v2944, %v2940
    %v3365 = vpack.c.b16 %v2945, %v2941
    %v3366 = vpack.c.b16 %v2946, %v2942
    %v3367 = vpack.c.b16 %v2951, %v2947
    %v3368 = vpack.c.b16 %v2952, %v2948
    %v3369 = vpack.c.b16 %v2953, %v2949
    %v3370 = vpack.c.b16 %v2954, %v2950
    %v3371 = vpack.c.b16 %v2959, %v2955
    %v3372 = vpack.c.b16 %v2960, %v2956
    %v3373 = vpack.c.b16 %v2961, %v2957
    %v3374 = vpack.c.b16 %v2962, %v2958
    %v3375 = vpack.c.b16 %v2967, %v2963
    %v3376 = vpack.c.b16 %v2968, %v2964
    %v3377 = vpack.c.b16 %v2969, %v2965
    %v3378 = vpack.c.b16 %v2970, %v2966
    %v3379 = vpack.c.b16 %v2975, %v2971
    %v3380 = vpack.c.b16 %v2976, %v2972
    %v3381 = vpack.c.b16 %v2977, %v2973
    %v3382 = vpack.c.b16 %v2978, %v2974
    %v3383 = vpack.c.b16 %v2983, %v2979
    %v3384 = vpack.c.b16 %v2984, %v2980
    %v3385 = vpack.c.b16 %v2985, %v2981
    %v3386 = vpack.c.b16 %v2986, %v2982
    %v3387 = vpack.c.b16 %v2991, %v2987
    %v3388 = vpack.c.b16 %v2992, %v2988
    %v3389 = vpack.c.b16 %v2993, %v2989
    %v3390 = vpack.c.b16 %v2994, %v2990
    %v3391 = vpack.c.b16 %v2999, %v2995
    %v3392 = vpack.c.b16 %v3000, %v2996
    %v3393 = vpack.c.b16 %v3001, %v2997
    %v3394 = vpack.c.b16 %v3002, %v2998
    %v3395 = vpack.c.b16 %v3007, %v3003
    %v3396 = vpack.c.b16 %v3008, %v3004
    %v3397 = vpack.c.b16 %v3009, %v3005
    %v3398 = vpack.c.b16 %v3010, %v3006
    %v3399 = vpack.c.b16 %v3015, %v3011
    %v3400 = vpack.c.b16 %v3016, %v3012
    %v3401 = vpack.c.b16 %v3017, %v3013
    %v3402 = vpack.c.b16 %v3018, %v3014
    %v3403 = vpack.c.b16 %v3023, %v3019
    %v3404 = vpack.c.b16 %v3024, %v3020
    %v3405 = vpack.c.b16 %v3025, %v3021
    %v3406 = vpack.c.b16 %v3026, %v3022
    %v3407 = vpack.c.b16 %v3031, %v3027
    %v3408 = vpack.c.b16 %v3032, %v3028
    %v3409 = vpack.c.b16 %v3033, %v3029
    %v3410 = vpack.c.b16 %v3034, %v3030
    %v3411 = vpack.c.b16 %v3039, %v3035
    %v3412 = vpack.c.b16 %v3040, %v3036
    %v3413 = vpack.c.b16 %v3041, %v3037
    %v3414 = vpack.c.b16 %v3042, %v3038
    %v3415 = vpack.c.b16 %v3047, %v3043
    %v3416 = vpack.c.b16 %v3048, %v3044
    %v3417 = vpack.c.b16 %v3049, %v3045
    %v3418 = vpack.c.b16 %v3050, %v3046
    %v3419 = vpack.c.b16 %v3055, %v3051
    %v3420 = vpack.c.b16 %v3056, %v3052
    %v3421 = vpack.c.b16 %v3057, %v3053
    %v3422 = vpack.c.b16 %v3058, %v3054
    %v3423 = vpack.c.b16 %v3063, %v3059
    %v3424 = vpack.c.b16 %v3064, %v3060
    %v3425 = vpack.c.b16 %v3065, %v3061
    %v3426 = vpack.c.b16 %v3066, %v3062
    %v3427 = vpack.c.b16 %v3071, %v3067
    %v3428 = vpack.c.b16 %v3072, %v3068
    %v3429 = vpack.c.b16 %v3073, %v3069
    %v3430 = vpack.c.b16 %v3074, %v3070
    %v3431 = vpack.c.b16 %v3079, %v3075
    %v3432 = vpack.c.b16 %v3080, %v3076
    %v3433 = vpack.c.b16 %v3081, %v3077
    %v3434 = vpack.c.b16 %v3082, %v3078
    %v3435 = vpack.c.b16 %v3087, %v3083
    %v3436 = vpack.c.b16 %v3088, %v3084
    %v3437 = vpack.c.b16 %v3089, %v3085
    %v3438 = vpack.c.b16 %v3090, %v3086
    %v3439 = vpack.c.b16 %v3095, %v3091
    %v3440 = vpack.c.b16 %v3096, %v3092
    %v3441 = vpack.c.b16 %v3097, %v3093
    %v3442 = vpack.c.b16 %v3098, %v3094
    %v3443 = vpack.c.b16 %v3103, %v3099
    %v3444 = vpack.c.b16 %v3104, %v3100
    %v3445 = vpack.c.b16 %v3105, %v3101
    %v3446 = vpack.c.b16 %v3106, %v3102
    %v3447 = vpack.c.b16 %v3111, %v3107
    %v3448 = vpack.c.b16 %v3112, %v3108
    %v3449 = vpack.c.b16 %v3113, %v3109
    %v3450 = vpack.c.b16 %v3114, %v3110
    %v3451 = vpack.c.b16 %v3119, %v3115
    %v3452 = vpack.c.b16 %v3120, %v3116
    %v3453 = vpack.c.b16 %v3121, %v3117
    %v3454 = vpack.c.b16 %v3122, %v3118
    %v3455 = vpack.c.b16 %v3127, %v3123
    %v3456 = vpack.c.b16 %v3128, %v3124
    %v3457 = vpack.c.b16 %v3129, %v3125
    %v3458 = vpack.c.b16 %v3130, %v3126
    %v3459 = vpack.c.b16 %v3135, %v3131
    %v3460 = vpack.c.b16 %v3136, %v3132
    %v3461 = vpack.c.b16 %v3137, %v3133
    %v3462 = vpack.c.b16 %v3138, %v3134
    %v3463 = vpack.c.b16 %v3143, %v3139
    %v3464 = vpack.c.b16 %v3144, %v3140
    %v3465 = vpack.c.b16 %v3145, %v3141
    %v3466 = vpack.c.b16 %v3146, %v3142
    %v3467 = vpack.c.b16 %v3151, %v3147
    %v3468 = vpack.c.b16 %v3152, %v3148
    %v3469 = vpack.c.b16 %v3153, %v3149
    %v3470 = vpack.c.b16 %v3154, %v3150
    %v3471 = vpack.c.b16 %v3159, %v3155
    %v3472 = vpack.c.b16 %v3160, %v3156
    %v3473 = vpack.c.b16 %v3161, %v3157
    %v3474 = vpack.c.b16 %v3162, %v3158
    %v3475 = vpack.c.b16 %v3167, %v3163
    %v3476 = vpack.c.b16 %v3168, %v3164
    %v3477 = vpack.c.b16 %v3169, %v3165
    %v3478 = vpack.c.b16 %v3170, %v3166
    %v3479 = vpack.c.b16 %v3175, %v3171
    %v3480 = vpack.c.b16 %v3176, %v3172
    %v3481 = vpack.c.b16 %v3177, %v3173
    %v3482 = vpack.c.b16 %v3178, %v3174
    %v3483 = vpack.c.b16 %v3183, %v3179
    %v3484 = vpack.c.b16 %v3184, %v3180
    %v3485 = vpack.c.b16 %v3185, %v3181
    %v3486 = vpack.c.b16 %v3186, %v3182
    %v3487 = vpack.c.b16 %v3191, %v3187
    %v3488 = vpack.c.b16 %v3192, %v3188
    %v3489 = vpack.c.b16 %v3193, %v3189
    %v3490 = vpack.c.b16 %v3194, %v3190
    %v3491 = vpack.c.b16 %v3199, %v3195
    %v3492 = vpack.c.b16 %v3200, %v3196
    %v3493 = vpack.c.b16 %v3201, %v3197
    %v3494 = vpack.c.b16 %v3202, %v3198
    %v3495 = vpack.c.b16 %v3207, %v3203
    %v3496 = vpack.c.b16 %v3208, %v3204
    %v3497 = vpack.c.b16 %v3209, %v3205
    %v3498 = vpack.c.b16 %v3210, %v3206
    %v3499 = vpack.c.b16 %v3215, %v3211
    %v3500 = vpack.c.b16 %v3216, %v3212
    %v3501 = vpack.c.b16 %v3217, %v3213
    %v3502 = vpack.c.b16 %v3218, %v3214
    %v3503 = vpack.c.b16 %v3223, %v3219
    %v3504 = vpack.c.b16 %v3224, %v3220
    %v3505 = vpack.c.b16 %v3225, %v3221
    %v3506 = vpack.c.b16 %v3226, %v3222
    %v3507 = vpack.c.b16 %v3231, %v3227
    %v3508 = vpack.c.b16 %v3232, %v3228
    %v3509 = vpack.c.b16 %v3233, %v3229
    %v3510 = vpack.c.b16 %v3234, %v3230
    %v3511 = vpack.c.b16 %v3239, %v3235
    %v3512 = vpack.c.b16 %v3240, %v3236
    %v3513 = vpack.c.b16 %v3241, %v3237
    %v3514 = vpack.c.b16 %v3242, %v3238
    %v3515 = vpack.c.b16 %v3247, %v3243
    %v3516 = vpack.c.b16 %v3248, %v3244
    %v3517 = vpack.c.b16 %v3249, %v3245
    %v3518 = vpack.c.b16 %v3250, %v3246
    %v3519 = vpack.c.b16 %v3255, %v3251
    %v3520 = vpack.c.b16 %v3256, %v3252
    %v3521 = vpack.c.b16 %v3257, %v3253
    %v3522 = vpack.c.b16 %v3258, %v3254
    %v3523 = vpack.c.b16 %v3263, %v3259
    %v3524 = vpack.c.b16 %v3264, %v3260
    %v3525 = vpack.c.b16 %v3265, %v3261
    %v3526 = vpack.c.b16 %v3266, %v3262
    %v3527 = vpack.c.b16 %v3271, %v3267
    %v3528 = vpack.c.b16 %v3272, %v3268
    %v3529 = vpack.c.b16 %v3273, %v3269
    %v3530 = vpack.c.b16 %v3274, %v3270
    %3787 = vmatprep.subr.bf16.mxu0 %v3276
    %3788 = vmatpush1.bf16.msra.mxu0 %v3275
    %3789 = vmatprep.subr.bf16.mxu0 %v3280
    %3790 = vmatpush1.bf16.msra.mxu0 %v3279
    %3791 = vmatprep.subr.bf16.mxu0 %v3284
    %3792 = vmatpush1.bf16.msra.mxu0 %v3283
    %3793 = vmatprep.subr.bf16.mxu0 %v3288
    %3794 = vmatpush1.bf16.msra.mxu0 %v3287
    %3795 = vmatprep.subr.bf16.mxu0 %v3292
    %3796 = vmatpush1.bf16.msra.mxu0 %v3291
    %3797 = vmatprep.subr.bf16.mxu0 %v3296
    %3798 = vmatpush1.bf16.msra.mxu0 %v3295
    %3799 = vmatprep.subr.bf16.mxu0 %v3300
    %3800 = vmatpush1.bf16.msra.mxu0 %v3299
    %3801 = vmatprep.subr.bf16.mxu0 %v3304
    %3802 = vmatpush1.bf16.msra.mxu0 %v3303
    %3803 = vmatprep.subr.bf16.mxu0 %v3308
    %3804 = vmatpush1.bf16.msra.mxu0 %v3307
    %3805 = vmatprep.subr.bf16.mxu0 %v3312
    %3806 = vmatpush1.bf16.msra.mxu0 %v3311
    %3807 = vmatprep.subr.bf16.mxu0 %v3316
    %3808 = vmatpush1.bf16.msra.mxu0 %v3315
    %3809 = vmatprep.subr.bf16.mxu0 %v3320
    %3810 = vmatpush1.bf16.msra.mxu0 %v3319
    %3811 = vmatprep.subr.bf16.mxu0 %v3324
    %3812 = vmatpush1.bf16.msra.mxu0 %v3323
    %3813 = vmatprep.subr.bf16.mxu0 %v3328
    %3814 = vmatpush1.bf16.msra.mxu0 %v3327
    %3815 = vmatprep.subr.bf16.mxu0 %v3332
    %3816 = vmatpush1.bf16.msra.mxu0 %v3331
    %3817 = vmatprep.subr.bf16.mxu0 %v3336
    %3818 = vmatpush1.bf16.msra.mxu0 %v3335
    %3819 = vmatprep.mubr.bf16.mxu0 %v2172
    %3820 = vmatmul.mubr.bf16.gmra.mrb[0].mxu0 %v2171
    %v3821 = vpop.f32.mrb[0].mxu0
    %v3822 = vadd.f32 0.0, %v3821
    %v3823 = vpop.f32.mrb[0].mxu0
    %v3824 = vadd.f32 0.0, %v3823
    %v3825 = vpop.f32.mrb[0].mxu0
    %v3826 = vadd.f32 0.0, %v3825
    %v3827 = vpop.f32.mrb[0].mxu0
    %v3828 = vadd.f32 0.0, %v3827
    %3829 = vmatprep.mubr.bf16.mxu0 %v2180
    %3830 = vmatmul.mubr.bf16.gmra.mrb[0].mxu0 %v2179
    %v3831 = vpop.f32.mrb[0].mxu0
    %v3832 = vadd.f32 0.0, %v3831
    %v3833 = vpop.f32.mrb[0].mxu0
    %v3834 = vadd.f32 0.0, %v3833
    %v3835 = vpop.f32.mrb[0].mxu0
    %v3836 = vadd.f32 0.0, %v3835
    %v3837 = vpop.f32.mrb[0].mxu0
    %v3838 = vadd.f32 0.0, %v3837
    %3839 = vmatprep.mubr.bf16.mxu0 %v2188
    %3840 = vmatmul.mubr.bf16.gmra.mrb[0].mxu0 %v2187
    %v3841 = vpop.f32.mrb[0].mxu0
    %v3842 = vadd.f32 0.0, %v3841
    %v3843 = vpop.f32.mrb[0].mxu0
    %v3844 = vadd.f32 0.0, %v3843
    %v3845 = vpop.f32.mrb[0].mxu0
    %v3846 = vadd.f32 0.0, %v3845
    %v3847 = vpop.f32.mrb[0].mxu0
    %v3848 = vadd.f32 0.0, %v3847
    %3849 = vmatprep.mubr.bf16.mxu0 %v2196
    %3850 = vmatmul.mubr.bf16.gmra.mrb[0].mxu0 %v2195
    %v3851 = vpop.f32.mrb[0].mxu0
    %v3852 = vadd.f32 0.0, %v3851
    %v3853 = vpop.f32.mrb[0].mxu0
    %v3854 = vadd.f32 0.0, %v3853
    %v3855 = vpop.f32.mrb[0].mxu0
    %v3856 = vadd.f32 0.0, %v3855
    %v3857 = vpop.f32.mrb[0].mxu0
    %v3858 = vadd.f32 0.0, %v3857
    %3859 = vmatprep.mubr.bf16.mxu0 %v2204
    %3860 = vmatmul.mubr.bf16.gmra.mrb[0].mxu0 %v2203
    %v3861 = vpop.f32.mrb[0].mxu0
    %v3862 = vadd.f32 0.0, %v3861
    %v3863 = vpop.f32.mrb[0].mxu0
    %v3864 = vadd.f32 0.0, %v3863
    %v3865 = vpop.f32.mrb[0].mxu0
    %v3866 = vadd.f32 0.0, %v3865
    %v3867 = vpop.f32.mrb[0].mxu0
    %v3868 = vadd.f32 0.0, %v3867
    %3869 = vmatprep.mubr.bf16.mxu0 %v2212
    %3870 = vmatmul.mubr.bf16.gmra.mrb[0].mxu0 %v2211
    %v3871 = vpop.f32.mrb[0].mxu0
    %v3872 = vadd.f32 0.0, %v3871
    %v3873 = vpop.f32.mrb[0].mxu0
    %v3874 = vadd.f32 0.0, %v3873
    %v3875 = vpop.f32.mrb[0].mxu0
    %v3876 = vadd.f32 0.0, %v3875
    %v3877 = vpop.f32.mrb[0].mxu0
    %v3878 = vadd.f32 0.0, %v3877
    %3879 = vmatprep.mubr.bf16.mxu0 %v2220
    %3880 = vmatmul.mubr.bf16.gmra.mrb[0].mxu0 %v2219
    %v3881 = vpop.f32.mrb[0].mxu0
    %v3882 = vadd.f32 0.0, %v3881
    %v3883 = vpop.f32.mrb[0].mxu0
    %v3884 = vadd.f32 0.0, %v3883
    %v3885 = vpop.f32.mrb[0].mxu0
    %v3886 = vadd.f32 0.0, %v3885
    %v3887 = vpop.f32.mrb[0].mxu0
    %v3888 = vadd.f32 0.0, %v3887
    %3889 = vmatprep.mubr.bf16.mxu0 %v2228
    %3890 = vmatmul.mubr.bf16.gmra.mrb[0].mxu0 %v2227
    %v3891 = vpop.f32.mrb[0].mxu0
    %v3892 = vadd.f32 0.0, %v3891
    %v3893 = vpop.f32.mrb[0].mxu0
    %v3894 = vadd.f32 0.0, %v3893
    %v3895 = vpop.f32.mrb[0].mxu0
    %v3896 = vadd.f32 0.0, %v3895
    %v3897 = vpop.f32.mrb[0].mxu0
    %v3898 = vadd.f32 0.0, %v3897
    %3899 = vdwg.mxu0
    %3900 = vmatprep.subr.bf16.mxu0 %v3340
    %3901 = vmatpush1.bf16.msra.mxu0 %v3339
    %3902 = vmatprep.subr.bf16.mxu0 %v3344
    %3903 = vmatpush1.bf16.msra.mxu0 %v3343
    %3904 = vmatprep.subr.bf16.mxu0 %v3348
    %3905 = vmatpush1.bf16.msra.mxu0 %v3347
    %3906 = vmatprep.subr.bf16.mxu0 %v3352
    %3907 = vmatpush1.bf16.msra.mxu0 %v3351
    %3908 = vmatprep.subr.bf16.mxu0 %v3356
    %3909 = vmatpush1.bf16.msra.mxu0 %v3355
    %3910 = vmatprep.subr.bf16.mxu0 %v3360
    %3911 = vmatpush1.bf16.msra.mxu0 %v3359
    %3912 = vmatprep.subr.bf16.mxu0 %v3364
    %3913 = vmatpush1.bf16.msra.mxu0 %v3363
    %3914 = vmatprep.subr.bf16.mxu0 %v3368
    %3915 = vmatpush1.bf16.msra.mxu0 %v3367
    %3916 = vmatprep.subr.bf16.mxu0 %v3372
    %3917 = vmatpush1.bf16.msra.mxu0 %v3371
    %3918 = vmatprep.subr.bf16.mxu0 %v3376
    %3919 = vmatpush1.bf16.msra.mxu0 %v3375
    %3920 = vmatprep.subr.bf16.mxu0 %v3380
    %3921 = vmatpush1.bf16.msra.mxu0 %v3379
    %3922 = vmatprep.subr.bf16.mxu0 %v3384
    %3923 = vmatpush1.bf16.msra.mxu0 %v3383
    %3924 = vmatprep.subr.bf16.mxu0 %v3388
    %3925 = vmatpush1.bf16.msra.mxu0 %v3387
    %3926 = vmatprep.subr.bf16.mxu0 %v3392
    %3927 = vmatpush1.bf16.msra.mxu0 %v3391
    %3928 = vmatprep.subr.bf16.mxu0 %v3396
    %3929 = vmatpush1.bf16.msra.mxu0 %v3395
    %3930 = vmatprep.subr.bf16.mxu0 %v3400
    %3931 = vmatpush1.bf16.msra.mxu0 %v3399
    %3932 = vmatprep.mubr.bf16.mxu0 %v2174
    %3933 = vmatmul.mubr.bf16.gmra.mrb[0].mxu0 %v2173
    %v3934 = vpop.f32.mrb[0].mxu0
    %v3935 = vadd.f32 %v3822, %v3934
    %v3936 = vpop.f32.mrb[0].mxu0
    %v3937 = vadd.f32 %v3824, %v3936
    %v3938 = vpop.f32.mrb[0].mxu0
    %v3939 = vadd.f32 %v3826, %v3938
    %v3940 = vpop.f32.mrb[0].mxu0
    %v3941 = vadd.f32 %v3828, %v3940
    %3942 = vmatprep.mubr.bf16.mxu0 %v2182
    %3943 = vmatmul.mubr.bf16.gmra.mrb[0].mxu0 %v2181
    %v3944 = vpop.f32.mrb[0].mxu0
    %v3945 = vadd.f32 %v3832, %v3944
    %v3946 = vpop.f32.mrb[0].mxu0
    %v3947 = vadd.f32 %v3834, %v3946
    %v3948 = vpop.f32.mrb[0].mxu0
    %v3949 = vadd.f32 %v3836, %v3948
    %v3950 = vpop.f32.mrb[0].mxu0
    %v3951 = vadd.f32 %v3838, %v3950
    %3952 = vmatprep.mubr.bf16.mxu0 %v2190
    %3953 = vmatmul.mubr.bf16.gmra.mrb[0].mxu0 %v2189
    %v3954 = vpop.f32.mrb[0].mxu0
    %v3955 = vadd.f32 %v3842, %v3954
    %v3956 = vpop.f32.mrb[0].mxu0
    %v3957 = vadd.f32 %v3844, %v3956
    %v3958 = vpop.f32.mrb[0].mxu0
    %v3959 = vadd.f32 %v3846, %v3958
    %v3960 = vpop.f32.mrb[0].mxu0
    %v3961 = vadd.f32 %v3848, %v3960
    %3962 = vmatprep.mubr.bf16.mxu0 %v2198
    %3963 = vmatmul.mubr.bf16.gmra.mrb[0].mxu0 %v2197
    %v3964 = vpop.f32.mrb[0].mxu0
    %v3965 = vadd.f32 %v3852, %v3964
    %v3966 = vpop.f32.mrb[0].mxu0
    %v3967 = vadd.f32 %v3854, %v3966
    %v3968 = vpop.f32.mrb[0].mxu0
    %v3969 = vadd.f32 %v3856, %v3968
    %v3970 = vpop.f32.mrb[0].mxu0
    %v3971 = vadd.f32 %v3858, %v3970
    %3972 = vmatprep.mubr.bf16.mxu0 %v2206
    %3973 = vmatmul.mubr.bf16.gmra.mrb[0].mxu0 %v2205
    %v3974 = vpop.f32.mrb[0].mxu0
    %v3975 = vadd.f32 %v3862, %v3974
    %v3976 = vpop.f32.mrb[0].mxu0
    %v3977 = vadd.f32 %v3864, %v3976
    %v3978 = vpop.f32.mrb[0].mxu0
    %v3979 = vadd.f32 %v3866, %v3978
    %v3980 = vpop.f32.mrb[0].mxu0
    %v3981 = vadd.f32 %v3868, %v3980
    %3982 = vmatprep.mubr.bf16.mxu0 %v2214
    %3983 = vmatmul.mubr.bf16.gmra.mrb[0].mxu0 %v2213
    %v3984 = vpop.f32.mrb[0].mxu0
    %v3985 = vadd.f32 %v3872, %v3984
    %v3986 = vpop.f32.mrb[0].mxu0
    %v3987 = vadd.f32 %v3874, %v3986
    %v3988 = vpop.f32.mrb[0].mxu0
    %v3989 = vadd.f32 %v3876, %v3988
    %v3990 = vpop.f32.mrb[0].mxu0
    %v3991 = vadd.f32 %v3878, %v3990
    %3992 = vmatprep.mubr.bf16.mxu0 %v2222
    %3993 = vmatmul.mubr.bf16.gmra.mrb[0].mxu0 %v2221
    %v3994 = vpop.f32.mrb[0].mxu0
    %v3995 = vadd.f32 %v3882, %v3994
    %v3996 = vpop.f32.mrb[0].mxu0
    %v3997 = vadd.f32 %v3884, %v3996
    %v3998 = vpop.f32.mrb[0].mxu0
    %v3999 = vadd.f32 %v3886, %v3998
    %v4000 = vpop.f32.mrb[0].mxu0
    %v4001 = vadd.f32 %v3888, %v4000
    %4002 = vmatprep.mubr.bf16.mxu0 %v2230
    %4003 = vmatmul.mubr.bf16.gmra.mrb[0].mxu0 %v2229
    %v4004 = vpop.f32.mrb[0].mxu0
    %v4005 = vadd.f32 %v3892, %v4004
    %v4006 = vpop.f32.mrb[0].mxu0
    %v4007 = vadd.f32 %v3894, %v4006
    %v4008 = vpop.f32.mrb[0].mxu0
    %v4009 = vadd.f32 %v3896, %v4008
    %v4010 = vpop.f32.mrb[0].mxu0
    %v4011 = vadd.f32 %v3898, %v4010
    %4012 = vdwg.mxu0
    %4013 = vmatprep.subr.bf16.mxu0 %v3404
    %4014 = vmatpush1.bf16.msra.mxu0 %v3403
    %4015 = vmatprep.subr.bf16.mxu0 %v3408
    %4016 = vmatpush1.bf16.msra.mxu0 %v3407
    %4017 = vmatprep.subr.bf16.mxu0 %v3412
    %4018 = vmatpush1.bf16.msra.mxu0 %v3411
    %4019 = vmatprep.subr.bf16.mxu0 %v3416
    %4020 = vmatpush1.bf16.msra.mxu0 %v3415
    %4021 = vmatprep.subr.bf16.mxu0 %v3420
    %4022 = vmatpush1.bf16.msra.mxu0 %v3419
    %4023 = vmatprep.subr.bf16.mxu0 %v3424
    %4024 = vmatpush1.bf16.msra.mxu0 %v3423
    %4025 = vmatprep.subr.bf16.mxu0 %v3428
    %4026 = vmatpush1.bf16.msra.mxu0 %v3427
    %4027 = vmatprep.subr.bf16.mxu0 %v3432
    %4028 = vmatpush1.bf16.msra.mxu0 %v3431
    %4029 = vmatprep.subr.bf16.mxu0 %v3436
    %4030 = vmatpush1.bf16.msra.mxu0 %v3435
    %4031 = vmatprep.subr.bf16.mxu0 %v3440
    %4032 = vmatpush1.bf16.msra.mxu0 %v3439
    %4033 = vmatprep.subr.bf16.mxu0 %v3444
    %4034 = vmatpush1.bf16.msra.mxu0 %v3443
    %4035 = vmatprep.subr.bf16.mxu0 %v3448
    %4036 = vmatpush1.bf16.msra.mxu0 %v3447
    %4037 = vmatprep.subr.bf16.mxu0 %v3452
    %4038 = vmatpush1.bf16.msra.mxu0 %v3451
    %4039 = vmatprep.subr.bf16.mxu0 %v3456
    %4040 = vmatpush1.bf16.msra.mxu0 %v3455
    %4041 = vmatprep.subr.bf16.mxu0 %v3460
    %4042 = vmatpush1.bf16.msra.mxu0 %v3459
    %4043 = vmatprep.subr.bf16.mxu0 %v3464
    %4044 = vmatpush1.bf16.msra.mxu0 %v3463
    %4045 = vmatprep.mubr.bf16.mxu0 %v2176
    %4046 = vmatmul.mubr.bf16.gmra.mrb[0].mxu0 %v2175
    %v4047 = vpop.f32.mrb[0].mxu0
    %v4048 = vadd.f32 %v3935, %v4047
    %v4049 = vpop.f32.mrb[0].mxu0
    %v4050 = vadd.f32 %v3937, %v4049
    %v4051 = vpop.f32.mrb[0].mxu0
    %v4052 = vadd.f32 %v3939, %v4051
    %v4053 = vpop.f32.mrb[0].mxu0
    %v4054 = vadd.f32 %v3941, %v4053
    %4055 = vmatprep.mubr.bf16.mxu0 %v2184
    %4056 = vmatmul.mubr.bf16.gmra.mrb[0].mxu0 %v2183
    %v4057 = vpop.f32.mrb[0].mxu0
    %v4058 = vadd.f32 %v3945, %v4057
    %v4059 = vpop.f32.mrb[0].mxu0
    %v4060 = vadd.f32 %v3947, %v4059
    %v4061 = vpop.f32.mrb[0].mxu0
    %v4062 = vadd.f32 %v3949, %v4061
    %v4063 = vpop.f32.mrb[0].mxu0
    %v4064 = vadd.f32 %v3951, %v4063
    %4065 = vmatprep.mubr.bf16.mxu0 %v2192
    %4066 = vmatmul.mubr.bf16.gmra.mrb[0].mxu0 %v2191
    %v4067 = vpop.f32.mrb[0].mxu0
    %v4068 = vadd.f32 %v3955, %v4067
    %v4069 = vpop.f32.mrb[0].mxu0
    %v4070 = vadd.f32 %v3957, %v4069
    %v4071 = vpop.f32.mrb[0].mxu0
    %v4072 = vadd.f32 %v3959, %v4071
    %v4073 = vpop.f32.mrb[0].mxu0
    %v4074 = vadd.f32 %v3961, %v4073
    %4075 = vmatprep.mubr.bf16.mxu0 %v2200
    %4076 = vmatmul.mubr.bf16.gmra.mrb[0].mxu0 %v2199
    %v4077 = vpop.f32.mrb[0].mxu0
    %v4078 = vadd.f32 %v3965, %v4077
    %v4079 = vpop.f32.mrb[0].mxu0
    %v4080 = vadd.f32 %v3967, %v4079
    %v4081 = vpop.f32.mrb[0].mxu0
    %v4082 = vadd.f32 %v3969, %v4081
    %v4083 = vpop.f32.mrb[0].mxu0
    %v4084 = vadd.f32 %v3971, %v4083
    %4085 = vmatprep.mubr.bf16.mxu0 %v2208
    %4086 = vmatmul.mubr.bf16.gmra.mrb[0].mxu0 %v2207
    %v4087 = vpop.f32.mrb[0].mxu0
    %v4088 = vadd.f32 %v3975, %v4087
    %v4089 = vpop.f32.mrb[0].mxu0
    %v4090 = vadd.f32 %v3977, %v4089
    %v4091 = vpop.f32.mrb[0].mxu0
    %v4092 = vadd.f32 %v3979, %v4091
    %v4093 = vpop.f32.mrb[0].mxu0
    %v4094 = vadd.f32 %v3981, %v4093
    %4095 = vmatprep.mubr.bf16.mxu0 %v2216
    %4096 = vmatmul.mubr.bf16.gmra.mrb[0].mxu0 %v2215
    %v4097 = vpop.f32.mrb[0].mxu0
    %v4098 = vadd.f32 %v3985, %v4097
    %v4099 = vpop.f32.mrb[0].mxu0
    %v4100 = vadd.f32 %v3987, %v4099
    %v4101 = vpop.f32.mrb[0].mxu0
    %v4102 = vadd.f32 %v3989, %v4101
    %v4103 = vpop.f32.mrb[0].mxu0
    %v4104 = vadd.f32 %v3991, %v4103
    %4105 = vmatprep.mubr.bf16.mxu0 %v2224
    %4106 = vmatmul.mubr.bf16.gmra.mrb[0].mxu0 %v2223
    %v4107 = vpop.f32.mrb[0].mxu0
    %v4108 = vadd.f32 %v3995, %v4107
    %v4109 = vpop.f32.mrb[0].mxu0
    %v4110 = vadd.f32 %v3997, %v4109
    %v4111 = vpop.f32.mrb[0].mxu0
    %v4112 = vadd.f32 %v3999, %v4111
    %v4113 = vpop.f32.mrb[0].mxu0
    %v4114 = vadd.f32 %v4001, %v4113
    %4115 = vmatprep.mubr.bf16.mxu0 %v2232
    %4116 = vmatmul.mubr.bf16.gmra.mrb[0].mxu0 %v2231
    %v4117 = vpop.f32.mrb[0].mxu0
    %v4118 = vadd.f32 %v4005, %v4117
    %v4119 = vpop.f32.mrb[0].mxu0
    %v4120 = vadd.f32 %v4007, %v4119
    %v4121 = vpop.f32.mrb[0].mxu0
    %v4122 = vadd.f32 %v4009, %v4121
    %v4123 = vpop.f32.mrb[0].mxu0
    %v4124 = vadd.f32 %v4011, %v4123
    %4125 = vdwg.mxu0
    %4126 = vmatprep.subr.bf16.mxu0 %v3468
    %4127 = vmatpush1.bf16.msra.mxu0 %v3467
    %4128 = vmatprep.subr.bf16.mxu0 %v3472
    %4129 = vmatpush1.bf16.msra.mxu0 %v3471
    %4130 = vmatprep.subr.bf16.mxu0 %v3476
    %4131 = vmatpush1.bf16.msra.mxu0 %v3475
    %4132 = vmatprep.subr.bf16.mxu0 %v3480
    %4133 = vmatpush1.bf16.msra.mxu0 %v3479
    %4134 = vmatprep.subr.bf16.mxu0 %v3484
    %4135 = vmatpush1.bf16.msra.mxu0 %v3483
    %4136 = vmatprep.subr.bf16.mxu0 %v3488
    %4137 = vmatpush1.bf16.msra.mxu0 %v3487
    %4138 = vmatprep.subr.bf16.mxu0 %v3492
    %4139 = vmatpush1.bf16.msra.mxu0 %v3491
    %4140 = vmatprep.subr.bf16.mxu0 %v3496
    %4141 = vmatpush1.bf16.msra.mxu0 %v3495
    %4142 = vmatprep.subr.bf16.mxu0 %v3500
    %4143 = vmatpush1.bf16.msra.mxu0 %v3499
    %4144 = vmatprep.subr.bf16.mxu0 %v3504
    %4145 = vmatpush1.bf16.msra.mxu0 %v3503
    %4146 = vmatprep.subr.bf16.mxu0 %v3508
    %4147 = vmatpush1.bf16.msra.mxu0 %v3507
    %4148 = vmatprep.subr.bf16.mxu0 %v3512
    %4149 = vmatpush1.bf16.msra.mxu0 %v3511
    %4150 = vmatprep.subr.bf16.mxu0 %v3516
    %4151 = vmatpush1.bf16.msra.mxu0 %v3515
    %4152 = vmatprep.subr.bf16.mxu0 %v3520
    %4153 = vmatpush1.bf16.msra.mxu0 %v3519
    %4154 = vmatprep.subr.bf16.mxu0 %v3524
    %4155 = vmatpush1.bf16.msra.mxu0 %v3523
    %4156 = vmatprep.subr.bf16.mxu0 %v3528
    %4157 = vmatpush1.bf16.msra.mxu0 %v3527
    %4158 = vmatprep.mubr.bf16.mxu0 %v2178
    %4159 = vmatmul.mubr.bf16.gmra.mrb[0].mxu0 %v2177
    %v4160 = vpop.f32.mrb[0].mxu0
    %v4161 = vadd.f32 %v4048, %v4160
    %v4162 = vpop.f32.mrb[0].mxu0
    %v4163 = vadd.f32 %v4050, %v4162
    %v4164 = vpop.f32.mrb[0].mxu0
    %v4165 = vadd.f32 %v4052, %v4164
    %v4166 = vpop.f32.mrb[0].mxu0
    %v4167 = vadd.f32 %v4054, %v4166
    %4168 = vmatprep.mubr.bf16.mxu0 %v2186
    %4169 = vmatmul.mubr.bf16.gmra.mrb[0].mxu0 %v2185
    %v4170 = vpop.f32.mrb[0].mxu0
    %v4171 = vadd.f32 %v4058, %v4170
    %v4172 = vpop.f32.mrb[0].mxu0
    %v4173 = vadd.f32 %v4060, %v4172
    %v4174 = vpop.f32.mrb[0].mxu0
    %v4175 = vadd.f32 %v4062, %v4174
    %v4176 = vpop.f32.mrb[0].mxu0
    %v4177 = vadd.f32 %v4064, %v4176
    %4178 = vmatprep.mubr.bf16.mxu0 %v2194
    %4179 = vmatmul.mubr.bf16.gmra.mrb[0].mxu0 %v2193
    %v4180 = vpop.f32.mrb[0].mxu0
    %v4181 = vadd.f32 %v4068, %v4180
    %v4182 = vpop.f32.mrb[0].mxu0
    %v4183 = vadd.f32 %v4070, %v4182
    %v4184 = vpop.f32.mrb[0].mxu0
    %v4185 = vadd.f32 %v4072, %v4184
    %v4186 = vpop.f32.mrb[0].mxu0
    %v4187 = vadd.f32 %v4074, %v4186
    %4188 = vmatprep.mubr.bf16.mxu0 %v2202
    %4189 = vmatmul.mubr.bf16.gmra.mrb[0].mxu0 %v2201
    %v4190 = vpop.f32.mrb[0].mxu0
    %v4191 = vadd.f32 %v4078, %v4190
    %v4192 = vpop.f32.mrb[0].mxu0
    %v4193 = vadd.f32 %v4080, %v4192
    %v4194 = vpop.f32.mrb[0].mxu0
    %v4195 = vadd.f32 %v4082, %v4194
    %v4196 = vpop.f32.mrb[0].mxu0
    %v4197 = vadd.f32 %v4084, %v4196
    %4198 = vmatprep.mubr.bf16.mxu0 %v2210
    %4199 = vmatmul.mubr.bf16.gmra.mrb[0].mxu0 %v2209
    %v4200 = vpop.f32.mrb[0].mxu0
    %v4201 = vadd.f32 %v4088, %v4200
    %v4202 = vpop.f32.mrb[0].mxu0
    %v4203 = vadd.f32 %v4090, %v4202
    %v4204 = vpop.f32.mrb[0].mxu0
    %v4205 = vadd.f32 %v4092, %v4204
    %v4206 = vpop.f32.mrb[0].mxu0
    %v4207 = vadd.f32 %v4094, %v4206
    %4208 = vmatprep.mubr.bf16.mxu0 %v2218
    %4209 = vmatmul.mubr.bf16.gmra.mrb[0].mxu0 %v2217
    %v4210 = vpop.f32.mrb[0].mxu0
    %v4211 = vadd.f32 %v4098, %v4210
    %v4212 = vpop.f32.mrb[0].mxu0
    %v4213 = vadd.f32 %v4100, %v4212
    %v4214 = vpop.f32.mrb[0].mxu0
    %v4215 = vadd.f32 %v4102, %v4214
    %v4216 = vpop.f32.mrb[0].mxu0
    %v4217 = vadd.f32 %v4104, %v4216
    %4218 = vmatprep.mubr.bf16.mxu0 %v2226
    %4219 = vmatmul.mubr.bf16.gmra.mrb[0].mxu0 %v2225
    %v4220 = vpop.f32.mrb[0].mxu0
    %v4221 = vadd.f32 %v4108, %v4220
    %v4222 = vpop.f32.mrb[0].mxu0
    %v4223 = vadd.f32 %v4110, %v4222
    %v4224 = vpop.f32.mrb[0].mxu0
    %v4225 = vadd.f32 %v4112, %v4224
    %v4226 = vpop.f32.mrb[0].mxu0
    %v4227 = vadd.f32 %v4114, %v4226
    %4228 = vmatprep.mubr.bf16.mxu0 %v2234
    %4229 = vmatmul.mubr.bf16.gmra.mrb[0].mxu0 %v2233
    %v4230 = vpop.f32.mrb[0].mxu0
    %v4231 = vadd.f32 %v4118, %v4230
    %v4232 = vpop.f32.mrb[0].mxu0
    %v4233 = vadd.f32 %v4120, %v4232
    %v4234 = vpop.f32.mrb[0].mxu0
    %v4235 = vadd.f32 %v4122, %v4234
    %v4236 = vpop.f32.mrb[0].mxu0
    %v4237 = vadd.f32 %v4124, %v4236
    %4238 = vdwg.mxu0
    %4239 = vmatprep.subr.bf16.mxu0 %v3278
    %4240 = vmatpush1.bf16.msra.mxu0 %v3277
    %4241 = vmatprep.subr.bf16.mxu0 %v3282
    %4242 = vmatpush1.bf16.msra.mxu0 %v3281
    %4243 = vmatprep.subr.bf16.mxu0 %v3286
    %4244 = vmatpush1.bf16.msra.mxu0 %v3285
    %4245 = vmatprep.subr.bf16.mxu0 %v3290
    %4246 = vmatpush1.bf16.msra.mxu0 %v3289
    %4247 = vmatprep.subr.bf16.mxu0 %v3294
    %4248 = vmatpush1.bf16.msra.mxu0 %v3293
    %4249 = vmatprep.subr.bf16.mxu0 %v3298
    %4250 = vmatpush1.bf16.msra.mxu0 %v3297
    %4251 = vmatprep.subr.bf16.mxu0 %v3302
    %4252 = vmatpush1.bf16.msra.mxu0 %v3301
    %4253 = vmatprep.subr.bf16.mxu0 %v3306
    %4254 = vmatpush1.bf16.msra.mxu0 %v3305
    %4255 = vmatprep.subr.bf16.mxu0 %v3310
    %4256 = vmatpush1.bf16.msra.mxu0 %v3309
    %4257 = vmatprep.subr.bf16.mxu0 %v3314
    %4258 = vmatpush1.bf16.msra.mxu0 %v3313
    %4259 = vmatprep.subr.bf16.mxu0 %v3318
    %4260 = vmatpush1.bf16.msra.mxu0 %v3317
    %4261 = vmatprep.subr.bf16.mxu0 %v3322
    %4262 = vmatpush1.bf16.msra.mxu0 %v3321
    %4263 = vmatprep.subr.bf16.mxu0 %v3326
    %4264 = vmatpush1.bf16.msra.mxu0 %v3325
    %4265 = vmatprep.subr.bf16.mxu0 %v3330
    %4266 = vmatpush1.bf16.msra.mxu0 %v3329
    %4267 = vmatprep.subr.bf16.mxu0 %v3334
    %4268 = vmatpush1.bf16.msra.mxu0 %v3333
    %4269 = vmatprep.subr.bf16.mxu0 %v3338
    %4270 = vmatpush1.bf16.msra.mxu0 %v3337
    %4271 = vmatprep.mubr.bf16.mxu0 %v2172
    %4272 = vmatmul.mubr.bf16.gmra.mrb[0].mxu0 %v2171
    %v4273 = vpop.f32.mrb[0].mxu0
    %v4274 = vadd.f32 0.0, %v4273
    %v4275 = vpop.f32.mrb[0].mxu0
    %v4276 = vadd.f32 0.0, %v4275
    %v4277 = vpop.f32.mrb[0].mxu0
    %v4278 = vadd.f32 0.0, %v4277
    %v4279 = vpop.f32.mrb[0].mxu0
    %v4280 = vadd.f32 0.0, %v4279
    %4281 = vmatprep.mubr.bf16.mxu0 %v2180
    %4282 = vmatmul.mubr.bf16.gmra.mrb[0].mxu0 %v2179
    %v4283 = vpop.f32.mrb[0].mxu0
    %v4284 = vadd.f32 0.0, %v4283
    %v4285 = vpop.f32.mrb[0].mxu0
    %v4286 = vadd.f32 0.0, %v4285
    %v4287 = vpop.f32.mrb[0].mxu0
    %v4288 = vadd.f32 0.0, %v4287
    %v4289 = vpop.f32.mrb[0].mxu0
    %v4290 = vadd.f32 0.0, %v4289
    %4291 = vmatprep.mubr.bf16.mxu0 %v2188
    %4292 = vmatmul.mubr.bf16.gmra.mrb[0].mxu0 %v2187
    %v4293 = vpop.f32.mrb[0].mxu0
    %v4294 = vadd.f32 0.0, %v4293
    %v4295 = vpop.f32.mrb[0].mxu0
    %v4296 = vadd.f32 0.0, %v4295
    %v4297 = vpop.f32.mrb[0].mxu0
    %v4298 = vadd.f32 0.0, %v4297
    %v4299 = vpop.f32.mrb[0].mxu0
    %v4300 = vadd.f32 0.0, %v4299
    %4301 = vmatprep.mubr.bf16.mxu0 %v2196
    %4302 = vmatmul.mubr.bf16.gmra.mrb[0].mxu0 %v2195
    %v4303 = vpop.f32.mrb[0].mxu0
    %v4304 = vadd.f32 0.0, %v4303
    %v4305 = vpop.f32.mrb[0].mxu0
    %v4306 = vadd.f32 0.0, %v4305
    %v4307 = vpop.f32.mrb[0].mxu0
    %v4308 = vadd.f32 0.0, %v4307
    %v4309 = vpop.f32.mrb[0].mxu0
    %v4310 = vadd.f32 0.0, %v4309
    %4311 = vmatprep.mubr.bf16.mxu0 %v2204
    %4312 = vmatmul.mubr.bf16.gmra.mrb[0].mxu0 %v2203
    %v4313 = vpop.f32.mrb[0].mxu0
    %v4314 = vadd.f32 0.0, %v4313
    %v4315 = vpop.f32.mrb[0].mxu0
    %v4316 = vadd.f32 0.0, %v4315
    %v4317 = vpop.f32.mrb[0].mxu0
    %v4318 = vadd.f32 0.0, %v4317
    %v4319 = vpop.f32.mrb[0].mxu0
    %v4320 = vadd.f32 0.0, %v4319
    %4321 = vmatprep.mubr.bf16.mxu0 %v2212
    %4322 = vmatmul.mubr.bf16.gmra.mrb[0].mxu0 %v2211
    %v4323 = vpop.f32.mrb[0].mxu0
    %v4324 = vadd.f32 0.0, %v4323
    %v4325 = vpop.f32.mrb[0].mxu0
    %v4326 = vadd.f32 0.0, %v4325
    %v4327 = vpop.f32.mrb[0].mxu0
    %v4328 = vadd.f32 0.0, %v4327
    %v4329 = vpop.f32.mrb[0].mxu0
    %v4330 = vadd.f32 0.0, %v4329
    %4331 = vmatprep.mubr.bf16.mxu0 %v2220
    %4332 = vmatmul.mubr.bf16.gmra.mrb[0].mxu0 %v2219
    %v4333 = vpop.f32.mrb[0].mxu0
    %v4334 = vadd.f32 0.0, %v4333
    %v4335 = vpop.f32.mrb[0].mxu0
    %v4336 = vadd.f32 0.0, %v4335
    %v4337 = vpop.f32.mrb[0].mxu0
    %v4338 = vadd.f32 0.0, %v4337
    %v4339 = vpop.f32.mrb[0].mxu0
    %v4340 = vadd.f32 0.0, %v4339
    %4341 = vmatprep.mubr.bf16.mxu0 %v2228
    %4342 = vmatmul.mubr.bf16.gmra.mrb[0].mxu0 %v2227
    %v4343 = vpop.f32.mrb[0].mxu0
    %v4344 = vadd.f32 0.0, %v4343
    %v4345 = vpop.f32.mrb[0].mxu0
    %v4346 = vadd.f32 0.0, %v4345
    %v4347 = vpop.f32.mrb[0].mxu0
    %v4348 = vadd.f32 0.0, %v4347
    %v4349 = vpop.f32.mrb[0].mxu0
    %v4350 = vadd.f32 0.0, %v4349
    %4351 = vdwg.mxu0
    %4352 = vmatprep.subr.bf16.mxu0 %v3342
    %4353 = vmatpush1.bf16.msra.mxu0 %v3341
    %4354 = vmatprep.subr.bf16.mxu0 %v3346
    %4355 = vmatpush1.bf16.msra.mxu0 %v3345
    %4356 = vmatprep.subr.bf16.mxu0 %v3350
    %4357 = vmatpush1.bf16.msra.mxu0 %v3349
    %4358 = vmatprep.subr.bf16.mxu0 %v3354
    %4359 = vmatpush1.bf16.msra.mxu0 %v3353
    %4360 = vmatprep.subr.bf16.mxu0 %v3358
    %4361 = vmatpush1.bf16.msra.mxu0 %v3357
    %4362 = vmatprep.subr.bf16.mxu0 %v3362
    %4363 = vmatpush1.bf16.msra.mxu0 %v3361
    %4364 = vmatprep.subr.bf16.mxu0 %v3366
    %4365 = vmatpush1.bf16.msra.mxu0 %v3365
    %4366 = vmatprep.subr.bf16.mxu0 %v3370
    %4367 = vmatpush1.bf16.msra.mxu0 %v3369
    %4368 = vmatprep.subr.bf16.mxu0 %v3374
    %4369 = vmatpush1.bf16.msra.mxu0 %v3373
    %4370 = vmatprep.subr.bf16.mxu0 %v3378
    %4371 = vmatpush1.bf16.msra.mxu0 %v3377
    %4372 = vmatprep.subr.bf16.mxu0 %v3382
    %4373 = vmatpush1.bf16.msra.mxu0 %v3381
    %4374 = vmatprep.subr.bf16.mxu0 %v3386
    %4375 = vmatpush1.bf16.msra.mxu0 %v3385
    %4376 = vmatprep.subr.bf16.mxu0 %v3390
    %4377 = vmatpush1.bf16.msra.mxu0 %v3389
    %4378 = vmatprep.subr.bf16.mxu0 %v3394
    %4379 = vmatpush1.bf16.msra.mxu0 %v3393
    %4380 = vmatprep.subr.bf16.mxu0 %v3398
    %4381 = vmatpush1.bf16.msra.mxu0 %v3397
    %4382 = vmatprep.subr.bf16.mxu0 %v3402
    %4383 = vmatpush1.bf16.msra.mxu0 %v3401
    %4384 = vmatprep.mubr.bf16.mxu0 %v2174
    %4385 = vmatmul.mubr.bf16.gmra.mrb[0].mxu0 %v2173
    %v4386 = vpop.f32.mrb[0].mxu0
    %v4387 = vadd.f32 %v4274, %v4386
    %v4388 = vpop.f32.mrb[0].mxu0
    %v4389 = vadd.f32 %v4276, %v4388
    %v4390 = vpop.f32.mrb[0].mxu0
    %v4391 = vadd.f32 %v4278, %v4390
    %v4392 = vpop.f32.mrb[0].mxu0
    %v4393 = vadd.f32 %v4280, %v4392
    %4394 = vmatprep.mubr.bf16.mxu0 %v2182
    %4395 = vmatmul.mubr.bf16.gmra.mrb[0].mxu0 %v2181
    %v4396 = vpop.f32.mrb[0].mxu0
    %v4397 = vadd.f32 %v4284, %v4396
    %v4398 = vpop.f32.mrb[0].mxu0
    %v4399 = vadd.f32 %v4286, %v4398
    %v4400 = vpop.f32.mrb[0].mxu0
    %v4401 = vadd.f32 %v4288, %v4400
    %v4402 = vpop.f32.mrb[0].mxu0
    %v4403 = vadd.f32 %v4290, %v4402
    %4404 = vmatprep.mubr.bf16.mxu0 %v2190
    %4405 = vmatmul.mubr.bf16.gmra.mrb[0].mxu0 %v2189
    %v4406 = vpop.f32.mrb[0].mxu0
    %v4407 = vadd.f32 %v4294, %v4406
    %v4408 = vpop.f32.mrb[0].mxu0
    %v4409 = vadd.f32 %v4296, %v4408
    %v4410 = vpop.f32.mrb[0].mxu0
    %v4411 = vadd.f32 %v4298, %v4410
    %v4412 = vpop.f32.mrb[0].mxu0
    %v4413 = vadd.f32 %v4300, %v4412
    %4414 = vmatprep.mubr.bf16.mxu0 %v2198
    %4415 = vmatmul.mubr.bf16.gmra.mrb[0].mxu0 %v2197
    %v4416 = vpop.f32.mrb[0].mxu0
    %v4417 = vadd.f32 %v4304, %v4416
    %v4418 = vpop.f32.mrb[0].mxu0
    %v4419 = vadd.f32 %v4306, %v4418
    %v4420 = vpop.f32.mrb[0].mxu0
    %v4421 = vadd.f32 %v4308, %v4420
    %v4422 = vpop.f32.mrb[0].mxu0
    %v4423 = vadd.f32 %v4310, %v4422
    %4424 = vmatprep.mubr.bf16.mxu0 %v2206
    %4425 = vmatmul.mubr.bf16.gmra.mrb[0].mxu0 %v2205
    %v4426 = vpop.f32.mrb[0].mxu0
    %v4427 = vadd.f32 %v4314, %v4426
    %v4428 = vpop.f32.mrb[0].mxu0
    %v4429 = vadd.f32 %v4316, %v4428
    %v4430 = vpop.f32.mrb[0].mxu0
    %v4431 = vadd.f32 %v4318, %v4430
    %v4432 = vpop.f32.mrb[0].mxu0
    %v4433 = vadd.f32 %v4320, %v4432
    %4434 = vmatprep.mubr.bf16.mxu0 %v2214
    %4435 = vmatmul.mubr.bf16.gmra.mrb[0].mxu0 %v2213
    %v4436 = vpop.f32.mrb[0].mxu0
    %v4437 = vadd.f32 %v4324, %v4436
    %v4438 = vpop.f32.mrb[0].mxu0
    %v4439 = vadd.f32 %v4326, %v4438
    %v4440 = vpop.f32.mrb[0].mxu0
    %v4441 = vadd.f32 %v4328, %v4440
    %v4442 = vpop.f32.mrb[0].mxu0
    %v4443 = vadd.f32 %v4330, %v4442
    %4444 = vmatprep.mubr.bf16.mxu0 %v2222
    %4445 = vmatmul.mubr.bf16.gmra.mrb[0].mxu0 %v2221
    %v4446 = vpop.f32.mrb[0].mxu0
    %v4447 = vadd.f32 %v4334, %v4446
    %v4448 = vpop.f32.mrb[0].mxu0
    %v4449 = vadd.f32 %v4336, %v4448
    %v4450 = vpop.f32.mrb[0].mxu0
    %v4451 = vadd.f32 %v4338, %v4450
    %v4452 = vpop.f32.mrb[0].mxu0
    %v4453 = vadd.f32 %v4340, %v4452
    %4454 = vmatprep.mubr.bf16.mxu0 %v2230
    %4455 = vmatmul.mubr.bf16.gmra.mrb[0].mxu0 %v2229
    %v4456 = vpop.f32.mrb[0].mxu0
    %v4457 = vadd.f32 %v4344, %v4456
    %v4458 = vpop.f32.mrb[0].mxu0
    %v4459 = vadd.f32 %v4346, %v4458
    %v4460 = vpop.f32.mrb[0].mxu0
    %v4461 = vadd.f32 %v4348, %v4460
    %v4462 = vpop.f32.mrb[0].mxu0
    %v4463 = vadd.f32 %v4350, %v4462
    %4464 = vdwg.mxu0
    %4465 = vmatprep.subr.bf16.mxu0 %v3406
    %4466 = vmatpush1.bf16.msra.mxu0 %v3405
    %4467 = vmatprep.subr.bf16.mxu0 %v3410
    %4468 = vmatpush1.bf16.msra.mxu0 %v3409
    %4469 = vmatprep.subr.bf16.mxu0 %v3414
    %4470 = vmatpush1.bf16.msra.mxu0 %v3413
    %4471 = vmatprep.subr.bf16.mxu0 %v3418
    %4472 = vmatpush1.bf16.msra.mxu0 %v3417
    %4473 = vmatprep.subr.bf16.mxu0 %v3422
    %4474 = vmatpush1.bf16.msra.mxu0 %v3421
    %4475 = vmatprep.subr.bf16.mxu0 %v3426
    %4476 = vmatpush1.bf16.msra.mxu0 %v3425
    %4477 = vmatprep.subr.bf16.mxu0 %v3430
    %4478 = vmatpush1.bf16.msra.mxu0 %v3429
    %4479 = vmatprep.subr.bf16.mxu0 %v3434
    %4480 = vmatpush1.bf16.msra.mxu0 %v3433
    %4481 = vmatprep.subr.bf16.mxu0 %v3438
    %4482 = vmatpush1.bf16.msra.mxu0 %v3437
    %4483 = vmatprep.subr.bf16.mxu0 %v3442
    %4484 = vmatpush1.bf16.msra.mxu0 %v3441
    %4485 = vmatprep.subr.bf16.mxu0 %v3446
    %4486 = vmatpush1.bf16.msra.mxu0 %v3445
    %4487 = vmatprep.subr.bf16.mxu0 %v3450
    %4488 = vmatpush1.bf16.msra.mxu0 %v3449
    %4489 = vmatprep.subr.bf16.mxu0 %v3454
    %4490 = vmatpush1.bf16.msra.mxu0 %v3453
    %4491 = vmatprep.subr.bf16.mxu0 %v3458
    %4492 = vmatpush1.bf16.msra.mxu0 %v3457
    %4493 = vmatprep.subr.bf16.mxu0 %v3462
    %4494 = vmatpush1.bf16.msra.mxu0 %v3461
    %4495 = vmatprep.subr.bf16.mxu0 %v3466
    %4496 = vmatpush1.bf16.msra.mxu0 %v3465
    %4497 = vmatprep.mubr.bf16.mxu0 %v2176
    %4498 = vmatmul.mubr.bf16.gmra.mrb[0].mxu0 %v2175
    %v4499 = vpop.f32.mrb[0].mxu0
    %v4500 = vadd.f32 %v4387, %v4499
    %v4501 = vpop.f32.mrb[0].mxu0
    %v4502 = vadd.f32 %v4389, %v4501
    %v4503 = vpop.f32.mrb[0].mxu0
    %v4504 = vadd.f32 %v4391, %v4503
    %v4505 = vpop.f32.mrb[0].mxu0
    %v4506 = vadd.f32 %v4393, %v4505
    %4507 = vmatprep.mubr.bf16.mxu0 %v2184
    %4508 = vmatmul.mubr.bf16.gmra.mrb[0].mxu0 %v2183
    %v4509 = vpop.f32.mrb[0].mxu0
    %v4510 = vadd.f32 %v4397, %v4509
    %v4511 = vpop.f32.mrb[0].mxu0
    %v4512 = vadd.f32 %v4399, %v4511
    %v4513 = vpop.f32.mrb[0].mxu0
    %v4514 = vadd.f32 %v4401, %v4513
    %v4515 = vpop.f32.mrb[0].mxu0
    %v4516 = vadd.f32 %v4403, %v4515
    %4517 = vmatprep.mubr.bf16.mxu0 %v2192
    %4518 = vmatmul.mubr.bf16.gmra.mrb[0].mxu0 %v2191
    %v4519 = vpop.f32.mrb[0].mxu0
    %v4520 = vadd.f32 %v4407, %v4519
    %v4521 = vpop.f32.mrb[0].mxu0
    %v4522 = vadd.f32 %v4409, %v4521
    %v4523 = vpop.f32.mrb[0].mxu0
    %v4524 = vadd.f32 %v4411, %v4523
    %v4525 = vpop.f32.mrb[0].mxu0
    %v4526 = vadd.f32 %v4413, %v4525
    %4527 = vmatprep.mubr.bf16.mxu0 %v2200
    %4528 = vmatmul.mubr.bf16.gmra.mrb[0].mxu0 %v2199
    %v4529 = vpop.f32.mrb[0].mxu0
    %v4530 = vadd.f32 %v4417, %v4529
    %v4531 = vpop.f32.mrb[0].mxu0
    %v4532 = vadd.f32 %v4419, %v4531
    %v4533 = vpop.f32.mrb[0].mxu0
    %v4534 = vadd.f32 %v4421, %v4533
    %v4535 = vpop.f32.mrb[0].mxu0
    %v4536 = vadd.f32 %v4423, %v4535
    %4537 = vmatprep.mubr.bf16.mxu0 %v2208
    %4538 = vmatmul.mubr.bf16.gmra.mrb[0].mxu0 %v2207
    %v4539 = vpop.f32.mrb[0].mxu0
    %v4540 = vadd.f32 %v4427, %v4539
    %v4541 = vpop.f32.mrb[0].mxu0
    %v4542 = vadd.f32 %v4429, %v4541
    %v4543 = vpop.f32.mrb[0].mxu0
    %v4544 = vadd.f32 %v4431, %v4543
    %v4545 = vpop.f32.mrb[0].mxu0
    %v4546 = vadd.f32 %v4433, %v4545
    %4547 = vmatprep.mubr.bf16.mxu0 %v2216
    %4548 = vmatmul.mubr.bf16.gmra.mrb[0].mxu0 %v2215
    %v4549 = vpop.f32.mrb[0].mxu0
    %v4550 = vadd.f32 %v4437, %v4549
    %v4551 = vpop.f32.mrb[0].mxu0
    %v4552 = vadd.f32 %v4439, %v4551
    %v4553 = vpop.f32.mrb[0].mxu0
    %v4554 = vadd.f32 %v4441, %v4553
    %v4555 = vpop.f32.mrb[0].mxu0
    %v4556 = vadd.f32 %v4443, %v4555
    %4557 = vmatprep.mubr.bf16.mxu0 %v2224
    %4558 = vmatmul.mubr.bf16.gmra.mrb[0].mxu0 %v2223
    %v4559 = vpop.f32.mrb[0].mxu0
    %v4560 = vadd.f32 %v4447, %v4559
    %v4561 = vpop.f32.mrb[0].mxu0
    %v4562 = vadd.f32 %v4449, %v4561
    %v4563 = vpop.f32.mrb[0].mxu0
    %v4564 = vadd.f32 %v4451, %v4563
    %v4565 = vpop.f32.mrb[0].mxu0
    %v4566 = vadd.f32 %v4453, %v4565
    %4567 = vmatprep.mubr.bf16.mxu0 %v2232
    %4568 = vmatmul.mubr.bf16.gmra.mrb[0].mxu0 %v2231
    %v4569 = vpop.f32.mrb[0].mxu0
    %v4570 = vadd.f32 %v4457, %v4569
    %v4571 = vpop.f32.mrb[0].mxu0
    %v4572 = vadd.f32 %v4459, %v4571
    %v4573 = vpop.f32.mrb[0].mxu0
    %v4574 = vadd.f32 %v4461, %v4573
    %v4575 = vpop.f32.mrb[0].mxu0
    %v4576 = vadd.f32 %v4463, %v4575
    %4577 = vdwg.mxu0
    %4578 = vmatprep.subr.bf16.mxu0 %v3470
    %4579 = vmatpush1.bf16.msra.mxu0 %v3469
    %4580 = vmatprep.subr.bf16.mxu0 %v3474
    %4581 = vmatpush1.bf16.msra.mxu0 %v3473
    %4582 = vmatprep.subr.bf16.mxu0 %v3478
    %4583 = vmatpush1.bf16.msra.mxu0 %v3477
    %4584 = vmatprep.subr.bf16.mxu0 %v3482
    %4585 = vmatpush1.bf16.msra.mxu0 %v3481
    %4586 = vmatprep.subr.bf16.mxu0 %v3486
    %4587 = vmatpush1.bf16.msra.mxu0 %v3485
    %4588 = vmatprep.subr.bf16.mxu0 %v3490
    %4589 = vmatpush1.bf16.msra.mxu0 %v3489
    %4590 = vmatprep.subr.bf16.mxu0 %v3494
    %4591 = vmatpush1.bf16.msra.mxu0 %v3493
    %4592 = vmatprep.subr.bf16.mxu0 %v3498
    %4593 = vmatpush1.bf16.msra.mxu0 %v3497
    %4594 = vmatprep.subr.bf16.mxu0 %v3502
    %4595 = vmatpush1.bf16.msra.mxu0 %v3501
    %4596 = vmatprep.subr.bf16.mxu0 %v3506
    %4597 = vmatpush1.bf16.msra.mxu0 %v3505
    %4598 = vmatprep.subr.bf16.mxu0 %v3510
    %4599 = vmatpush1.bf16.msra.mxu0 %v3509
    %4600 = vmatprep.subr.bf16.mxu0 %v3514
    %4601 = vmatpush1.bf16.msra.mxu0 %v3513
    %4602 = vmatprep.subr.bf16.mxu0 %v3518
    %4603 = vmatpush1.bf16.msra.mxu0 %v3517
    %4604 = vmatprep.subr.bf16.mxu0 %v3522
    %4605 = vmatpush1.bf16.msra.mxu0 %v3521
    %4606 = vmatprep.subr.bf16.mxu0 %v3526
    %4607 = vmatpush1.bf16.msra.mxu0 %v3525
    %4608 = vmatprep.subr.bf16.mxu0 %v3530
    %4609 = vmatpush1.bf16.msra.mxu0 %v3529
    %4610 = vmatprep.mubr.bf16.mxu0 %v2178
    %4611 = vmatmul.mubr.bf16.gmra.mrb[0].mxu0 %v2177
    %v4612 = vpop.f32.mrb[0].mxu0
    %v4613 = vadd.f32 %v4500, %v4612
    %v4614 = vpop.f32.mrb[0].mxu0
    %v4615 = vadd.f32 %v4502, %v4614
    %v4616 = vpop.f32.mrb[0].mxu0
    %v4617 = vadd.f32 %v4504, %v4616
    %v4618 = vpop.f32.mrb[0].mxu0
    %v4619 = vadd.f32 %v4506, %v4618
    %4620 = vmatprep.mubr.bf16.mxu0 %v2186
    %4621 = vmatmul.mubr.bf16.gmra.mrb[0].mxu0 %v2185
    %v4622 = vpop.f32.mrb[0].mxu0
    %v4623 = vadd.f32 %v4510, %v4622
    %v4624 = vpop.f32.mrb[0].mxu0
    %v4625 = vadd.f32 %v4512, %v4624
    %v4626 = vpop.f32.mrb[0].mxu0
    %v4627 = vadd.f32 %v4514, %v4626
    %v4628 = vpop.f32.mrb[0].mxu0
    %v4629 = vadd.f32 %v4516, %v4628
    %4630 = vmatprep.mubr.bf16.mxu0 %v2194
    %4631 = vmatmul.mubr.bf16.gmra.mrb[0].mxu0 %v2193
    %v4632 = vpop.f32.mrb[0].mxu0
    %v4633 = vadd.f32 %v4520, %v4632
    %v4634 = vpop.f32.mrb[0].mxu0
    %v4635 = vadd.f32 %v4522, %v4634
    %v4636 = vpop.f32.mrb[0].mxu0
    %v4637 = vadd.f32 %v4524, %v4636
    %v4638 = vpop.f32.mrb[0].mxu0
    %v4639 = vadd.f32 %v4526, %v4638
    %4640 = vmatprep.mubr.bf16.mxu0 %v2202
    %4641 = vmatmul.mubr.bf16.gmra.mrb[0].mxu0 %v2201
    %v4642 = vpop.f32.mrb[0].mxu0
    %v4643 = vadd.f32 %v4530, %v4642
    %v4644 = vpop.f32.mrb[0].mxu0
    %v4645 = vadd.f32 %v4532, %v4644
    %v4646 = vpop.f32.mrb[0].mxu0
    %v4647 = vadd.f32 %v4534, %v4646
    %v4648 = vpop.f32.mrb[0].mxu0
    %v4649 = vadd.f32 %v4536, %v4648
    %4650 = vmatprep.mubr.bf16.mxu0 %v2210
    %4651 = vmatmul.mubr.bf16.gmra.mrb[0].mxu0 %v2209
    %v4652 = vpop.f32.mrb[0].mxu0
    %v4653 = vadd.f32 %v4540, %v4652
    %v4654 = vpop.f32.mrb[0].mxu0
    %v4655 = vadd.f32 %v4542, %v4654
    %v4656 = vpop.f32.mrb[0].mxu0
    %v4657 = vadd.f32 %v4544, %v4656
    %v4658 = vpop.f32.mrb[0].mxu0
    %v4659 = vadd.f32 %v4546, %v4658
    %4660 = vmatprep.mubr.bf16.mxu0 %v2218
    %4661 = vmatmul.mubr.bf16.gmra.mrb[0].mxu0 %v2217
    %v4662 = vpop.f32.mrb[0].mxu0
    %v4663 = vadd.f32 %v4550, %v4662
    %v4664 = vpop.f32.mrb[0].mxu0
    %v4665 = vadd.f32 %v4552, %v4664
    %v4666 = vpop.f32.mrb[0].mxu0
    %v4667 = vadd.f32 %v4554, %v4666
    %v4668 = vpop.f32.mrb[0].mxu0
    %v4669 = vadd.f32 %v4556, %v4668
    %4670 = vmatprep.mubr.bf16.mxu0 %v2226
    %4671 = vmatmul.mubr.bf16.gmra.mrb[0].mxu0 %v2225
    %v4672 = vpop.f32.mrb[0].mxu0
    %v4673 = vadd.f32 %v4560, %v4672
    %v4674 = vpop.f32.mrb[0].mxu0
    %v4675 = vadd.f32 %v4562, %v4674
    %v4676 = vpop.f32.mrb[0].mxu0
    %v4677 = vadd.f32 %v4564, %v4676
    %v4678 = vpop.f32.mrb[0].mxu0
    %v4679 = vadd.f32 %v4566, %v4678
    %4680 = vmatprep.mubr.bf16.mxu0 %v2234
    %4681 = vmatmul.mubr.bf16.gmra.mrb[0].mxu0 %v2233
    %v4682 = vpop.f32.mrb[0].mxu0
    %v4683 = vadd.f32 %v4570, %v4682
    %v4684 = vpop.f32.mrb[0].mxu0
    %v4685 = vadd.f32 %v4572, %v4684
    %v4686 = vpop.f32.mrb[0].mxu0
    %v4687 = vadd.f32 %v4574, %v4686
    %v4688 = vpop.f32.mrb[0].mxu0
    %v4689 = vadd.f32 %v4576, %v4688
    %4690 = vdwg.mxu0
    %v4707 = vunpack.c.l.b16 %v2235
    %v4708 = vunpack.c.h.b16 %v2235
    %v4709 = vunpack.c.l.b16 %v2236
    %v4710 = vunpack.c.h.b16 %v2236
    %v4711 = vunpack.c.l.b16 %v2237
    %v4712 = vunpack.c.h.b16 %v2237
    %v4713 = vunpack.c.l.b16 %v2238
    %v4714 = vunpack.c.h.b16 %v2238
    %v4715 = vunpack.c.l.b16 %v2239
    %v4716 = vunpack.c.h.b16 %v2239
    %v4717 = vunpack.c.l.b16 %v2240
    %v4718 = vunpack.c.h.b16 %v2240
    %v4719 = vunpack.c.l.b16 %v2241
    %v4720 = vunpack.c.h.b16 %v2241
    %v4721 = vunpack.c.l.b16 %v2242
    %v4722 = vunpack.c.h.b16 %v2242
    %v4723 = vunpack.c.l.b16 %v2243
    %v4724 = vunpack.c.h.b16 %v2243
    %v4725 = vunpack.c.l.b16 %v2244
    %v4726 = vunpack.c.h.b16 %v2244
    %v4727 = vunpack.c.l.b16 %v2245
    %v4728 = vunpack.c.h.b16 %v2245
    %v4729 = vunpack.c.l.b16 %v2246
    %v4730 = vunpack.c.h.b16 %v2246
    %v4731 = vunpack.c.l.b16 %v2247
    %v4732 = vunpack.c.h.b16 %v2247
    %v4733 = vunpack.c.l.b16 %v2248
    %v4734 = vunpack.c.h.b16 %v2248
    %v4735 = vunpack.c.l.b16 %v2249
    %v4736 = vunpack.c.h.b16 %v2249
    %v4737 = vunpack.c.l.b16 %v2250
    %v4738 = vunpack.c.h.b16 %v2250
    %v4739 = vpack.c.b16 %v4711, %v4707
    %v4740 = vpack.c.b16 %v4712, %v4708
    %v4741 = vpack.c.b16 %v4713, %v4709
    %v4742 = vpack.c.b16 %v4714, %v4710
    %v4743 = vpack.c.b16 %v4719, %v4715
    %v4744 = vpack.c.b16 %v4720, %v4716
    %v4745 = vpack.c.b16 %v4721, %v4717
    %v4746 = vpack.c.b16 %v4722, %v4718
    %v4747 = vpack.c.b16 %v4727, %v4723
    %v4748 = vpack.c.b16 %v4728, %v4724
    %v4749 = vpack.c.b16 %v4729, %v4725
    %v4750 = vpack.c.b16 %v4730, %v4726
    %v4751 = vpack.c.b16 %v4735, %v4731
    %v4752 = vpack.c.b16 %v4736, %v4732
    %v4753 = vpack.c.b16 %v4737, %v4733
    %v4754 = vpack.c.b16 %v4738, %v4734
    %4771 = vmatprep.subr.bf16.mxu0 %v4740
    %4772 = vmatpush1.bf16.msra.mxu0 %v4739
    %4773 = vmatprep.subr.bf16.mxu0 %v4744
    %4774 = vmatpush1.bf16.msra.mxu0 %v4743
    %4775 = vmatprep.subr.bf16.mxu0 %v4748
    %4776 = vmatpush1.bf16.msra.mxu0 %v4747
    %4777 = vmatprep.subr.bf16.mxu0 %v4752
    %4778 = vmatpush1.bf16.msra.mxu0 %v4751
    %4779 = vmatprep.subr.bf16.mxu0 0
    %4780 = vmatpush1.bf16.msra.mxu0 0
    %4781 = vmatprep.subr.bf16.mxu0 0
    %4782 = vmatpush1.bf16.msra.mxu0 0
    %4783 = vmatprep.subr.bf16.mxu0 0
    %4784 = vmatpush1.bf16.msra.mxu0 0
    %4785 = vmatprep.subr.bf16.mxu0 0
    %4786 = vmatpush1.bf16.msra.mxu0 0
    %4787 = vmatprep.subr.bf16.mxu0 0
    %4788 = vmatpush1.bf16.msra.mxu0 0
    %4789 = vmatprep.subr.bf16.mxu0 0
    %4790 = vmatpush1.bf16.msra.mxu0 0
    %4791 = vmatprep.subr.bf16.mxu0 0
    %4792 = vmatpush1.bf16.msra.mxu0 0
    %4793 = vmatprep.subr.bf16.mxu0 0
    %4794 = vmatpush1.bf16.msra.mxu0 0
    %4795 = vmatprep.subr.bf16.mxu0 0
    %4796 = vmatpush1.bf16.msra.mxu0 0
    %4797 = vmatprep.subr.bf16.mxu0 0
    %4798 = vmatpush1.bf16.msra.mxu0 0
    %4799 = vmatprep.subr.bf16.mxu0 0
    %4800 = vmatpush1.bf16.msra.mxu0 0
    %4801 = vmatprep.subr.bf16.mxu0 0
    %4802 = vmatpush1.bf16.msra.mxu0 0
    %4803 = vmatprep.mubr.bf16.mxu0 0
    %4804 = vmatmul.mubr.bf16.gmra.mrb[0].mxu0 %v837
    %v4805 = vpop.f32.mrb[0].mxu0
    %v4806 = vadd.f32 %v4161, %v4805
    %v4807 = vpop.f32.mrb[0].mxu0
    %v4808 = vadd.f32 %v4163, %v4807
    %v4809 = vpop.f32.mrb[0].mxu0
    %v4810 = vadd.f32 %v4165, %v4809
    %v4811 = vpop.f32.mrb[0].mxu0
    %v4812 = vadd.f32 %v4167, %v4811
    %4813 = vmatprep.mubr.bf16.mxu0 0
    %4814 = vmatmul.mubr.bf16.gmra.mrb[0].mxu0 %v840
    %v4815 = vpop.f32.mrb[0].mxu0
    %v4816 = vadd.f32 %v4171, %v4815
    %v4817 = vpop.f32.mrb[0].mxu0
    %v4818 = vadd.f32 %v4173, %v4817
    %v4819 = vpop.f32.mrb[0].mxu0
    %v4820 = vadd.f32 %v4175, %v4819
    %v4821 = vpop.f32.mrb[0].mxu0
    %v4822 = vadd.f32 %v4177, %v4821
    %4823 = vmatprep.mubr.bf16.mxu0 0
    %4824 = vmatmul.mubr.bf16.gmra.mrb[0].mxu0 %v843
    %v4825 = vpop.f32.mrb[0].mxu0
    %v4826 = vadd.f32 %v4181, %v4825
    %v4827 = vpop.f32.mrb[0].mxu0
    %v4828 = vadd.f32 %v4183, %v4827
    %v4829 = vpop.f32.mrb[0].mxu0
    %v4830 = vadd.f32 %v4185, %v4829
    %v4831 = vpop.f32.mrb[0].mxu0
    %v4832 = vadd.f32 %v4187, %v4831
    %4833 = vmatprep.mubr.bf16.mxu0 0
    %4834 = vmatmul.mubr.bf16.gmra.mrb[0].mxu0 %v846
    %v4835 = vpop.f32.mrb[0].mxu0
    %v4836 = vadd.f32 %v4191, %v4835
    %v4837 = vpop.f32.mrb[0].mxu0
    %v4838 = vadd.f32 %v4193, %v4837
    %v4839 = vpop.f32.mrb[0].mxu0
    %v4840 = vadd.f32 %v4195, %v4839
    %v4841 = vpop.f32.mrb[0].mxu0
    %v4842 = vadd.f32 %v4197, %v4841
    %4843 = vmatprep.mubr.bf16.mxu0 0
    %4844 = vmatmul.mubr.bf16.gmra.mrb[0].mxu0 %v849
    %v4845 = vpop.f32.mrb[0].mxu0
    %v4846 = vadd.f32 %v4201, %v4845
    %v4847 = vpop.f32.mrb[0].mxu0
    %v4848 = vadd.f32 %v4203, %v4847
    %v4849 = vpop.f32.mrb[0].mxu0
    %v4850 = vadd.f32 %v4205, %v4849
    %v4851 = vpop.f32.mrb[0].mxu0
    %v4852 = vadd.f32 %v4207, %v4851
    %4853 = vmatprep.mubr.bf16.mxu0 0
    %4854 = vmatmul.mubr.bf16.gmra.mrb[0].mxu0 %v852
    %v4855 = vpop.f32.mrb[0].mxu0
    %v4856 = vadd.f32 %v4211, %v4855
    %v4857 = vpop.f32.mrb[0].mxu0
    %v4858 = vadd.f32 %v4213, %v4857
    %v4859 = vpop.f32.mrb[0].mxu0
    %v4860 = vadd.f32 %v4215, %v4859
    %v4861 = vpop.f32.mrb[0].mxu0
    %v4862 = vadd.f32 %v4217, %v4861
    %4863 = vmatprep.mubr.bf16.mxu0 0
    %4864 = vmatmul.mubr.bf16.gmra.mrb[0].mxu0 %v855
    %v4865 = vpop.f32.mrb[0].mxu0
    %v4866 = vadd.f32 %v4221, %v4865
    %v4867 = vpop.f32.mrb[0].mxu0
    %v4868 = vadd.f32 %v4223, %v4867
    %v4869 = vpop.f32.mrb[0].mxu0
    %v4870 = vadd.f32 %v4225, %v4869
    %v4871 = vpop.f32.mrb[0].mxu0
    %v4872 = vadd.f32 %v4227, %v4871
    %4873 = vmatprep.mubr.bf16.mxu0 0
    %4874 = vmatmul.mubr.bf16.gmra.mrb[0].mxu0 %v858
    %v4875 = vpop.f32.mrb[0].mxu0
    %v4876 = vadd.f32 %v4231, %v4875
    %v4877 = vpop.f32.mrb[0].mxu0
    %v4878 = vadd.f32 %v4233, %v4877
    %v4879 = vpop.f32.mrb[0].mxu0
    %v4880 = vadd.f32 %v4235, %v4879
    %v4881 = vpop.f32.mrb[0].mxu0
    %v4882 = vadd.f32 %v4237, %v4881
    %4883 = vdwg.mxu0
    %4884 = vmatprep.subr.bf16.mxu0 %v4742
    %4885 = vmatpush1.bf16.msra.mxu0 %v4741
    %4886 = vmatprep.subr.bf16.mxu0 %v4746
    %4887 = vmatpush1.bf16.msra.mxu0 %v4745
    %4888 = vmatprep.subr.bf16.mxu0 %v4750
    %4889 = vmatpush1.bf16.msra.mxu0 %v4749
    %4890 = vmatprep.subr.bf16.mxu0 %v4754
    %4891 = vmatpush1.bf16.msra.mxu0 %v4753
    %4892 = vmatprep.subr.bf16.mxu0 0
    %4893 = vmatpush1.bf16.msra.mxu0 0
    %4894 = vmatprep.subr.bf16.mxu0 0
    %4895 = vmatpush1.bf16.msra.mxu0 0
    %4896 = vmatprep.subr.bf16.mxu0 0
    %4897 = vmatpush1.bf16.msra.mxu0 0
    %4898 = vmatprep.subr.bf16.mxu0 0
    %4899 = vmatpush1.bf16.msra.mxu0 0
    %4900 = vmatprep.subr.bf16.mxu0 0
    %4901 = vmatpush1.bf16.msra.mxu0 0
    %4902 = vmatprep.subr.bf16.mxu0 0
    %4903 = vmatpush1.bf16.msra.mxu0 0
    %4904 = vmatprep.subr.bf16.mxu0 0
    %4905 = vmatpush1.bf16.msra.mxu0 0
    %4906 = vmatprep.subr.bf16.mxu0 0
    %4907 = vmatpush1.bf16.msra.mxu0 0
    %4908 = vmatprep.subr.bf16.mxu0 0
    %4909 = vmatpush1.bf16.msra.mxu0 0
    %4910 = vmatprep.subr.bf16.mxu0 0
    %4911 = vmatpush1.bf16.msra.mxu0 0
    %4912 = vmatprep.subr.bf16.mxu0 0
    %4913 = vmatpush1.bf16.msra.mxu0 0
    %4914 = vmatprep.subr.bf16.mxu0 0
    %4915 = vmatpush1.bf16.msra.mxu0 0
    %4916 = vmatprep.mubr.bf16.mxu0 0
    %4917 = vmatmul.mubr.bf16.gmra.mrb[0].mxu0 %v837
    %v4918 = vpop.f32.mrb[0].mxu0
    %v4919 = vadd.f32 %v4613, %v4918
    %v4920 = vpop.f32.mrb[0].mxu0
    %v4921 = vadd.f32 %v4615, %v4920
    %v4922 = vpop.f32.mrb[0].mxu0
    %v4923 = vadd.f32 %v4617, %v4922
    %v4924 = vpop.f32.mrb[0].mxu0
    %v4925 = vadd.f32 %v4619, %v4924
    %4926 = vmatprep.mubr.bf16.mxu0 0
    %4927 = vmatmul.mubr.bf16.gmra.mrb[0].mxu0 %v840
    %v4928 = vpop.f32.mrb[0].mxu0
    %v4929 = vadd.f32 %v4623, %v4928
    %v4930 = vpop.f32.mrb[0].mxu0
    %v4931 = vadd.f32 %v4625, %v4930
    %v4932 = vpop.f32.mrb[0].mxu0
    %v4933 = vadd.f32 %v4627, %v4932
    %v4934 = vpop.f32.mrb[0].mxu0
    %v4935 = vadd.f32 %v4629, %v4934
    %4936 = vmatprep.mubr.bf16.mxu0 0
    %4937 = vmatmul.mubr.bf16.gmra.mrb[0].mxu0 %v843
    %v4938 = vpop.f32.mrb[0].mxu0
    %v4939 = vadd.f32 %v4633, %v4938
    %v4940 = vpop.f32.mrb[0].mxu0
    %v4941 = vadd.f32 %v4635, %v4940
    %v4942 = vpop.f32.mrb[0].mxu0
    %v4943 = vadd.f32 %v4637, %v4942
    %v4944 = vpop.f32.mrb[0].mxu0
    %v4945 = vadd.f32 %v4639, %v4944
    %4946 = vmatprep.mubr.bf16.mxu0 0
    %4947 = vmatmul.mubr.bf16.gmra.mrb[0].mxu0 %v846
    %v4948 = vpop.f32.mrb[0].mxu0
    %v4949 = vadd.f32 %v4643, %v4948
    %v4950 = vpop.f32.mrb[0].mxu0
    %v4951 = vadd.f32 %v4645, %v4950
    %v4952 = vpop.f32.mrb[0].mxu0
    %v4953 = vadd.f32 %v4647, %v4952
    %v4954 = vpop.f32.mrb[0].mxu0
    %v4955 = vadd.f32 %v4649, %v4954
    %4956 = vmatprep.mubr.bf16.mxu0 0
    %4957 = vmatmul.mubr.bf16.gmra.mrb[0].mxu0 %v849
    %v4958 = vpop.f32.mrb[0].mxu0
    %v4959 = vadd.f32 %v4653, %v4958
    %v4960 = vpop.f32.mrb[0].mxu0
    %v4961 = vadd.f32 %v4655, %v4960
    %v4962 = vpop.f32.mrb[0].mxu0
    %v4963 = vadd.f32 %v4657, %v4962
    %v4964 = vpop.f32.mrb[0].mxu0
    %v4965 = vadd.f32 %v4659, %v4964
    %4966 = vmatprep.mubr.bf16.mxu0 0
    %4967 = vmatmul.mubr.bf16.gmra.mrb[0].mxu0 %v852
    %v4968 = vpop.f32.mrb[0].mxu0
    %v4969 = vadd.f32 %v4663, %v4968
    %v4970 = vpop.f32.mrb[0].mxu0
    %v4971 = vadd.f32 %v4665, %v4970
    %v4972 = vpop.f32.mrb[0].mxu0
    %v4973 = vadd.f32 %v4667, %v4972
    %v4974 = vpop.f32.mrb[0].mxu0
    %v4975 = vadd.f32 %v4669, %v4974
    %4976 = vmatprep.mubr.bf16.mxu0 0
    %4977 = vmatmul.mubr.bf16.gmra.mrb[0].mxu0 %v855
    %v4978 = vpop.f32.mrb[0].mxu0
    %v4979 = vadd.f32 %v4673, %v4978
    %v4980 = vpop.f32.mrb[0].mxu0
    %v4981 = vadd.f32 %v4675, %v4980
    %v4982 = vpop.f32.mrb[0].mxu0
    %v4983 = vadd.f32 %v4677, %v4982
    %v4984 = vpop.f32.mrb[0].mxu0
    %v4985 = vadd.f32 %v4679, %v4984
    %4986 = vmatprep.mubr.bf16.mxu0 0
    %4987 = vmatmul.mubr.bf16.gmra.mrb[0].mxu0 %v858
    %v4988 = vpop.f32.mrb[0].mxu0
    %v4989 = vadd.f32 %v4683, %v4988
    %v4990 = vpop.f32.mrb[0].mxu0
    %v4991 = vadd.f32 %v4685, %v4990
    %v4992 = vpop.f32.mrb[0].mxu0
    %v4993 = vadd.f32 %v4687, %v4992
    %v4994 = vpop.f32.mrb[0].mxu0
    %v4995 = vadd.f32 %v4689, %v4994
    %4996 = vdwg.mxu0
    %v4997 = vld [vmem:[#allocation19] sm:$0xf]
    %v4999 = vlaneseq
    %v5000 = vshrl.u32 %v4999, 7
    %v5001 = vsub.s32 0, %v5000
    %v5002 = vrot.slane %v4997, %v5001
    %v5003 = vlaneseq
    %v5004 = vshrl.u32 %v5003, 7
    %v5005 = vsub.s32 1, %v5004
    %v5006 = vrot.slane %v4997, %v5005
    %v5007 = vlaneseq
    %v5008 = vshrl.u32 %v5007, 7
    %v5009 = vsub.s32 2, %v5008
    %v5010 = vrot.slane %v4997, %v5009
    %v5011 = vlaneseq
    %v5012 = vshrl.u32 %v5011, 7
    %v5013 = vsub.s32 3, %v5012
    %v5014 = vrot.slane %v4997, %v5013
    %v5019 = vadd.f32 %v4806, %v5002
    %v5020 = vadd.f32 %v4808, %v5006
    %v5021 = vadd.f32 %v4919, %v5010
    %v5022 = vadd.f32 %v4921, %v5014
    %v5023 = vadd.f32 %v4810, %v5002
    %v5024 = vadd.f32 %v4812, %v5006
    %v5025 = vadd.f32 %v4923, %v5010
    %v5026 = vadd.f32 %v4925, %v5014
    %v5027 = vadd.f32 %v4816, %v5002
    %v5028 = vadd.f32 %v4818, %v5006
    %v5029 = vadd.f32 %v4929, %v5010
    %v5030 = vadd.f32 %v4931, %v5014
    %v5031 = vadd.f32 %v4820, %v5002
    %v5032 = vadd.f32 %v4822, %v5006
    %v5033 = vadd.f32 %v4933, %v5010
    %v5034 = vadd.f32 %v4935, %v5014
    %v5035 = vadd.f32 %v4826, %v5002
    %v5036 = vadd.f32 %v4828, %v5006
    %v5037 = vadd.f32 %v4939, %v5010
    %v5038 = vadd.f32 %v4941, %v5014
    %v5039 = vadd.f32 %v4830, %v5002
    %v5040 = vadd.f32 %v4832, %v5006
    %v5041 = vadd.f32 %v4943, %v5010
    %v5042 = vadd.f32 %v4945, %v5014
    %v5043 = vadd.f32 %v4836, %v5002
    %v5044 = vadd.f32 %v4838, %v5006
    %v5045 = vadd.f32 %v4949, %v5010
    %v5046 = vadd.f32 %v4951, %v5014
    %v5047 = vadd.f32 %v4840, %v5002
    %v5048 = vadd.f32 %v4842, %v5006
    %v5049 = vadd.f32 %v4953, %v5010
    %v5050 = vadd.f32 %v4955, %v5014
    %v5051 = vadd.f32 %v4846, %v5002
    %v5052 = vadd.f32 %v4848, %v5006
    %v5053 = vadd.f32 %v4959, %v5010
    %v5054 = vadd.f32 %v4961, %v5014
    %v5055 = vadd.f32 %v4850, %v5002
    %v5056 = vadd.f32 %v4852, %v5006
    %v5057 = vadd.f32 %v4963, %v5010
    %v5058 = vadd.f32 %v4965, %v5014
    %v5059 = vadd.f32 %v4856, %v5002
    %v5060 = vadd.f32 %v4858, %v5006
    %v5061 = vadd.f32 %v4969, %v5010
    %v5062 = vadd.f32 %v4971, %v5014
    %v5063 = vadd.f32 %v4860, %v5002
    %v5064 = vadd.f32 %v4862, %v5006
    %v5065 = vadd.f32 %v4973, %v5010
    %v5066 = vadd.f32 %v4975, %v5014
    %v5067 = vadd.f32 %v4866, %v5002
    %v5068 = vadd.f32 %v4868, %v5006
    %v5069 = vadd.f32 %v4979, %v5010
    %v5070 = vadd.f32 %v4981, %v5014
    %v5071 = vadd.f32 %v4870, %v5002
    %v5072 = vadd.f32 %v4872, %v5006
    %v5073 = vadd.f32 %v4983, %v5010
    %v5074 = vadd.f32 %v4985, %v5014
    %v5075 = vadd.f32 %v4876, %v5002
    %v5076 = vadd.f32 %v4878, %v5006
    %v5077 = vadd.f32 %v4989, %v5010
    %v5078 = vadd.f32 %v4991, %v5014
    %v5079 = vadd.f32 %v4880, %v5002
    %v5080 = vadd.f32 %v4882, %v5006
    %v5081 = vadd.f32 %v4993, %v5010
    %v5082 = vadd.f32 %v4995, %v5014
    %v5083 = vtanh.pop %v5019
    %v5084 = vtanh.pop %v5020
    %v5085 = vtanh.pop %v5021
    %v5086 = vtanh.pop %v5022
    %v5087 = vtanh.pop %v5023
    %v5088 = vtanh.pop %v5024
    %v5089 = vtanh.pop %v5025
    %v5090 = vtanh.pop %v5026
    %v5091 = vtanh.pop %v5027
    %v5092 = vtanh.pop %v5028
    %v5093 = vtanh.pop %v5029
    %v5094 = vtanh.pop %v5030
    %v5095 = vtanh.pop %v5031
    %v5096 = vtanh.pop %v5032
    %v5097 = vtanh.pop %v5033
    %v5098 = vtanh.pop %v5034
    %v5099 = vtanh.pop %v5035
    %v5100 = vtanh.pop %v5036
    %v5101 = vtanh.pop %v5037
    %v5102 = vtanh.pop %v5038
    %v5103 = vtanh.pop %v5039
    %v5104 = vtanh.pop %v5040
    %v5105 = vtanh.pop %v5041
    %v5106 = vtanh.pop %v5042
    %v5107 = vtanh.pop %v5043
    %v5108 = vtanh.pop %v5044
    %v5109 = vtanh.pop %v5045
    %v5110 = vtanh.pop %v5046
    %v5111 = vtanh.pop %v5047
    %v5112 = vtanh.pop %v5048
    %v5113 = vtanh.pop %v5049
    %v5114 = vtanh.pop %v5050
    %v5115 = vtanh.pop %v5051
    %v5116 = vtanh.pop %v5052
    %v5117 = vtanh.pop %v5053
    %v5118 = vtanh.pop %v5054
    %v5119 = vtanh.pop %v5055
    %v5120 = vtanh.pop %v5056
    %v5121 = vtanh.pop %v5057
    %v5122 = vtanh.pop %v5058
    %v5123 = vtanh.pop %v5059
    %v5124 = vtanh.pop %v5060
    %v5125 = vtanh.pop %v5061
    %v5126 = vtanh.pop %v5062
    %v5127 = vtanh.pop %v5063
    %v5128 = vtanh.pop %v5064
    %v5129 = vtanh.pop %v5065
    %v5130 = vtanh.pop %v5066
    %v5131 = vtanh.pop %v5067
    %v5132 = vtanh.pop %v5068
    %v5133 = vtanh.pop %v5069
    %v5134 = vtanh.pop %v5070
    %v5135 = vtanh.pop %v5071
    %v5136 = vtanh.pop %v5072
    %v5137 = vtanh.pop %v5073
    %v5138 = vtanh.pop %v5074
    %v5139 = vtanh.pop %v5075
    %v5140 = vtanh.pop %v5076
    %v5141 = vtanh.pop %v5077
    %v5142 = vtanh.pop %v5078
    %v5143 = vtanh.pop %v5079
    %v5144 = vtanh.pop %v5080
    %v5145 = vtanh.pop %v5081
    %v5146 = vtanh.pop %v5082
    %v5147 = vpack.c.bf16 %v5087, %v5083
    %v5148 = vpack.c.bf16 %v5088, %v5084
    %v5149 = vpack.c.bf16 %v5089, %v5085
    %v5150 = vpack.c.bf16 %v5090, %v5086
    %v5151 = vpack.c.bf16 %v5095, %v5091
    %v5152 = vpack.c.bf16 %v5096, %v5092
    %v5153 = vpack.c.bf16 %v5097, %v5093
    %v5154 = vpack.c.bf16 %v5098, %v5094
    %v5155 = vpack.c.bf16 %v5103, %v5099
    %v5156 = vpack.c.bf16 %v5104, %v5100
    %v5157 = vpack.c.bf16 %v5105, %v5101
    %v5158 = vpack.c.bf16 %v5106, %v5102
    %v5159 = vpack.c.bf16 %v5111, %v5107
    %v5160 = vpack.c.bf16 %v5112, %v5108
    %v5161 = vpack.c.bf16 %v5113, %v5109
    %v5162 = vpack.c.bf16 %v5114, %v5110
    %v5163 = vpack.c.bf16 %v5119, %v5115
    %v5164 = vpack.c.bf16 %v5120, %v5116
    %v5165 = vpack.c.bf16 %v5121, %v5117
    %v5166 = vpack.c.bf16 %v5122, %v5118
    %v5167 = vpack.c.bf16 %v5127, %v5123
    %v5168 = vpack.c.bf16 %v5128, %v5124
    %v5169 = vpack.c.bf16 %v5129, %v5125
    %v5170 = vpack.c.bf16 %v5130, %v5126
    %v5171 = vpack.c.bf16 %v5135, %v5131
    %v5172 = vpack.c.bf16 %v5136, %v5132
    %v5173 = vpack.c.bf16 %v5137, %v5133
    %v5174 = vpack.c.bf16 %v5138, %v5134
    %v5175 = vpack.c.bf16 %v5143, %v5139
    %v5176 = vpack.c.bf16 %v5144, %v5140
    %v5177 = vpack.c.bf16 %v5145, %v5141
    %v5178 = vpack.c.bf16 %v5146, %v5142
    %v5179 = vld [vmem:[#allocation21] sm:$0xff]
    %v5180 = vld [vmem:[#allocation21 + $0x8] sm:$0xff]
    %v5181 = vld [vmem:[#allocation21 + $0x10] sm:$0xff]
    %v5182 = vld [vmem:[#allocation21 + $0x18] sm:$0xff]
    %v5183 = vld [vmem:[#allocation21 + $0x20] sm:$0xff]
    %v5184 = vld [vmem:[#allocation21 + $0x28] sm:$0xff]
    %v5185 = vld [vmem:[#allocation21 + $0x30] sm:$0xff]
    %v5186 = vld [vmem:[#allocation21 + $0x38] sm:$0xff]
    %v5187 = vld [vmem:[#allocation21 + $0x40] sm:$0xff]
    %v5188 = vld [vmem:[#allocation21 + $0x48] sm:$0xff]
    %v5189 = vld [vmem:[#allocation21 + $0x50] sm:$0xff]
    %v5190 = vld [vmem:[#allocation21 + $0x58] sm:$0xff]
    %v5191 = vld [vmem:[#allocation21 + $0x60] sm:$0xff]
    %v5192 = vld [vmem:[#allocation21 + $0x68] sm:$0xff]
    %v5193 = vld [vmem:[#allocation21 + $0x70] sm:$0xff]
    %v5194 = vld [vmem:[#allocation21 + $0x78] sm:$0xff]
    %v5195 = vld [vmem:[#allocation21 + $0x80] sm:$0xff]
    %v5196 = vld [vmem:[#allocation21 + $0x88] sm:$0xff]
    %v5197 = vld [vmem:[#allocation21 + $0x90] sm:$0xff]
    %v5198 = vld [vmem:[#allocation21 + $0x98] sm:$0xff]
    %v5199 = vld [vmem:[#allocation21 + $0xa0] sm:$0xff]
    %v5200 = vld [vmem:[#allocation21 + $0xa8] sm:$0xff]
    %v5201 = vld [vmem:[#allocation21 + $0xb0] sm:$0xff]
    %v5202 = vld [vmem:[#allocation21 + $0xb8] sm:$0xff]
    %v5203 = vld [vmem:[#allocation21 + $0xc0] sm:$0xff]
    %v5204 = vld [vmem:[#allocation21 + $0xc8] sm:$0xff]
    %v5205 = vld [vmem:[#allocation21 + $0xd0] sm:$0xff]
    %v5206 = vld [vmem:[#allocation21 + $0xd8] sm:$0xff]
    %v5207 = vld [vmem:[#allocation21 + $0xe0] sm:$0xff]
    %v5208 = vld [vmem:[#allocation21 + $0xe8] sm:$0xff]
    %v5209 = vld [vmem:[#allocation21 + $0xf0] sm:$0xff]
    %v5210 = vld [vmem:[#allocation21 + $0xf8] sm:$0xff]
    %v5211 = vld [vmem:[#allocation21 + $0x100] sm:$0xff]
    %v5212 = vld [vmem:[#allocation21 + $0x108] sm:$0xff]
    %v5213 = vld [vmem:[#allocation21 + $0x110] sm:$0xff]
    %v5214 = vld [vmem:[#allocation21 + $0x118] sm:$0xff]
    %v5215 = vld [vmem:[#allocation21 + $0x120] sm:$0xff]
    %v5216 = vld [vmem:[#allocation21 + $0x128] sm:$0xff]
    %v5217 = vld [vmem:[#allocation21 + $0x130] sm:$0xff]
    %v5218 = vld [vmem:[#allocation21 + $0x138] sm:$0xff]
    %v5219 = vld [vmem:[#allocation21 + $0x140] sm:$0xff]
    %v5220 = vld [vmem:[#allocation21 + $0x148] sm:$0xff]
    %v5221 = vld [vmem:[#allocation21 + $0x150] sm:$0xff]
    %v5222 = vld [vmem:[#allocation21 + $0x158] sm:$0xff]
    %v5223 = vld [vmem:[#allocation21 + $0x160] sm:$0xff]
    %v5224 = vld [vmem:[#allocation21 + $0x168] sm:$0xff]
    %v5225 = vld [vmem:[#allocation21 + $0x170] sm:$0xff]
    %v5226 = vld [vmem:[#allocation21 + $0x178] sm:$0xff]
    %v5227 = vld [vmem:[#allocation21 + $0x180] sm:$0xff]
    %v5228 = vld [vmem:[#allocation21 + $0x188] sm:$0xff]
    %v5229 = vld [vmem:[#allocation21 + $0x190] sm:$0xff]
    %v5230 = vld [vmem:[#allocation21 + $0x198] sm:$0xff]
    %v5231 = vld [vmem:[#allocation21 + $0x1a0] sm:$0xff]
    %v5232 = vld [vmem:[#allocation21 + $0x1a8] sm:$0xff]
    %v5233 = vld [vmem:[#allocation21 + $0x1b0] sm:$0xff]
    %v5234 = vld [vmem:[#allocation21 + $0x1b8] sm:$0xff]
    %v5235 = vld [vmem:[#allocation21 + $0x1c0] sm:$0xff]
    %v5236 = vld [vmem:[#allocation21 + $0x1c8] sm:$0xff]
    %v5237 = vld [vmem:[#allocation21 + $0x1d0] sm:$0xff]
    %v5238 = vld [vmem:[#allocation21 + $0x1d8] sm:$0xff]
    %v5239 = vld [vmem:[#allocation21 + $0x1e0] sm:$0xff]
    %v5240 = vld [vmem:[#allocation21 + $0x1e8] sm:$0xff]
    %v5241 = vld [vmem:[#allocation21 + $0x1f0] sm:$0xff]
    %v5242 = vld [vmem:[#allocation21 + $0x1f8] sm:$0xff]
    %v5243 = vld [vmem:[%s15] sm:$0x3]
    %v5245 = vlaneseq
    %v5246 = vshrl.u32 %v5245, 7
    %v5247 = vsub.s32 0, %v5246
    %v5248 = vrot.slane %v5243, %v5247
    %v5249 = vlaneseq
    %v5250 = vshrl.u32 %v5249, 7
    %v5251 = vsub.s32 1, %v5250
    %v5252 = vrot.slane %v5243, %v5251
    %v5319 = vunpack.c.l.b16 %v5179
    %v5320 = vunpack.c.h.b16 %v5179
    %v5321 = vunpack.c.l.b16 %v5180
    %v5322 = vunpack.c.h.b16 %v5180
    %v5323 = vunpack.c.l.b16 %v5181
    %v5324 = vunpack.c.h.b16 %v5181
    %v5325 = vunpack.c.l.b16 %v5182
    %v5326 = vunpack.c.h.b16 %v5182
    %v5327 = vunpack.c.l.b16 %v5183
    %v5328 = vunpack.c.h.b16 %v5183
    %v5329 = vunpack.c.l.b16 %v5184
    %v5330 = vunpack.c.h.b16 %v5184
    %v5331 = vunpack.c.l.b16 %v5185
    %v5332 = vunpack.c.h.b16 %v5185
    %v5333 = vunpack.c.l.b16 %v5186
    %v5334 = vunpack.c.h.b16 %v5186
    %v5335 = vunpack.c.l.b16 %v5187
    %v5336 = vunpack.c.h.b16 %v5187
    %v5337 = vunpack.c.l.b16 %v5188
    %v5338 = vunpack.c.h.b16 %v5188
    %v5339 = vunpack.c.l.b16 %v5189
    %v5340 = vunpack.c.h.b16 %v5189
    %v5341 = vunpack.c.l.b16 %v5190
    %v5342 = vunpack.c.h.b16 %v5190
    %v5343 = vunpack.c.l.b16 %v5191
    %v5344 = vunpack.c.h.b16 %v5191
    %v5345 = vunpack.c.l.b16 %v5192
    %v5346 = vunpack.c.h.b16 %v5192
    %v5347 = vunpack.c.l.b16 %v5193
    %v5348 = vunpack.c.h.b16 %v5193
    %v5349 = vunpack.c.l.b16 %v5194
    %v5350 = vunpack.c.h.b16 %v5194
    %v5351 = vunpack.c.l.b16 %v5195
    %v5352 = vunpack.c.h.b16 %v5195
    %v5353 = vunpack.c.l.b16 %v5196
    %v5354 = vunpack.c.h.b16 %v5196
    %v5355 = vunpack.c.l.b16 %v5197
    %v5356 = vunpack.c.h.b16 %v5197
    %v5357 = vunpack.c.l.b16 %v5198
    %v5358 = vunpack.c.h.b16 %v5198
    %v5359 = vunpack.c.l.b16 %v5199
    %v5360 = vunpack.c.h.b16 %v5199
    %v5361 = vunpack.c.l.b16 %v5200
    %v5362 = vunpack.c.h.b16 %v5200
    %v5363 = vunpack.c.l.b16 %v5201
    %v5364 = vunpack.c.h.b16 %v5201
    %v5365 = vunpack.c.l.b16 %v5202
    %v5366 = vunpack.c.h.b16 %v5202
    %v5367 = vunpack.c.l.b16 %v5203
    %v5368 = vunpack.c.h.b16 %v5203
    %v5369 = vunpack.c.l.b16 %v5204
    %v5370 = vunpack.c.h.b16 %v5204
    %v5371 = vunpack.c.l.b16 %v5205
    %v5372 = vunpack.c.h.b16 %v5205
    %v5373 = vunpack.c.l.b16 %v5206
    %v5374 = vunpack.c.h.b16 %v5206
    %v5375 = vunpack.c.l.b16 %v5207
    %v5376 = vunpack.c.h.b16 %v5207
    %v5377 = vunpack.c.l.b16 %v5208
    %v5378 = vunpack.c.h.b16 %v5208
    %v5379 = vunpack.c.l.b16 %v5209
    %v5380 = vunpack.c.h.b16 %v5209
    %v5381 = vunpack.c.l.b16 %v5210
    %v5382 = vunpack.c.h.b16 %v5210
    %v5383 = vunpack.c.l.b16 %v5211
    %v5384 = vunpack.c.h.b16 %v5211
    %v5385 = vunpack.c.l.b16 %v5212
    %v5386 = vunpack.c.h.b16 %v5212
    %v5387 = vunpack.c.l.b16 %v5213
    %v5388 = vunpack.c.h.b16 %v5213
    %v5389 = vunpack.c.l.b16 %v5214
    %v5390 = vunpack.c.h.b16 %v5214
    %v5391 = vunpack.c.l.b16 %v5215
    %v5392 = vunpack.c.h.b16 %v5215
    %v5393 = vunpack.c.l.b16 %v5216
    %v5394 = vunpack.c.h.b16 %v5216
    %v5395 = vunpack.c.l.b16 %v5217
    %v5396 = vunpack.c.h.b16 %v5217
    %v5397 = vunpack.c.l.b16 %v5218
    %v5398 = vunpack.c.h.b16 %v5218
    %v5399 = vunpack.c.l.b16 %v5219
    %v5400 = vunpack.c.h.b16 %v5219
    %v5401 = vunpack.c.l.b16 %v5220
    %v5402 = vunpack.c.h.b16 %v5220
    %v5403 = vunpack.c.l.b16 %v5221
    %v5404 = vunpack.c.h.b16 %v5221
    %v5405 = vunpack.c.l.b16 %v5222
    %v5406 = vunpack.c.h.b16 %v5222
    %v5407 = vunpack.c.l.b16 %v5223
    %v5408 = vunpack.c.h.b16 %v5223
    %v5409 = vunpack.c.l.b16 %v5224
    %v5410 = vunpack.c.h.b16 %v5224
    %v5411 = vunpack.c.l.b16 %v5225
    %v5412 = vunpack.c.h.b16 %v5225
    %v5413 = vunpack.c.l.b16 %v5226
    %v5414 = vunpack.c.h.b16 %v5226
    %v5415 = vunpack.c.l.b16 %v5227
    %v5416 = vunpack.c.h.b16 %v5227
    %v5417 = vunpack.c.l.b16 %v5228
    %v5418 = vunpack.c.h.b16 %v5228
    %v5419 = vunpack.c.l.b16 %v5229
    %v5420 = vunpack.c.h.b16 %v5229
    %v5421 = vunpack.c.l.b16 %v5230
    %v5422 = vunpack.c.h.b16 %v5230
    %v5423 = vunpack.c.l.b16 %v5231
    %v5424 = vunpack.c.h.b16 %v5231
    %v5425 = vunpack.c.l.b16 %v5232
    %v5426 = vunpack.c.h.b16 %v5232
    %v5427 = vunpack.c.l.b16 %v5233
    %v5428 = vunpack.c.h.b16 %v5233
    %v5429 = vunpack.c.l.b16 %v5234
    %v5430 = vunpack.c.h.b16 %v5234
    %v5431 = vunpack.c.l.b16 %v5235
    %v5432 = vunpack.c.h.b16 %v5235
    %v5433 = vunpack.c.l.b16 %v5236
    %v5434 = vunpack.c.h.b16 %v5236
    %v5435 = vunpack.c.l.b16 %v5237
    %v5436 = vunpack.c.h.b16 %v5237
    %v5437 = vunpack.c.l.b16 %v5238
    %v5438 = vunpack.c.h.b16 %v5238
    %v5439 = vunpack.c.l.b16 %v5239
    %v5440 = vunpack.c.h.b16 %v5239
    %v5441 = vunpack.c.l.b16 %v5240
    %v5442 = vunpack.c.h.b16 %v5240
    %v5443 = vunpack.c.l.b16 %v5241
    %v5444 = vunpack.c.h.b16 %v5241
    %v5445 = vunpack.c.l.b16 %v5242
    %v5446 = vunpack.c.h.b16 %v5242
    %v5447 = vpack.c.b16 %v5321, %v5319
    %v5448 = vpack.c.b16 %v5322, %v5320
    %v5449 = vpack.c.b16 %v5325, %v5323
    %v5450 = vpack.c.b16 %v5326, %v5324
    %v5451 = vpack.c.b16 %v5329, %v5327
    %v5452 = vpack.c.b16 %v5330, %v5328
    %v5453 = vpack.c.b16 %v5333, %v5331
    %v5454 = vpack.c.b16 %v5334, %v5332
    %v5455 = vpack.c.b16 %v5337, %v5335
    %v5456 = vpack.c.b16 %v5338, %v5336
    %v5457 = vpack.c.b16 %v5341, %v5339
    %v5458 = vpack.c.b16 %v5342, %v5340
    %v5459 = vpack.c.b16 %v5345, %v5343
    %v5460 = vpack.c.b16 %v5346, %v5344
    %v5461 = vpack.c.b16 %v5349, %v5347
    %v5462 = vpack.c.b16 %v5350, %v5348
    %v5463 = vpack.c.b16 %v5353, %v5351
    %v5464 = vpack.c.b16 %v5354, %v5352
    %v5465 = vpack.c.b16 %v5357, %v5355
    %v5466 = vpack.c.b16 %v5358, %v5356
    %v5467 = vpack.c.b16 %v5361, %v5359
    %v5468 = vpack.c.b16 %v5362, %v5360
    %v5469 = vpack.c.b16 %v5365, %v5363
    %v5470 = vpack.c.b16 %v5366, %v5364
    %v5471 = vpack.c.b16 %v5369, %v5367
    %v5472 = vpack.c.b16 %v5370, %v5368
    %v5473 = vpack.c.b16 %v5373, %v5371
    %v5474 = vpack.c.b16 %v5374, %v5372
    %v5475 = vpack.c.b16 %v5377, %v5375
    %v5476 = vpack.c.b16 %v5378, %v5376
    %v5477 = vpack.c.b16 %v5381, %v5379
    %v5478 = vpack.c.b16 %v5382, %v5380
    %v5479 = vpack.c.b16 %v5385, %v5383
    %v5480 = vpack.c.b16 %v5386, %v5384
    %v5481 = vpack.c.b16 %v5389, %v5387
    %v5482 = vpack.c.b16 %v5390, %v5388
    %v5483 = vpack.c.b16 %v5393, %v5391
    %v5484 = vpack.c.b16 %v5394, %v5392
    %v5485 = vpack.c.b16 %v5397, %v5395
    %v5486 = vpack.c.b16 %v5398, %v5396
    %v5487 = vpack.c.b16 %v5401, %v5399
    %v5488 = vpack.c.b16 %v5402, %v5400
    %v5489 = vpack.c.b16 %v5405, %v5403
    %v5490 = vpack.c.b16 %v5406, %v5404
    %v5491 = vpack.c.b16 %v5409, %v5407
    %v5492 = vpack.c.b16 %v5410, %v5408
    %v5493 = vpack.c.b16 %v5413, %v5411
    %v5494 = vpack.c.b16 %v5414, %v5412
    %v5495 = vpack.c.b16 %v5417, %v5415
    %v5496 = vpack.c.b16 %v5418, %v5416
    %v5497 = vpack.c.b16 %v5421, %v5419
    %v5498 = vpack.c.b16 %v5422, %v5420
    %v5499 = vpack.c.b16 %v5425, %v5423
    %v5500 = vpack.c.b16 %v5426, %v5424
    %v5501 = vpack.c.b16 %v5429, %v5427
    %v5502 = vpack.c.b16 %v5430, %v5428
    %v5503 = vpack.c.b16 %v5433, %v5431
    %v5504 = vpack.c.b16 %v5434, %v5432
    %v5505 = vpack.c.b16 %v5437, %v5435
    %v5506 = vpack.c.b16 %v5438, %v5436
    %v5507 = vpack.c.b16 %v5441, %v5439
    %v5508 = vpack.c.b16 %v5442, %v5440
    %v5509 = vpack.c.b16 %v5445, %v5443
    %v5510 = vpack.c.b16 %v5446, %v5444
    %5575 = vmatprep.subr.bf16.mxu0 %v5448
    %5576 = vmatpush1.bf16.msra.mxu0 %v5447
    %5577 = vmatprep.subr.bf16.mxu0 %v5450
    %5578 = vmatpush1.bf16.msra.mxu0 %v5449
    %5579 = vmatprep.subr.bf16.mxu0 %v5452
    %5580 = vmatpush1.bf16.msra.mxu0 %v5451
    %5581 = vmatprep.subr.bf16.mxu0 %v5454
    %5582 = vmatpush1.bf16.msra.mxu0 %v5453
    %5583 = vmatprep.subr.bf16.mxu0 %v5456
    %5584 = vmatpush1.bf16.msra.mxu0 %v5455
    %5585 = vmatprep.subr.bf16.mxu0 %v5458
    %5586 = vmatpush1.bf16.msra.mxu0 %v5457
    %5587 = vmatprep.subr.bf16.mxu0 %v5460
    %5588 = vmatpush1.bf16.msra.mxu0 %v5459
    %5589 = vmatprep.subr.bf16.mxu0 %v5462
    %5590 = vmatpush1.bf16.msra.mxu0 %v5461
    %5591 = vmatprep.subr.bf16.mxu0 %v5464
    %5592 = vmatpush1.bf16.msra.mxu0 %v5463
    %5593 = vmatprep.subr.bf16.mxu0 %v5466
    %5594 = vmatpush1.bf16.msra.mxu0 %v5465
    %5595 = vmatprep.subr.bf16.mxu0 %v5468
    %5596 = vmatpush1.bf16.msra.mxu0 %v5467
    %5597 = vmatprep.subr.bf16.mxu0 %v5470
    %5598 = vmatpush1.bf16.msra.mxu0 %v5469
    %5599 = vmatprep.subr.bf16.mxu0 %v5472
    %5600 = vmatpush1.bf16.msra.mxu0 %v5471
    %5601 = vmatprep.subr.bf16.mxu0 %v5474
    %5602 = vmatpush1.bf16.msra.mxu0 %v5473
    %5603 = vmatprep.subr.bf16.mxu0 %v5476
    %5604 = vmatpush1.bf16.msra.mxu0 %v5475
    %5605 = vmatprep.subr.bf16.mxu0 %v5478
    %5606 = vmatpush1.bf16.msra.mxu0 %v5477
    %5607 = vmatprep.mubr.bf16.mxu0 %v5148
    %5608 = vmatmul.mubr.bf16.gmra.mrb[0].mxu0 %v5147
    %v5609 = vpop.f32.mrb[0].mxu0
    %v5610 = vadd.f32 %v5248, %v5609
    %v5611 = vpop.f32.mrb[0].mxu0
    %v5612 = vadd.f32 %v5252, %v5611
    %v5613 = vpop.f32.mrb[0].mxu0
    %v5614 = vadd.f32 %v5248, %v5613
    %v5615 = vpop.f32.mrb[0].mxu0
    %v5616 = vadd.f32 %v5252, %v5615
    %5617 = vmatprep.mubr.bf16.mxu0 %v5152
    %5618 = vmatmul.mubr.bf16.gmra.mrb[0].mxu0 %v5151
    %v5619 = vpop.f32.mrb[0].mxu0
    %v5620 = vadd.f32 %v5248, %v5619
    %v5621 = vpop.f32.mrb[0].mxu0
    %v5622 = vadd.f32 %v5252, %v5621
    %v5623 = vpop.f32.mrb[0].mxu0
    %v5624 = vadd.f32 %v5248, %v5623
    %v5625 = vpop.f32.mrb[0].mxu0
    %v5626 = vadd.f32 %v5252, %v5625
    %5627 = vmatprep.mubr.bf16.mxu0 %v5156
    %5628 = vmatmul.mubr.bf16.gmra.mrb[0].mxu0 %v5155
    %v5629 = vpop.f32.mrb[0].mxu0
    %v5630 = vadd.f32 %v5248, %v5629
    %v5631 = vpop.f32.mrb[0].mxu0
    %v5632 = vadd.f32 %v5252, %v5631
    %v5633 = vpop.f32.mrb[0].mxu0
    %v5634 = vadd.f32 %v5248, %v5633
    %v5635 = vpop.f32.mrb[0].mxu0
    %v5636 = vadd.f32 %v5252, %v5635
    %5637 = vmatprep.mubr.bf16.mxu0 %v5160
    %5638 = vmatmul.mubr.bf16.gmra.mrb[0].mxu0 %v5159
    %v5639 = vpop.f32.mrb[0].mxu0
    %v5640 = vadd.f32 %v5248, %v5639
    %v5641 = vpop.f32.mrb[0].mxu0
    %v5642 = vadd.f32 %v5252, %v5641
    %v5643 = vpop.f32.mrb[0].mxu0
    %v5644 = vadd.f32 %v5248, %v5643
    %v5645 = vpop.f32.mrb[0].mxu0
    %v5646 = vadd.f32 %v5252, %v5645
    %5647 = vmatprep.mubr.bf16.mxu0 %v5164
    %5648 = vmatmul.mubr.bf16.gmra.mrb[0].mxu0 %v5163
    %v5649 = vpop.f32.mrb[0].mxu0
    %v5650 = vadd.f32 %v5248, %v5649
    %v5651 = vpop.f32.mrb[0].mxu0
    %v5652 = vadd.f32 %v5252, %v5651
    %v5653 = vpop.f32.mrb[0].mxu0
    %v5654 = vadd.f32 %v5248, %v5653
    %v5655 = vpop.f32.mrb[0].mxu0
    %v5656 = vadd.f32 %v5252, %v5655
    %5657 = vmatprep.mubr.bf16.mxu0 %v5168
    %5658 = vmatmul.mubr.bf16.gmra.mrb[0].mxu0 %v5167
    %v5659 = vpop.f32.mrb[0].mxu0
    %v5660 = vadd.f32 %v5248, %v5659
    %v5661 = vpop.f32.mrb[0].mxu0
    %v5662 = vadd.f32 %v5252, %v5661
    %v5663 = vpop.f32.mrb[0].mxu0
    %v5664 = vadd.f32 %v5248, %v5663
    %v5665 = vpop.f32.mrb[0].mxu0
    %v5666 = vadd.f32 %v5252, %v5665
    %5667 = vmatprep.mubr.bf16.mxu0 %v5172
    %5668 = vmatmul.mubr.bf16.gmra.mrb[0].mxu0 %v5171
    %v5669 = vpop.f32.mrb[0].mxu0
    %v5670 = vadd.f32 %v5248, %v5669
    %v5671 = vpop.f32.mrb[0].mxu0
    %v5672 = vadd.f32 %v5252, %v5671
    %v5673 = vpop.f32.mrb[0].mxu0
    %v5674 = vadd.f32 %v5248, %v5673
    %v5675 = vpop.f32.mrb[0].mxu0
    %v5676 = vadd.f32 %v5252, %v5675
    %5677 = vmatprep.mubr.bf16.mxu0 %v5176
    %5678 = vmatmul.mubr.bf16.gmra.mrb[0].mxu0 %v5175
    %v5679 = vpop.f32.mrb[0].mxu0
    %v5680 = vadd.f32 %v5248, %v5679
    %v5681 = vpop.f32.mrb[0].mxu0
    %v5682 = vadd.f32 %v5252, %v5681
    %v5683 = vpop.f32.mrb[0].mxu0
    %v5684 = vadd.f32 %v5248, %v5683
    %v5685 = vpop.f32.mrb[0].mxu0
    %v5686 = vadd.f32 %v5252, %v5685
    %5687 = vdwg.mxu0
    %5688 = vmatprep.subr.bf16.mxu0 %v5480
    %5689 = vmatpush1.bf16.msra.mxu0 %v5479
    %5690 = vmatprep.subr.bf16.mxu0 %v5482
    %5691 = vmatpush1.bf16.msra.mxu0 %v5481
    %5692 = vmatprep.subr.bf16.mxu0 %v5484
    %5693 = vmatpush1.bf16.msra.mxu0 %v5483
    %5694 = vmatprep.subr.bf16.mxu0 %v5486
    %5695 = vmatpush1.bf16.msra.mxu0 %v5485
    %5696 = vmatprep.subr.bf16.mxu0 %v5488
    %5697 = vmatpush1.bf16.msra.mxu0 %v5487
    %5698 = vmatprep.subr.bf16.mxu0 %v5490
    %5699 = vmatpush1.bf16.msra.mxu0 %v5489
    %5700 = vmatprep.subr.bf16.mxu0 %v5492
    %5701 = vmatpush1.bf16.msra.mxu0 %v5491
    %5702 = vmatprep.subr.bf16.mxu0 %v5494
    %5703 = vmatpush1.bf16.msra.mxu0 %v5493
    %5704 = vmatprep.subr.bf16.mxu0 %v5496
    %5705 = vmatpush1.bf16.msra.mxu0 %v5495
    %5706 = vmatprep.subr.bf16.mxu0 %v5498
    %5707 = vmatpush1.bf16.msra.mxu0 %v5497
    %5708 = vmatprep.subr.bf16.mxu0 %v5500
    %5709 = vmatpush1.bf16.msra.mxu0 %v5499
    %5710 = vmatprep.subr.bf16.mxu0 %v5502
    %5711 = vmatpush1.bf16.msra.mxu0 %v5501
    %5712 = vmatprep.subr.bf16.mxu0 %v5504
    %5713 = vmatpush1.bf16.msra.mxu0 %v5503
    %5714 = vmatprep.subr.bf16.mxu0 %v5506
    %5715 = vmatpush1.bf16.msra.mxu0 %v5505
    %5716 = vmatprep.subr.bf16.mxu0 %v5508
    %5717 = vmatpush1.bf16.msra.mxu0 %v5507
    %5718 = vmatprep.subr.bf16.mxu0 %v5510
    %5719 = vmatpush1.bf16.msra.mxu0 %v5509
    %5720 = vmatprep.mubr.bf16.mxu0 %v5150
    %5721 = vmatmul.mubr.bf16.gmra.mrb[0].mxu0 %v5149
    %v5722 = vpop.f32.mrb[0].mxu0
    %v5723 = vadd.f32 %v5610, %v5722
    %v5724 = vpop.f32.mrb[0].mxu0
    %v5725 = vadd.f32 %v5612, %v5724
    %v5726 = vpop.f32.mrb[0].mxu0
    %v5727 = vadd.f32 %v5614, %v5726
    %v5728 = vpop.f32.mrb[0].mxu0
    %v5729 = vadd.f32 %v5616, %v5728
    %5730 = vmatprep.mubr.bf16.mxu0 %v5154
    %5731 = vmatmul.mubr.bf16.gmra.mrb[0].mxu0 %v5153
    %v5732 = vpop.f32.mrb[0].mxu0
    %v5733 = vadd.f32 %v5620, %v5732
    %v5734 = vpop.f32.mrb[0].mxu0
    %v5735 = vadd.f32 %v5622, %v5734
    %v5736 = vpop.f32.mrb[0].mxu0
    %v5737 = vadd.f32 %v5624, %v5736
    %v5738 = vpop.f32.mrb[0].mxu0
    %v5739 = vadd.f32 %v5626, %v5738
    %5740 = vmatprep.mubr.bf16.mxu0 %v5158
    %5741 = vmatmul.mubr.bf16.gmra.mrb[0].mxu0 %v5157
    %v5742 = vpop.f32.mrb[0].mxu0
    %v5743 = vadd.f32 %v5630, %v5742
    %v5744 = vpop.f32.mrb[0].mxu0
    %v5745 = vadd.f32 %v5632, %v5744
    %v5746 = vpop.f32.mrb[0].mxu0
    %v5747 = vadd.f32 %v5634, %v5746
    %v5748 = vpop.f32.mrb[0].mxu0
    %v5749 = vadd.f32 %v5636, %v5748
    %5750 = vmatprep.mubr.bf16.mxu0 %v5162
    %5751 = vmatmul.mubr.bf16.gmra.mrb[0].mxu0 %v5161
    %v5752 = vpop.f32.mrb[0].mxu0
    %v5753 = vadd.f32 %v5640, %v5752
    %v5754 = vpop.f32.mrb[0].mxu0
    %v5755 = vadd.f32 %v5642, %v5754
    %v5756 = vpop.f32.mrb[0].mxu0
    %v5757 = vadd.f32 %v5644, %v5756
    %v5758 = vpop.f32.mrb[0].mxu0
    %v5759 = vadd.f32 %v5646, %v5758
    %5760 = vmatprep.mubr.bf16.mxu0 %v5166
    %5761 = vmatmul.mubr.bf16.gmra.mrb[0].mxu0 %v5165
    %v5762 = vpop.f32.mrb[0].mxu0
    %v5763 = vadd.f32 %v5650, %v5762
    %v5764 = vpop.f32.mrb[0].mxu0
    %v5765 = vadd.f32 %v5652, %v5764
    %v5766 = vpop.f32.mrb[0].mxu0
    %v5767 = vadd.f32 %v5654, %v5766
    %v5768 = vpop.f32.mrb[0].mxu0
    %v5769 = vadd.f32 %v5656, %v5768
    %5770 = vmatprep.mubr.bf16.mxu0 %v5170
    %5771 = vmatmul.mubr.bf16.gmra.mrb[0].mxu0 %v5169
    %v5772 = vpop.f32.mrb[0].mxu0
    %v5773 = vadd.f32 %v5660, %v5772
    %v5774 = vpop.f32.mrb[0].mxu0
    %v5775 = vadd.f32 %v5662, %v5774
    %v5776 = vpop.f32.mrb[0].mxu0
    %v5777 = vadd.f32 %v5664, %v5776
    %v5778 = vpop.f32.mrb[0].mxu0
    %v5779 = vadd.f32 %v5666, %v5778
    %5780 = vmatprep.mubr.bf16.mxu0 %v5174
    %5781 = vmatmul.mubr.bf16.gmra.mrb[0].mxu0 %v5173
    %v5782 = vpop.f32.mrb[0].mxu0
    %v5783 = vadd.f32 %v5670, %v5782
    %v5784 = vpop.f32.mrb[0].mxu0
    %v5785 = vadd.f32 %v5672, %v5784
    %v5786 = vpop.f32.mrb[0].mxu0
    %v5787 = vadd.f32 %v5674, %v5786
    %v5788 = vpop.f32.mrb[0].mxu0
    %v5789 = vadd.f32 %v5676, %v5788
    %5790 = vmatprep.mubr.bf16.mxu0 %v5178
    %5791 = vmatmul.mubr.bf16.gmra.mrb[0].mxu0 %v5177
    %v5792 = vpop.f32.mrb[0].mxu0
    %v5793 = vadd.f32 %v5680, %v5792
    %v5794 = vpop.f32.mrb[0].mxu0
    %v5795 = vadd.f32 %v5682, %v5794
    %v5796 = vpop.f32.mrb[0].mxu0
    %v5797 = vadd.f32 %v5684, %v5796
    %v5798 = vpop.f32.mrb[0].mxu0
    %v5799 = vadd.f32 %v5686, %v5798
    %5800 = vdwg.mxu0
    %v5801 = vtanh.pop %v5723
    %v5802 = vtanh.pop %v5725
    %v5803 = vtanh.pop %v5727
    %v5804 = vtanh.pop %v5729
    %v5805 = vtanh.pop %v5733
    %v5806 = vtanh.pop %v5735
    %v5807 = vtanh.pop %v5737
    %v5808 = vtanh.pop %v5739
    %v5809 = vtanh.pop %v5743
    %v5810 = vtanh.pop %v5745
    %v5811 = vtanh.pop %v5747
    %v5812 = vtanh.pop %v5749
    %v5813 = vtanh.pop %v5753
    %v5814 = vtanh.pop %v5755
    %v5815 = vtanh.pop %v5757
    %v5816 = vtanh.pop %v5759
    %v5817 = vtanh.pop %v5763
    %v5818 = vtanh.pop %v5765
    %v5819 = vtanh.pop %v5767
    %v5820 = vtanh.pop %v5769
    %v5821 = vtanh.pop %v5773
    %v5822 = vtanh.pop %v5775
    %v5823 = vtanh.pop %v5777
    %v5824 = vtanh.pop %v5779
    %v5825 = vtanh.pop %v5783
    %v5826 = vtanh.pop %v5785
    %v5827 = vtanh.pop %v5787
    %v5828 = vtanh.pop %v5789
    %v5829 = vtanh.pop %v5793
    %v5830 = vtanh.pop %v5795
    %v5831 = vtanh.pop %v5797
    %v5832 = vtanh.pop %v5799
    %v5833 = vpack.c.bf16 %v5803, %v5801
    %v5834 = vpack.c.bf16 %v5804, %v5802
    %v5835 = vpack.c.bf16 %v5807, %v5805
    %v5836 = vpack.c.bf16 %v5808, %v5806
    %v5837 = vpack.c.bf16 %v5811, %v5809
    %v5838 = vpack.c.bf16 %v5812, %v5810
    %v5839 = vpack.c.bf16 %v5815, %v5813
    %v5840 = vpack.c.bf16 %v5816, %v5814
    %v5841 = vpack.c.bf16 %v5819, %v5817
    %v5842 = vpack.c.bf16 %v5820, %v5818
    %v5843 = vpack.c.bf16 %v5823, %v5821
    %v5844 = vpack.c.bf16 %v5824, %v5822
    %v5845 = vpack.c.bf16 %v5827, %v5825
    %v5846 = vpack.c.bf16 %v5828, %v5826
    %v5847 = vpack.c.bf16 %v5831, %v5829
    %v5848 = vpack.c.bf16 %v5832, %v5830
    %v5849 = vld [vmem:[%s16] sm:$0xf]
    %v5850 = vld [vmem:[%s16 + $0x4] sm:$0xf]
    %v5851 = vld [vmem:[%s16 + $0x8] sm:$0xf]
    %v5852 = vld [vmem:[%s16 + $0xc] sm:$0xf]
    %v5853 = vld [vmem:[%s16 + $0x10] sm:$0xf]
    %v5854 = vld [vmem:[%s16 + $0x14] sm:$0xf]
    %v5855 = vld [vmem:[%s16 + $0x18] sm:$0xf]
    %v5856 = vld [vmem:[%s16 + $0x1c] sm:$0xf]
    %v5857 = vld [vmem:[%s16 + $0x20] sm:$0xf]
    %v5858 = vld [vmem:[%s16 + $0x24] sm:$0xf]
    %v5859 = vld [vmem:[%s16 + $0x28] sm:$0xf]
    %v5860 = vld [vmem:[%s16 + $0x2c] sm:$0xf]
    %v5861 = vld [vmem:[%s16 + $0x30] sm:$0xf]
    %v5862 = vld [vmem:[%s16 + $0x34] sm:$0xf]
    %v5863 = vld [vmem:[%s16 + $0x38] sm:$0xf]
    %v5864 = vld [vmem:[%s16 + $0x3c] sm:$0xf]
    %v5865 = vld [vmem:[%s16 + $0x40] sm:$0xf]
    %v5866 = vld [vmem:[%s16 + $0x44] sm:$0xf]
    %v5867 = vld [vmem:[%s16 + $0x48] sm:$0xf]
    %v5868 = vld [vmem:[%s16 + $0x4c] sm:$0xf]
    %v5869 = vld [vmem:[%s16 + $0x50] sm:$0xf]
    %v5870 = vld [vmem:[%s16 + $0x54] sm:$0xf]
    %v5871 = vld [vmem:[%s16 + $0x58] sm:$0xf]
    %v5872 = vld [vmem:[%s16 + $0x5c] sm:$0xf]
    %v5873 = vld [vmem:[%s16 + $0x60] sm:$0xf]
    %v5874 = vld [vmem:[%s16 + $0x64] sm:$0xf]
    %v5875 = vld [vmem:[%s16 + $0x68] sm:$0xf]
    %v5876 = vld [vmem:[%s16 + $0x6c] sm:$0xf]
    %v5877 = vld [vmem:[%s16 + $0x70] sm:$0xf]
    %v5878 = vld [vmem:[%s16 + $0x74] sm:$0xf]
    %v5879 = vld [vmem:[%s16 + $0x78] sm:$0xf]
    %v5880 = vld [vmem:[%s16 + $0x7c] sm:$0xf]
    %v5881 = vld [vmem:[%s17] sm:$0x1]
    %v5883 = vlaneseq
    %v5884 = vshrl.u32 %v5883, 7
    %v5885 = vsub.s32 0, %v5884
    %v5886 = vrot.slane %v5881, %v5885
    %v5920 = vunpack.c.l.b16 %v5849
    %v5921 = vunpack.c.l.b16 %v5850
    %v5922 = vunpack.c.l.b16 %v5851
    %v5923 = vunpack.c.l.b16 %v5852
    %v5924 = vunpack.c.l.b16 %v5853
    %v5925 = vunpack.c.l.b16 %v5854
    %v5926 = vunpack.c.l.b16 %v5855
    %v5927 = vunpack.c.l.b16 %v5856
    %v5928 = vunpack.c.l.b16 %v5857
    %v5929 = vunpack.c.l.b16 %v5858
    %v5930 = vunpack.c.l.b16 %v5859
    %v5931 = vunpack.c.l.b16 %v5860
    %v5932 = vunpack.c.l.b16 %v5861
    %v5933 = vunpack.c.l.b16 %v5862
    %v5934 = vunpack.c.l.b16 %v5863
    %v5935 = vunpack.c.l.b16 %v5864
    %v5936 = vunpack.c.l.b16 %v5865
    %v5937 = vunpack.c.l.b16 %v5866
    %v5938 = vunpack.c.l.b16 %v5867
    %v5939 = vunpack.c.l.b16 %v5868
    %v5940 = vunpack.c.l.b16 %v5869
    %v5941 = vunpack.c.l.b16 %v5870
    %v5942 = vunpack.c.l.b16 %v5871
    %v5943 = vunpack.c.l.b16 %v5872
    %v5944 = vunpack.c.l.b16 %v5873
    %v5945 = vunpack.c.l.b16 %v5874
    %v5946 = vunpack.c.l.b16 %v5875
    %v5947 = vunpack.c.l.b16 %v5876
    %v5948 = vunpack.c.l.b16 %v5877
    %v5949 = vunpack.c.l.b16 %v5878
    %v5950 = vunpack.c.l.b16 %v5879
    %v5951 = vunpack.c.l.b16 %v5880
    %v5952 = vpack.c.b16 %v5921, %v5920
    %v5953 = vpack.c.b16 %v5923, %v5922
    %v5954 = vpack.c.b16 %v5925, %v5924
    %v5955 = vpack.c.b16 %v5927, %v5926
    %v5956 = vpack.c.b16 %v5929, %v5928
    %v5957 = vpack.c.b16 %v5931, %v5930
    %v5958 = vpack.c.b16 %v5933, %v5932
    %v5959 = vpack.c.b16 %v5935, %v5934
    %v5960 = vpack.c.b16 %v5937, %v5936
    %v5961 = vpack.c.b16 %v5939, %v5938
    %v5962 = vpack.c.b16 %v5941, %v5940
    %v5963 = vpack.c.b16 %v5943, %v5942
    %v5964 = vpack.c.b16 %v5945, %v5944
    %v5965 = vpack.c.b16 %v5947, %v5946
    %v5966 = vpack.c.b16 %v5949, %v5948
    %v5967 = vpack.c.b16 %v5951, %v5950
    %5984 = vmatprep.subr.bf16.mxu0 0
    %5985 = vmatpush1.bf16.msra.mxu0 %v5952
    %5986 = vmatprep.subr.bf16.mxu0 0
    %5987 = vmatpush1.bf16.msra.mxu0 %v5953
    %5988 = vmatprep.subr.bf16.mxu0 0
    %5989 = vmatpush1.bf16.msra.mxu0 %v5954
    %5990 = vmatprep.subr.bf16.mxu0 0
    %5991 = vmatpush1.bf16.msra.mxu0 %v5955
    %5992 = vmatprep.subr.bf16.mxu0 0
    %5993 = vmatpush1.bf16.msra.mxu0 %v5956
    %5994 = vmatprep.subr.bf16.mxu0 0
    %5995 = vmatpush1.bf16.msra.mxu0 %v5957
    %5996 = vmatprep.subr.bf16.mxu0 0
    %5997 = vmatpush1.bf16.msra.mxu0 %v5958
    %5998 = vmatprep.subr.bf16.mxu0 0
    %5999 = vmatpush1.bf16.msra.mxu0 %v5959
    %6000 = vmatprep.subr.bf16.mxu0 0
    %6001 = vmatpush1.bf16.msra.mxu0 %v5960
    %6002 = vmatprep.subr.bf16.mxu0 0
    %6003 = vmatpush1.bf16.msra.mxu0 %v5961
    %6004 = vmatprep.subr.bf16.mxu0 0
    %6005 = vmatpush1.bf16.msra.mxu0 %v5962
    %6006 = vmatprep.subr.bf16.mxu0 0
    %6007 = vmatpush1.bf16.msra.mxu0 %v5963
    %6008 = vmatprep.subr.bf16.mxu0 0
    %6009 = vmatpush1.bf16.msra.mxu0 %v5964
    %6010 = vmatprep.subr.bf16.mxu0 0
    %6011 = vmatpush1.bf16.msra.mxu0 %v5965
    %6012 = vmatprep.subr.bf16.mxu0 0
    %6013 = vmatpush1.bf16.msra.mxu0 %v5966
    %6014 = vmatprep.subr.bf16.mxu0 0
    %6015 = vmatpush1.bf16.msra.mxu0 %v5967
    %6016 = vmatprep.mubr.bf16.mxu0 %v5834
    %6017 = vmatmul.mubr.bf16.gmra.mrb[0].mxu0 %v5833
    %v6018 = vpop.f32.mrb[0].mxu0
    %v6019 = vadd.f32 %v5886, %v6018
    %v6020 = vpop.f32.mrb[0].mxu0
    %v6021 = vpop.f32.mrb[0].mxu0
    %v6022 = vadd.f32 %v5886, %v6021
    %v6023 = vpop.f32.mrb[0].mxu0
    %6024 = vmatprep.mubr.bf16.mxu0 %v5836
    %6025 = vmatmul.mubr.bf16.gmra.mrb[0].mxu0 %v5835
    %v6026 = vpop.f32.mrb[0].mxu0
    %v6027 = vadd.f32 %v5886, %v6026
    %v6028 = vpop.f32.mrb[0].mxu0
    %v6029 = vpop.f32.mrb[0].mxu0
    %v6030 = vadd.f32 %v5886, %v6029
    %v6031 = vpop.f32.mrb[0].mxu0
    %6032 = vmatprep.mubr.bf16.mxu0 %v5838
    %6033 = vmatmul.mubr.bf16.gmra.mrb[0].mxu0 %v5837
    %v6034 = vpop.f32.mrb[0].mxu0
    %v6035 = vadd.f32 %v5886, %v6034
    %v6036 = vpop.f32.mrb[0].mxu0
    %v6037 = vpop.f32.mrb[0].mxu0
    %v6038 = vadd.f32 %v5886, %v6037
    %v6039 = vpop.f32.mrb[0].mxu0
    %6040 = vmatprep.mubr.bf16.mxu0 %v5840
    %6041 = vmatmul.mubr.bf16.gmra.mrb[0].mxu0 %v5839
    %v6042 = vpop.f32.mrb[0].mxu0
    %v6043 = vadd.f32 %v5886, %v6042
    %v6044 = vpop.f32.mrb[0].mxu0
    %v6045 = vpop.f32.mrb[0].mxu0
    %v6046 = vadd.f32 %v5886, %v6045
    %v6047 = vpop.f32.mrb[0].mxu0
    %6048 = vmatprep.mubr.bf16.mxu0 %v5842
    %6049 = vmatmul.mubr.bf16.gmra.mrb[0].mxu0 %v5841
    %v6050 = vpop.f32.mrb[0].mxu0
    %v6051 = vadd.f32 %v5886, %v6050
    %v6052 = vpop.f32.mrb[0].mxu0
    %v6053 = vpop.f32.mrb[0].mxu0
    %v6054 = vadd.f32 %v5886, %v6053
    %v6055 = vpop.f32.mrb[0].mxu0
    %6056 = vmatprep.mubr.bf16.mxu0 %v5844
    %6057 = vmatmul.mubr.bf16.gmra.mrb[0].mxu0 %v5843
    %v6058 = vpop.f32.mrb[0].mxu0
    %v6059 = vadd.f32 %v5886, %v6058
    %v6060 = vpop.f32.mrb[0].mxu0
    %v6061 = vpop.f32.mrb[0].mxu0
    %v6062 = vadd.f32 %v5886, %v6061
    %v6063 = vpop.f32.mrb[0].mxu0
    %6064 = vmatprep.mubr.bf16.mxu0 %v5846
    %6065 = vmatmul.mubr.bf16.gmra.mrb[0].mxu0 %v5845
    %v6066 = vpop.f32.mrb[0].mxu0
    %v6067 = vadd.f32 %v5886, %v6066
    %v6068 = vpop.f32.mrb[0].mxu0
    %v6069 = vpop.f32.mrb[0].mxu0
    %v6070 = vadd.f32 %v5886, %v6069
    %v6071 = vpop.f32.mrb[0].mxu0
    %6072 = vmatprep.mubr.bf16.mxu0 %v5848
    %6073 = vmatmul.mubr.bf16.gmra.mrb[0].mxu0 %v5847
    %v6074 = vpop.f32.mrb[0].mxu0
    %v6075 = vadd.f32 %v5886, %v6074
    %v6076 = vpop.f32.mrb[0].mxu0
    %v6077 = vpop.f32.mrb[0].mxu0
    %v6078 = vadd.f32 %v5886, %v6077
    %v6079 = vpop.f32.mrb[0].mxu0
    %6080 = vdwg.mxu0
    %v6081 = vtanh.pop %v6019
    %v6082 = vtanh.pop %v6022
    %v6083 = vtanh.pop %v6027
    %v6084 = vtanh.pop %v6030
    %v6085 = vtanh.pop %v6035
    %v6086 = vtanh.pop %v6038
    %v6087 = vtanh.pop %v6043
    %v6088 = vtanh.pop %v6046
    %v6089 = vtanh.pop %v6051
    %v6090 = vtanh.pop %v6054
    %v6091 = vtanh.pop %v6059
    %v6092 = vtanh.pop %v6062
    %v6093 = vtanh.pop %v6067
    %v6094 = vtanh.pop %v6070
    %v6095 = vtanh.pop %v6075
    %v6096 = vtanh.pop %v6078
    %v6097 = vpack.c.bf16 %v6082, %v6081
    %v6098 = vpack.c.bf16 %v6084, %v6083
    %v6099 = vpack.c.bf16 %v6086, %v6085
    %v6100 = vpack.c.bf16 %v6088, %v6087
    %v6101 = vpack.c.bf16 %v6090, %v6089
    %v6102 = vpack.c.bf16 %v6092, %v6091
    %v6103 = vpack.c.bf16 %v6094, %v6093
    %v6104 = vpack.c.bf16 %v6096, %v6095
    %v6105 = vld [vmem:[#allocation22] sm:$0xf]
    %v6106 = vld [vmem:[#allocation22 + $0x4] sm:$0xf]
    %v6107 = vld [vmem:[#allocation22 + $0x8] sm:$0xf]
    %v6108 = vld [vmem:[#allocation22 + $0xc] sm:$0xf]
    %v6109 = vld [vmem:[#allocation22 + $0x10] sm:$0xf]
    %v6110 = vld [vmem:[#allocation22 + $0x14] sm:$0xf]
    %v6111 = vld [vmem:[#allocation22 + $0x18] sm:$0xf]
    %v6112 = vld [vmem:[#allocation22 + $0x1c] sm:$0xf]
    %v6113 = vld [vmem:[#allocation22 + $0x20] sm:$0xf]
    %v6114 = vld [vmem:[#allocation22 + $0x24] sm:$0xf]
    %v6115 = vld [vmem:[#allocation22 + $0x28] sm:$0xf]
    %v6116 = vld [vmem:[#allocation22 + $0x2c] sm:$0xf]
    %v6117 = vld [vmem:[#allocation22 + $0x30] sm:$0xf]
    %v6118 = vld [vmem:[#allocation22 + $0x34] sm:$0xf]
    %v6119 = vld [vmem:[#allocation22 + $0x38] sm:$0xf]
    %v6120 = vld [vmem:[#allocation22 + $0x3c] sm:$0xf]
    %v6121 = vld [vmem:[%s19] sm:$0x1]
    %v6123 = vlaneseq
    %v6124 = vshrl.u32 %v6123, 7
    %v6125 = vsub.s32 0, %v6124
    %v6126 = vrot.slane %v6121, %v6125
    %v6144 = vunpack.c.l.b16 %v6105
    %v6145 = vunpack.c.l.b16 %v6106
    %v6146 = vunpack.c.l.b16 %v6107
    %v6147 = vunpack.c.l.b16 %v6108
    %v6148 = vunpack.c.l.b16 %v6109
    %v6149 = vunpack.c.l.b16 %v6110
    %v6150 = vunpack.c.l.b16 %v6111
    %v6151 = vunpack.c.l.b16 %v6112
    %v6152 = vunpack.c.l.b16 %v6113
    %v6153 = vunpack.c.l.b16 %v6114
    %v6154 = vunpack.c.l.b16 %v6115
    %v6155 = vunpack.c.l.b16 %v6116
    %v6156 = vunpack.c.l.b16 %v6117
    %v6157 = vunpack.c.l.b16 %v6118
    %v6158 = vunpack.c.l.b16 %v6119
    %v6159 = vunpack.c.l.b16 %v6120
    %v6160 = vpack.c.b16 %v6145, %v6144
    %v6161 = vpack.c.b16 %v6147, %v6146
    %v6162 = vpack.c.b16 %v6149, %v6148
    %v6163 = vpack.c.b16 %v6151, %v6150
    %v6164 = vpack.c.b16 %v6153, %v6152
    %v6165 = vpack.c.b16 %v6155, %v6154
    %v6166 = vpack.c.b16 %v6157, %v6156
    %v6167 = vpack.c.b16 %v6159, %v6158
    %6176 = vmatprep.subr.bf16.mxu0 0
    %6177 = vmatpush1.bf16.msra.mxu0 %v6160
    %6178 = vmatprep.subr.bf16.mxu0 0
    %6179 = vmatpush1.bf16.msra.mxu0 %v6161
    %6180 = vmatprep.subr.bf16.mxu0 0
    %6181 = vmatpush1.bf16.msra.mxu0 %v6162
    %6182 = vmatprep.subr.bf16.mxu0 0
    %6183 = vmatpush1.bf16.msra.mxu0 %v6163
    %6184 = vmatprep.subr.bf16.mxu0 0
    %6185 = vmatpush1.bf16.msra.mxu0 %v6164
    %6186 = vmatprep.subr.bf16.mxu0 0
    %6187 = vmatpush1.bf16.msra.mxu0 %v6165
    %6188 = vmatprep.subr.bf16.mxu0 0
    %6189 = vmatpush1.bf16.msra.mxu0 %v6166
    %6190 = vmatprep.subr.bf16.mxu0 0
    %6191 = vmatpush1.bf16.msra.mxu0 %v6167
    %6192 = vmatprep.subr.bf16.mxu0 0
    %6193 = vmatpush1.bf16.msra.mxu0 0
    %6194 = vmatprep.subr.bf16.mxu0 0
    %6195 = vmatpush1.bf16.msra.mxu0 0
    %6196 = vmatprep.subr.bf16.mxu0 0
    %6197 = vmatpush1.bf16.msra.mxu0 0
    %6198 = vmatprep.subr.bf16.mxu0 0
    %6199 = vmatpush1.bf16.msra.mxu0 0
    %6200 = vmatprep.subr.bf16.mxu0 0
    %6201 = vmatpush1.bf16.msra.mxu0 0
    %6202 = vmatprep.subr.bf16.mxu0 0
    %6203 = vmatpush1.bf16.msra.mxu0 0
    %6204 = vmatprep.subr.bf16.mxu0 0
    %6205 = vmatpush1.bf16.msra.mxu0 0
    %6206 = vmatprep.subr.bf16.mxu0 0
    %6207 = vmatpush1.bf16.msra.mxu0 0
    %6208 = vmatprep.mubr.bf16.mxu0 0
    %6209 = vmatmul.mubr.bf16.gmra.mrb[0].mxu0 %v6097
    %v6210 = vpop.f32.mrb[0].mxu0
    %v6211 = vadd.f32 %v6126, %v6210
    %v6212 = vpop.f32.mrb[0].mxu0
    %v6213 = vpop.f32.mrb[0].mxu0
    %v6214 = vadd.f32 %v6126, %v6213
    %v6215 = vpop.f32.mrb[0].mxu0
    %6216 = vmatprep.mubr.bf16.mxu0 0
    %6217 = vmatmul.mubr.bf16.gmra.mrb[0].mxu0 %v6098
    %v6218 = vpop.f32.mrb[0].mxu0
    %v6219 = vadd.f32 %v6126, %v6218
    %v6220 = vpop.f32.mrb[0].mxu0
    %v6221 = vpop.f32.mrb[0].mxu0
    %v6222 = vadd.f32 %v6126, %v6221
    %v6223 = vpop.f32.mrb[0].mxu0
    %6224 = vmatprep.mubr.bf16.mxu0 0
    %6225 = vmatmul.mubr.bf16.gmra.mrb[0].mxu0 %v6099
    %v6226 = vpop.f32.mrb[0].mxu0
    %v6227 = vadd.f32 %v6126, %v6226
    %v6228 = vpop.f32.mrb[0].mxu0
    %v6229 = vpop.f32.mrb[0].mxu0
    %v6230 = vadd.f32 %v6126, %v6229
    %v6231 = vpop.f32.mrb[0].mxu0
    %6232 = vmatprep.mubr.bf16.mxu0 0
    %6233 = vmatmul.mubr.bf16.gmra.mrb[0].mxu0 %v6100
    %v6234 = vpop.f32.mrb[0].mxu0
    %v6235 = vadd.f32 %v6126, %v6234
    %v6236 = vpop.f32.mrb[0].mxu0
    %v6237 = vpop.f32.mrb[0].mxu0
    %v6238 = vadd.f32 %v6126, %v6237
    %v6239 = vpop.f32.mrb[0].mxu0
    %6240 = vmatprep.mubr.bf16.mxu0 0
    %6241 = vmatmul.mubr.bf16.gmra.mrb[0].mxu0 %v6101
    %v6242 = vpop.f32.mrb[0].mxu0
    %v6243 = vadd.f32 %v6126, %v6242
    %v6244 = vpop.f32.mrb[0].mxu0
    %v6245 = vpop.f32.mrb[0].mxu0
    %v6246 = vadd.f32 %v6126, %v6245
    %v6247 = vpop.f32.mrb[0].mxu0
    %6248 = vmatprep.mubr.bf16.mxu0 0
    %6249 = vmatmul.mubr.bf16.gmra.mrb[0].mxu0 %v6102
    %v6250 = vpop.f32.mrb[0].mxu0
    %v6251 = vadd.f32 %v6126, %v6250
    %v6252 = vpop.f32.mrb[0].mxu0
    %v6253 = vpop.f32.mrb[0].mxu0
    %v6254 = vadd.f32 %v6126, %v6253
    %v6255 = vpop.f32.mrb[0].mxu0
    %6256 = vmatprep.mubr.bf16.mxu0 0
    %6257 = vmatmul.mubr.bf16.gmra.mrb[0].mxu0 %v6103
    %v6258 = vpop.f32.mrb[0].mxu0
    %v6259 = vadd.f32 %v6126, %v6258
    %v6260 = vpop.f32.mrb[0].mxu0
    %v6261 = vpop.f32.mrb[0].mxu0
    %v6262 = vadd.f32 %v6126, %v6261
    %v6263 = vpop.f32.mrb[0].mxu0
    %6264 = vmatprep.mubr.bf16.mxu0 0
    %6265 = vmatmul.mubr.bf16.gmra.mrb[0].mxu0 %v6104
    %v6266 = vpop.f32.mrb[0].mxu0
    %v6267 = vadd.f32 %v6126, %v6266
    %v6268 = vpop.f32.mrb[0].mxu0
    %v6269 = vpop.f32.mrb[0].mxu0
    %v6270 = vadd.f32 %v6126, %v6269
    %v6271 = vpop.f32.mrb[0].mxu0
    %6272 = vdwg.mxu0
    %v6273 = vtanh.pop %v6211
    %v6274 = vtanh.pop %v6214
    %v6275 = vtanh.pop %v6219
    %v6276 = vtanh.pop %v6222
    %v6277 = vtanh.pop %v6227
    %v6278 = vtanh.pop %v6230
    %v6279 = vtanh.pop %v6235
    %v6280 = vtanh.pop %v6238
    %v6281 = vtanh.pop %v6243
    %v6282 = vtanh.pop %v6246
    %v6283 = vtanh.pop %v6251
    %v6284 = vtanh.pop %v6254
    %v6285 = vtanh.pop %v6259
    %v6286 = vtanh.pop %v6262
    %v6287 = vtanh.pop %v6267
    %v6288 = vtanh.pop %v6270
    %v6289 = vpack.c.bf16 %v6274, %v6273
    %v6290 = vpack.c.bf16 %v6276, %v6275
    %v6291 = vpack.c.bf16 %v6278, %v6277
    %v6292 = vpack.c.bf16 %v6280, %v6279
    %v6293 = vpack.c.bf16 %v6282, %v6281
    %v6294 = vpack.c.bf16 %v6284, %v6283
    %v6295 = vpack.c.bf16 %v6286, %v6285
    %v6296 = vpack.c.bf16 %v6288, %v6287
    %v6297 = vld [vmem:[%s20] sm:$0xf]
    %v6298 = vld [vmem:[%s20 + $0x4] sm:$0xf]
    %v6299 = vld [vmem:[%s20 + $0x8] sm:$0xf]
    %v6300 = vld [vmem:[%s20 + $0xc] sm:$0xf]
    %v6301 = vld [vmem:[%s20 + $0x10] sm:$0xf]
    %v6302 = vld [vmem:[%s20 + $0x14] sm:$0xf]
    %v6303 = vld [vmem:[%s20 + $0x18] sm:$0xf]
    %v6304 = vld [vmem:[%s20 + $0x1c] sm:$0xf]
    %v6305 = vld [vmem:[%s20 + $0x20] sm:$0xf]
    %v6306 = vld [vmem:[%s20 + $0x24] sm:$0xf]
    %v6307 = vld [vmem:[%s20 + $0x28] sm:$0xf]
    %v6308 = vld [vmem:[%s20 + $0x2c] sm:$0xf]
    %v6309 = vld [vmem:[%s20 + $0x30] sm:$0xf]
    %v6310 = vld [vmem:[%s20 + $0x34] sm:$0xf]
    %v6311 = vld [vmem:[%s20 + $0x38] sm:$0xf]
    %v6312 = vld [vmem:[%s20 + $0x3c] sm:$0xf]
    %v6313 = vld [vmem:[%s21] sm:$0x1]
    %v6315 = vlaneseq
    %v6316 = vshrl.u32 %v6315, 7
    %v6317 = vsub.s32 0, %v6316
    %v6318 = vrot.slane %v6313, %v6317
    %v6336 = vunpack.c.l.b16 %v6297
    %v6337 = vunpack.c.l.b16 %v6298
    %v6338 = vunpack.c.l.b16 %v6299
    %v6339 = vunpack.c.l.b16 %v6300
    %v6340 = vunpack.c.l.b16 %v6301
    %v6341 = vunpack.c.l.b16 %v6302
    %v6342 = vunpack.c.l.b16 %v6303
    %v6343 = vunpack.c.l.b16 %v6304
    %v6344 = vunpack.c.l.b16 %v6305
    %v6345 = vunpack.c.l.b16 %v6306
    %v6346 = vunpack.c.l.b16 %v6307
    %v6347 = vunpack.c.l.b16 %v6308
    %v6348 = vunpack.c.l.b16 %v6309
    %v6349 = vunpack.c.l.b16 %v6310
    %v6350 = vunpack.c.l.b16 %v6311
    %v6351 = vunpack.c.l.b16 %v6312
    %v6352 = vpack.c.b16 %v6337, %v6336
    %v6353 = vpack.c.b16 %v6339, %v6338
    %v6354 = vpack.c.b16 %v6341, %v6340
    %v6355 = vpack.c.b16 %v6343, %v6342
    %v6356 = vpack.c.b16 %v6345, %v6344
    %v6357 = vpack.c.b16 %v6347, %v6346
    %v6358 = vpack.c.b16 %v6349, %v6348
    %v6359 = vpack.c.b16 %v6351, %v6350
    %6368 = vmatprep.subr.bf16.mxu0 0
    %6369 = vmatpush1.bf16.msra.mxu0 %v6352
    %6370 = vmatprep.subr.bf16.mxu0 0
    %6371 = vmatpush1.bf16.msra.mxu0 %v6353
    %6372 = vmatprep.subr.bf16.mxu0 0
    %6373 = vmatpush1.bf16.msra.mxu0 %v6354
    %6374 = vmatprep.subr.bf16.mxu0 0
    %6375 = vmatpush1.bf16.msra.mxu0 %v6355
    %6376 = vmatprep.subr.bf16.mxu0 0
    %6377 = vmatpush1.bf16.msra.mxu0 %v6356
    %6378 = vmatprep.subr.bf16.mxu0 0
    %6379 = vmatpush1.bf16.msra.mxu0 %v6357
    %6380 = vmatprep.subr.bf16.mxu0 0
    %6381 = vmatpush1.bf16.msra.mxu0 %v6358
    %6382 = vmatprep.subr.bf16.mxu0 0
    %6383 = vmatpush1.bf16.msra.mxu0 %v6359
    %6384 = vmatprep.subr.bf16.mxu0 0
    %6385 = vmatpush1.bf16.msra.mxu0 0
    %6386 = vmatprep.subr.bf16.mxu0 0
    %6387 = vmatpush1.bf16.msra.mxu0 0
    %6388 = vmatprep.subr.bf16.mxu0 0
    %6389 = vmatpush1.bf16.msra.mxu0 0
    %6390 = vmatprep.subr.bf16.mxu0 0
    %6391 = vmatpush1.bf16.msra.mxu0 0
    %6392 = vmatprep.subr.bf16.mxu0 0
    %6393 = vmatpush1.bf16.msra.mxu0 0
    %6394 = vmatprep.subr.bf16.mxu0 0
    %6395 = vmatpush1.bf16.msra.mxu0 0
    %6396 = vmatprep.subr.bf16.mxu0 0
    %6397 = vmatpush1.bf16.msra.mxu0 0
    %6398 = vmatprep.subr.bf16.mxu0 0
    %6399 = vmatpush1.bf16.msra.mxu0 0
    %6400 = vmatprep.mubr.bf16.mxu0 0
    %6401 = vmatmul.mubr.bf16.gmra.mrb[0].mxu0 %v6289
    %v6402 = vpop.f32.mrb[0].mxu0
    %v6403 = vadd.f32 %v6318, %v6402
    %v6404 = vpop.f32.mrb[0].mxu0
    %v6405 = vpop.f32.mrb[0].mxu0
    %v6406 = vadd.f32 %v6318, %v6405
    %v6407 = vpop.f32.mrb[0].mxu0
    %6408 = vmatprep.mubr.bf16.mxu0 0
    %6409 = vmatmul.mubr.bf16.gmra.mrb[0].mxu0 %v6290
    %v6410 = vpop.f32.mrb[0].mxu0
    %v6411 = vadd.f32 %v6318, %v6410
    %v6412 = vpop.f32.mrb[0].mxu0
    %v6413 = vpop.f32.mrb[0].mxu0
    %v6414 = vadd.f32 %v6318, %v6413
    %v6415 = vpop.f32.mrb[0].mxu0
    %6416 = vmatprep.mubr.bf16.mxu0 0
    %6417 = vmatmul.mubr.bf16.gmra.mrb[0].mxu0 %v6291
    %v6418 = vpop.f32.mrb[0].mxu0
    %v6419 = vadd.f32 %v6318, %v6418
    %v6420 = vpop.f32.mrb[0].mxu0
    %v6421 = vpop.f32.mrb[0].mxu0
    %v6422 = vadd.f32 %v6318, %v6421
    %v6423 = vpop.f32.mrb[0].mxu0
    %6424 = vmatprep.mubr.bf16.mxu0 0
    %6425 = vmatmul.mubr.bf16.gmra.mrb[0].mxu0 %v6292
    %v6426 = vpop.f32.mrb[0].mxu0
    %v6427 = vadd.f32 %v6318, %v6426
    %v6428 = vpop.f32.mrb[0].mxu0
    %v6429 = vpop.f32.mrb[0].mxu0
    %v6430 = vadd.f32 %v6318, %v6429
    %v6431 = vpop.f32.mrb[0].mxu0
    %6432 = vmatprep.mubr.bf16.mxu0 0
    %6433 = vmatmul.mubr.bf16.gmra.mrb[0].mxu0 %v6293
    %v6434 = vpop.f32.mrb[0].mxu0
    %v6435 = vadd.f32 %v6318, %v6434
    %v6436 = vpop.f32.mrb[0].mxu0
    %v6437 = vpop.f32.mrb[0].mxu0
    %v6438 = vadd.f32 %v6318, %v6437
    %v6439 = vpop.f32.mrb[0].mxu0
    %6440 = vmatprep.mubr.bf16.mxu0 0
    %6441 = vmatmul.mubr.bf16.gmra.mrb[0].mxu0 %v6294
    %v6442 = vpop.f32.mrb[0].mxu0
    %v6443 = vadd.f32 %v6318, %v6442
    %v6444 = vpop.f32.mrb[0].mxu0
    %v6445 = vpop.f32.mrb[0].mxu0
    %v6446 = vadd.f32 %v6318, %v6445
    %v6447 = vpop.f32.mrb[0].mxu0
    %6448 = vmatprep.mubr.bf16.mxu0 0
    %6449 = vmatmul.mubr.bf16.gmra.mrb[0].mxu0 %v6295
    %v6450 = vpop.f32.mrb[0].mxu0
    %v6451 = vadd.f32 %v6318, %v6450
    %v6452 = vpop.f32.mrb[0].mxu0
    %v6453 = vpop.f32.mrb[0].mxu0
    %v6454 = vadd.f32 %v6318, %v6453
    %v6455 = vpop.f32.mrb[0].mxu0
    %6456 = vmatprep.mubr.bf16.mxu0 0
    %6457 = vmatmul.mubr.bf16.gmra.mrb[0].mxu0 %v6296
    %v6458 = vpop.f32.mrb[0].mxu0
    %v6459 = vadd.f32 %v6318, %v6458
    %v6460 = vpop.f32.mrb[0].mxu0
    %v6461 = vpop.f32.mrb[0].mxu0
    %v6462 = vadd.f32 %v6318, %v6461
    %v6463 = vpop.f32.mrb[0].mxu0
    %6464 = vdwg.mxu0
    %vm6465 = vcmask 31744
    %6466 = vst.msk [vmem:[%s22] sm:$0xff] %vm6465, %v6403
    %6467 = vst.msk [vmem:[%s22 + $0x8] sm:$0xff] %vm6465, %v6406
    %6468 = vst.msk [vmem:[%s22 + $0x10] sm:$0xff] %vm6465, %v6411
    %6469 = vst.msk [vmem:[%s22 + $0x18] sm:$0xff] %vm6465, %v6414
    %6470 = vst.msk [vmem:[%s22 + $0x20] sm:$0xff] %vm6465, %v6419
    %6471 = vst.msk [vmem:[%s22 + $0x28] sm:$0xff] %vm6465, %v6422
    %6472 = vst.msk [vmem:[%s22 + $0x30] sm:$0xff] %vm6465, %v6427
    %6473 = vst.msk [vmem:[%s22 + $0x38] sm:$0xff] %vm6465, %v6430
    %6474 = vst.msk [vmem:[%s22 + $0x40] sm:$0xff] %vm6465, %v6435
    %6475 = vst.msk [vmem:[%s22 + $0x48] sm:$0xff] %vm6465, %v6438
    %6476 = vst.msk [vmem:[%s22 + $0x50] sm:$0xff] %vm6465, %v6443
    %6477 = vst.msk [vmem:[%s22 + $0x58] sm:$0xff] %vm6465, %v6446
    %6478 = vst.msk [vmem:[%s22 + $0x60] sm:$0xff] %vm6465, %v6451
    %6479 = vst.msk [vmem:[%s22 + $0x68] sm:$0xff] %vm6465, %v6454
    %6480 = vst.msk [vmem:[%s22 + $0x70] sm:$0xff] %vm6465, %v6459
    %6481 = vst.msk [vmem:[%s22 + $0x78] sm:$0xff] %vm6465, %v6462
    // Predicated region
    $region146: #{tpu_custom_call.1} parent=1 // pred_check
      _
    $region147: #{tpu_custom_call.1} parent=1 // pred_check_branch
      %6483 = sbr.rel (0) target = $region149
    $region148: #{tpu_custom_call.1} parent=1 // pred_region
      _
    $region149: #{tpu_custom_call.1} parent=1 // pred_fallthru
      _
    // Predicated region
    $region150: #{tpu_custom_call.1} parent=1 // pred_check
      _
    $region151: #{tpu_custom_call.1} parent=1 // pred_check_branch
      %6485 = sbr.rel (0) target = $region153
    $region152: #{tpu_custom_call.1} parent=1 // pred_region
      _
    $region153: #{tpu_custom_call.1} parent=1 // pred_fallthru
      _
    %6486 = vsyncpa [#allocation3], 1
    %6487 = vsyncpa [#allocation5], 1
    %6488 = vsyncpa [#allocation8], 1
    %6489 = vsyncpa [#allocation11], 1
    %6490 = vsyncpa [#allocation14], 1
    %6491 = vsyncpa [#allocation17], 1
    %6492 = vsyncpa [#allocation20], 1
    %6493 = vsyncpa [#allocation23], 1

</llo_original>
